<compile_context>
chip_gen: v5e
topology: v5e:2x2
jax: 0.10.0
libtpu: 0.0.40
codegen_flags: <defaults>
</compile_context>

<pallas_src>
import numpy as np
import jax
import jax.numpy as jnp
from jax.experimental import pallas as pl
from jax.experimental.pallas import tpu as pltpu

NUM_HIDDEN = 15   # num_hidden in the PyTorch script
NUM_LAYERS = 5    # num_layers in the PyTorch script
HP = 32           # per-gate hidden padded to 32 -> 4*HP = 128 lanes


# ----------------------------- Pallas kernel --------------------------------
def mv_lstm_kernel(x_ref,          # (T*B, F)        time-major flattened input (bf16)
                   h0_ref,         # (L, B, Hp)      padded initial hidden (f32)
                   c0_ref,         # (L, B, Hp)      padded initial cell (f32)
                   wih0_ref,       # (F, 4*Hp)       layer-0 input weights, [i|f|o|g] (bf16)
                   whh0_ref,       # (Hp, 4*Hp)      layer-0 recurrent weights (bf16)
                   wcat_ref,       # (L-1, 2*Hp, 4*Hp) fused [W_ih; W_hh] layers 1.. (bf16)
                   bias0_ref,      # (1, 4*Hp)       layer-0 b_ih + b_hh (f32)
                   biasr_ref,      # (L-1, 1, 4*Hp)  layers 1.. b_ih + b_hh (f32)
                   w1_ref,         # (Hp, 10)        (bf16)
                   b1_ref,         # (1, 10)         (f32)
                   w2_ref,         # (10, 1)         (f32)
                   b2_ref,         # (1, 1) in SMEM  (f32)
                   out_ref,        # (B, 1)
                   hn_ref,         # (L, B, Hp)
                   cn_ref,         # (L, B, Hp)
                   xproj_scratch): # VMEM (T*B, 4*Hp): hoisted layer-0 input projection
    f32 = jnp.float32
    bf16 = jnp.bfloat16

    TB, F = x_ref.shape
    L, B, Hp = h0_ref.shape
    T = TB // B

    # ---- hoisted layer-0 input projection for ALL timesteps (one big matmul) ----
    xproj_scratch[...] = (
        jnp.dot(x_ref[...], wih0_ref[...], preferred_element_type=f32)
        + bias0_ref[...])

    # ---- live per-layer states, carried as values through the unrolled wavefront ----
    h = [h0_ref[l] for l in range(L)]          # (B, Hp) f32
    c = [c0_ref[l] for l in range(L)]          # (B, Hp) f32
    below = [None] * L                         # below[l]: output of layer l-1 needed next

    # ---- wavefront: step s computes cell (l, t = s - l) for every ready layer ----
    for s in range(T + L - 1):
        active = [l for l in range(L) if 0 <= s - l < T]

        # Phase 1: issue all gate matmuls for this step back-to-back (independent).
        pre = {}
        for l in active:
            t = s - l
            if l == 0:
                xp = xproj_scratch[pl.ds(t * B, B), :]               # (B, 128) f32
                pre[l] = xp + jnp.dot(h[0].astype(bf16), whh0_ref[...],
                                      preferred_element_type=f32)
            else:
                # fused [h_below | h_prev] @ [W_ih; W_hh]  (single MXU push)
                xh = jnp.concatenate([below[l], h[l]], axis=-1)      # (B, 2*Hp) f32
                pre[l] = (jnp.dot(xh.astype(bf16), wcat_ref[l - 1],
                                  preferred_element_type=f32)
                          + biasr_ref[l - 1])

        # Phase 2: elementwise cell updates (f32 on the VPU/EUP).
        new_h = {}
        for l in active:
            p = pre[l]
            sig = jax.nn.sigmoid(p)                    # ONE EUP pass over the 128-lane vreg
            i_g = sig[:, 0 * Hp:1 * Hp]
            f_g = sig[:, 1 * Hp:2 * Hp]
            o_g = sig[:, 2 * Hp:3 * Hp]
            g_g = sig[:, 3 * Hp:4 * Hp] * 2.0 - 1.0    # tanh(x) = 2*sigmoid(2x) - 1
            c[l] = f_g * c[l] + i_g * g_g
            new_h[l] = o_g * jnp.tanh(c[l])

        # Phase 3: commit states and feed the layer above.
        for l in active:
            h[l] = new_h[l]
            if l + 1 < L:
                below[l + 1] = new_h[l]

    # ---- final LSTM states ----
    for l in range(L):
        hn_ref[l] = h[l]
        cn_ref[l] = c[l]

    # lstm_out[:, -1, :] == live last-layer h  ->  Linear(H,10) -> ReLU -> Linear(10,1)
    z1 = jnp.maximum(
        jnp.dot(h[L - 1].astype(bf16), w1_ref[...], preferred_element_type=f32)
        + b1_ref[...], 0.0)                                          # (B, 10)
    out_ref[...] = (jnp.dot(z1, w2_ref[...], preferred_element_type=f32)
                    + b2_ref[0, 0])                                  # (B, 1)


# ------------------------------ wrapper --------------------------------------
@jax.jit
def mv_lstm_forward(x_btf, h0, c0,
                    wih0p, whh0p, wcatp, bias0p, biasrp, w1p, b1, w2p, b2):
    """x_btf: (B, T, F) like PyTorch batch_first=True; h0/c0: (L, B, H) unpadded.

    Weights are the pre-packed/padded forms produced by pack_params().
    Returns (out, h_n, c_n) with h_n/c_n shaped (L, B, H)."""
    B, T, F = x_btf.shape
    L, _, H = h0.shape
    Hp = whh0p.shape[0]
    G4 = whh0p.shape[1]

    # time-major, flattened to (T*B, F); bf16 operand for the MXU
    x_tb = jnp.transpose(x_btf, (1, 0, 2)).reshape(T * B, F).astype(jnp.bfloat16)
    h0p = jnp.pad(h0, ((0, 0), (0, 0), (0, Hp - H)))
    c0p = jnp.pad(c0, ((0, 0), (0, 0), (0, Hp - H)))

    vmem = pl.BlockSpec(memory_space=pltpu.MemorySpace.VMEM)
    smem = pl.BlockSpec(memory_space=pltpu.MemorySpace.SMEM)

    out, hn_p, cn_p = pl.pallas_call(
        mv_lstm_kernel,
        out_shape=(
            jax.ShapeDtypeStruct((B, 1), jnp.float32),
            jax.ShapeDtypeStruct((L, B, Hp), jnp.float32),
            jax.ShapeDtypeStruct((L, B, Hp), jnp.float32),
        ),
        in_specs=[vmem] * 11 + [smem],                 # b2 (1,1) lives in SMEM
        out_specs=(vmem, vmem, vmem),
        scratch_shapes=[
            pltpu.VMEM((T * B, G4), jnp.float32),      # hoisted layer-0 projection
        ],
    )(x_tb, h0p, c0p, wih0p, whh0p, wcatp, bias0p, biasrp, w1p, b1, w2p, b2)

    return out, hn_p[:, :, :H], cn_p[:, :, :H]


# ------------------- parameter init (PyTorch-style, unpacked) -----------------
def init_params(key, n_features, hidden=NUM_HIDDEN, layers=NUM_LAYERS):
    """Deterministic synthetic parameters in PyTorch layout (gate order i,f,g,o)."""
    ks = jax.random.split(key, 8)
    k_lstm = 1.0 / np.sqrt(hidden)

    def u(k, shape, bound):
        return jax.random.uniform(k, shape, jnp.float32, -bound, bound)

    wih0 = u(ks[0], (4, hidden, n_features), k_lstm)            # layer 0 W_ih (per gate)
    wihr = u(ks[1], (4, layers - 1, hidden, hidden), k_lstm)    # layers 1..L-1 W_ih
    whh = u(ks[2], (4, layers, hidden, hidden), k_lstm)         # W_hh
    bias = (u(ks[3], (4, layers, 1, hidden), k_lstm)
            + u(ks[4], (4, layers, 1, hidden), k_lstm))         # b_ih + b_hh

    k1 = 1.0 / np.sqrt(hidden)
    w1 = u(ks[5], (10, hidden), k1)
    b1 = u(ks[6], (1, 10), k1)
    k2 = 1.0 / np.sqrt(10)
    w2 = u(ks[7], (1, 10), k2)
    b2 = jnp.zeros((1, 1), jnp.float32)
    return wih0, wihr, whh, bias, w1, b1, w2, b2


# ------------- pack / pad / pre-transpose weights for the kernel --------------
def pack_params(params, hp=HP):
    """PyTorch layout -> kernel layout.

    * Gate order remapped (i, f, g, o) -> (i, f, o, g): one sigmoid covers all gates.
    * g-gate weight/bias columns scaled by 2 so tanh(x) = 2*sigmoid(2x) - 1 in-kernel.
    * Per-gate hidden zero-padded H -> hp; weights stored pre-transposed as (in, 4*hp).
    * Layers >= 1 get a fused [W_ih; W_hh] of shape (2*hp, 4*hp).
    NOTE: padded rows/cols and biases MUST stay exactly zero (and h0/c0 padding too)
    so padded lanes never leak into real lanes through the recurrence."""
    wih0, wihr, whh, bias, w1, b1, w2, b2 = params
    H = wih0.shape[1]
    F = wih0.shape[2]
    L = whh.shape[1]
    assert H <= hp
    pad = hp - H
    perm = jnp.array([0, 1, 3, 2])          # (i, f, g, o) -> (i, f, o, g)
    gscale = jnp.array([1.0, 1.0, 1.0, 2.0], jnp.float32)

    def scale_g(a):                          # gate axis is axis 0
        return a * gscale.reshape((4,) + (1,) * (a.ndim - 1))

    bf16 = jnp.bfloat16

    # layer-0 input weights: (4, H, F) -> (F, 4*hp)
    w = scale_g(jnp.pad(wih0[perm], ((0, 0), (0, pad), (0, 0))))
    wih0p = jnp.transpose(w, (2, 0, 1)).reshape(F, 4 * hp).astype(bf16)

    # layer-0 recurrent weights: (4, H, H) -> (hp, 4*hp)
    w = scale_g(jnp.pad(whh[perm][:, 0], ((0, 0), (0, pad), (0, pad))))
    whh0p = jnp.transpose(w, (2, 0, 1)).reshape(hp, 4 * hp).astype(bf16)

    # layers 1..L-1 fused [W_ih; W_hh]: -> (L-1, 2*hp, 4*hp)
    wi = scale_g(jnp.pad(wihr[perm], ((0, 0), (0, 0), (0, pad), (0, pad))))
    wh = scale_g(jnp.pad(whh[perm][:, 1:], ((0, 0), (0, 0), (0, pad), (0, pad))))
    wi_t = jnp.transpose(wi, (1, 3, 0, 2)).reshape(L - 1, hp, 4 * hp)
    wh_t = jnp.transpose(wh, (1, 3, 0, 2)).reshape(L - 1, hp, 4 * hp)
    wcatp = jnp.concatenate([wi_t, wh_t], axis=1).astype(bf16)

    # biases (b_ih + b_hh): layer 0 -> (1, 4*hp); layers 1.. -> (L-1, 1, 4*hp)
    b0 = scale_g(jnp.pad(bias[perm][:, 0], ((0, 0), (0, 0), (0, pad))))
    bias0p = jnp.transpose(b0, (1, 0, 2)).reshape(1, 4 * hp)
    br = scale_g(jnp.pad(bias[perm][:, 1:], ((0, 0), (0, 0), (0, 0), (0, pad))))
    biasrp = jnp.transpose(br, (1, 2, 0, 3)).reshape(L - 1, 1, 4 * hp)

    # MLP head: pre-transposed, w1 padded on the H axis
    w1p = jnp.transpose(jnp.pad(w1, ((0, 0), (0, pad))), (1, 0)).astype(bf16)  # (hp, 10)
    w2p = jnp.transpose(w2, (1, 0))                                            # (10, 1) f32
    return wih0p, whh0p, wcatp, bias0p, biasrp, w1p, b1, w2p, b2


# ---------------------- pure-JAX reference (for checking) --------------------
def reference_forward(x_btf, h0, c0, params):
    wih0, wihr, whh, bias, w1, b1, w2, b2 = params
    B, T, F = x_btf.shape
    L, _, H = h0.shape
    layer_in = x_btf
    hn, cn = [], []
    for l in range(L):
        h, c = h0[l], c0[l]
        outs = []
        for t in range(T):
            x_t = layer_in[:, t, :]

            def gate_pre(g, x_t=x_t, h=h, l=l):
                w_ih = wih0[g] if l == 0 else wihr[g, l - 1]
                return x_t @ w_ih.T + h @ whh[g, l].T + bias[g, l]

            i_g = jax.nn.sigmoid(gate_pre(0))
            f_g = jax.nn.sigmoid(gate_pre(1))
            g_g = jnp.tanh(gate_pre(2))
            o_g = jax.nn.sigmoid(gate_pre(3))
            c = f_g * c + i_g * g_g
            h = o_g * jnp.tanh(c)
            outs.append(h)
        layer_in = jnp.stack(outs, axis=1)
        hn.append(h)
        cn.append(c)
    out = jnp.maximum(layer_in[:, -1, :] @ w1.T + b1, 0.0) @ w2.T + b2
    return out, jnp.stack(hn), jnp.stack(cn)


# --------------------------------- main ---------------------------------------
if __name__ == "__main__":
    B, T, F = 8, 8, 4          # batch, seq_length, n_features
    H, L = NUM_HIDDEN, NUM_LAYERS

    key = jax.random.PRNGKey(0)
    kx, kp = jax.random.split(key, 2)
    x = jax.random.normal(kx, (B, T, F), jnp.float32)
    # init_hidden() in the PyTorch module -> zero hidden / cell states
    h0 = jnp.zeros((L, B, H), jnp.float32)
    c0 = jnp.zeros((L, B, H), jnp.float32)

    params = init_params(kp, F, H, L)
    packed = pack_params(params)

    out, hn, cn = mv_lstm_forward(x, h0, c0, *packed)
    jax.block_until_ready((out, hn, cn))

    ref_out, ref_hn, ref_cn = reference_forward(x, h0, c0, params)
    assert out.shape == (B, 1) and hn.shape == (L, B, H) and cn.shape == (L, B, H)
    # bf16 MXU operands (same truncation the MXU applies at DEFAULT precision).
    assert np.allclose(np.asarray(out), np.asarray(ref_out), rtol=2e-2, atol=2e-2)
    assert np.allclose(np.asarray(hn), np.asarray(ref_hn), rtol=2e-2, atol=2e-2)
    assert np.allclose(np.asarray(cn), np.asarray(ref_cn), rtol=2e-2, atol=2e-2)

    print("KERNEL_OK")
</pallas_src>

<mosaic_0001>
module attributes {stable_mosaic.version = 11 : i64} {
  func.func @mv_lstm_kernel(%arg0: memref<64x4xbf16, #tpu.memory_space<vmem>>, %arg1: memref<5x8x32xf32, #tpu.memory_space<vmem>>, %arg2: memref<5x8x32xf32, #tpu.memory_space<vmem>>, %arg3: memref<4x128xbf16, #tpu.memory_space<vmem>>, %arg4: memref<32x128xbf16, #tpu.memory_space<vmem>>, %arg5: memref<4x64x128xbf16, #tpu.memory_space<vmem>>, %arg6: memref<1x128xf32, #tpu.memory_space<vmem>>, %arg7: memref<4x1x128xf32, #tpu.memory_space<vmem>>, %arg8: memref<32x10xbf16, #tpu.memory_space<vmem>>, %arg9: memref<1x10xf32, #tpu.memory_space<vmem>>, %arg10: memref<10x1xf32, #tpu.memory_space<vmem>>, %arg11: memref<1x1xf32, #tpu.memory_space<smem>>, %arg12: memref<8x1xf32, #tpu.memory_space<vmem>>, %arg13: memref<5x8x32xf32, #tpu.memory_space<vmem>>, %arg14: memref<5x8x32xf32, #tpu.memory_space<vmem>>, %arg15: memref<64x128xf32, #tpu.memory_space<vmem>>) attributes {dimension_semantics = [], scalar_prefetch = 0 : i64, scratch_operands = 1 : i64, tpu.core_type = #tpu.core_type<tc>} {
    %c0 = arith.constant 0 : index
    %c0_0 = arith.constant 0 : index
    %0 = vector.load %arg0[%c0, %c0_0] : memref<64x4xbf16, #tpu.memory_space<vmem>>, vector<64x4xbf16>
    %c0_1 = arith.constant 0 : index
    %c0_2 = arith.constant 0 : index
    %1 = vector.load %arg3[%c0_1, %c0_2] : memref<4x128xbf16, #tpu.memory_space<vmem>>, vector<4x128xbf16>
    %cst = arith.constant dense<0.000000e+00> : vector<64x128xf32>
    %2 = tpu.matmul %0, %1, %cst {dimension_numbers = #tpu.dot_dimension_numbers<[1], [0], [0], [1], [0, 0, 1, 1], [], []>} : vector<64x4xbf16>, vector<4x128xbf16>, vector<64x128xf32> -> vector<64x128xf32>
    %c0_3 = arith.constant 0 : index
    %c0_4 = arith.constant 0 : index
    %3 = vector.load %arg6[%c0_3, %c0_4] : memref<1x128xf32, #tpu.memory_space<vmem>>, vector<1x128xf32>
    %4 = vector.broadcast %3 : vector<1x128xf32> to vector<64x128xf32>
    %5 = arith.addf %2, %4 : vector<64x128xf32>
    %c0_5 = arith.constant 0 : index
    %c0_6 = arith.constant 0 : index
    %6 = vector.load %arg15[%c0_5, %c0_6] : memref<64x128xf32, #tpu.memory_space<vmem>>, vector<64x128xf32>
    tpu.vector_store %arg15[%c0_5, %c0_6], %5 {strides = array<i32>} : memref<64x128xf32, #tpu.memory_space<vmem>>, vector<64x128xf32>,
    %c0_7 = arith.constant 0 : index
    %c0_8 = arith.constant 0 : index
    %c0_9 = arith.constant 0 : index
    %7 = vector.load %arg1[%c0_7, %c0_8, %c0_9] : memref<5x8x32xf32, #tpu.memory_space<vmem>>, vector<1x8x32xf32>
    %8 = vector.shape_cast %7 : vector<1x8x32xf32> to vector<8x32xf32>
    %c1 = arith.constant 1 : index
    %c0_10 = arith.constant 0 : index
    %c0_11 = arith.constant 0 : index
    %9 = vector.load %arg1[%c1, %c0_10, %c0_11] : memref<5x8x32xf32, #tpu.memory_space<vmem>>, vector<1x8x32xf32>
    %10 = vector.shape_cast %9 : vector<1x8x32xf32> to vector<8x32xf32>
    %c2 = arith.constant 2 : index
    %c0_12 = arith.constant 0 : index
    %c0_13 = arith.constant 0 : index
    %11 = vector.load %arg1[%c2, %c0_12, %c0_13] : memref<5x8x32xf32, #tpu.memory_space<vmem>>, vector<1x8x32xf32>
    %12 = vector.shape_cast %11 : vector<1x8x32xf32> to vector<8x32xf32>
    %c3 = arith.constant 3 : index
    %c0_14 = arith.constant 0 : index
    %c0_15 = arith.constant 0 : index
    %13 = vector.load %arg1[%c3, %c0_14, %c0_15] : memref<5x8x32xf32, #tpu.memory_space<vmem>>, vector<1x8x32xf32>
    %14 = vector.shape_cast %13 : vector<1x8x32xf32> to vector<8x32xf32>
    %c4 = arith.constant 4 : index
    %c0_16 = arith.constant 0 : index
    %c0_17 = arith.constant 0 : index
    %15 = vector.load %arg1[%c4, %c0_16, %c0_17] : memref<5x8x32xf32, #tpu.memory_space<vmem>>, vector<1x8x32xf32>
    %16 = vector.shape_cast %15 : vector<1x8x32xf32> to vector<8x32xf32>
    %c0_18 = arith.constant 0 : index
    %c0_19 = arith.constant 0 : index
    %c0_20 = arith.constant 0 : index
    %17 = vector.load %arg2[%c0_18, %c0_19, %c0_20] : memref<5x8x32xf32, #tpu.memory_space<vmem>>, vector<1x8x32xf32>
    %18 = vector.shape_cast %17 : vector<1x8x32xf32> to vector<8x32xf32>
    %c1_21 = arith.constant 1 : index
    %c0_22 = arith.constant 0 : index
    %c0_23 = arith.constant 0 : index
    %19 = vector.load %arg2[%c1_21, %c0_22, %c0_23] : memref<5x8x32xf32, #tpu.memory_space<vmem>>, vector<1x8x32xf32>
    %20 = vector.shape_cast %19 : vector<1x8x32xf32> to vector<8x32xf32>
    %c2_24 = arith.constant 2 : index
    %c0_25 = arith.constant 0 : index
    %c0_26 = arith.constant 0 : index
    %21 = vector.load %arg2[%c2_24, %c0_25, %c0_26] : memref<5x8x32xf32, #tpu.memory_space<vmem>>, vector<1x8x32xf32>
    %22 = vector.shape_cast %21 : vector<1x8x32xf32> to vector<8x32xf32>
    %c3_27 = arith.constant 3 : index
    %c0_28 = arith.constant 0 : index
    %c0_29 = arith.constant 0 : index
    %23 = vector.load %arg2[%c3_27, %c0_28, %c0_29] : memref<5x8x32xf32, #tpu.memory_space<vmem>>, vector<1x8x32xf32>
    %24 = vector.shape_cast %23 : vector<1x8x32xf32> to vector<8x32xf32>
    %c4_30 = arith.constant 4 : index
    %c0_31 = arith.constant 0 : index
    %c0_32 = arith.constant 0 : index
    %25 = vector.load %arg2[%c4_30, %c0_31, %c0_32] : memref<5x8x32xf32, #tpu.memory_space<vmem>>, vector<1x8x32xf32>
    %26 = vector.shape_cast %25 : vector<1x8x32xf32> to vector<8x32xf32>
    %c0_33 = arith.constant 0 : index
    %c0_34 = arith.constant 0 : index
    %27 = vector.load %arg15[%c0_33, %c0_34] : memref<64x128xf32, #tpu.memory_space<vmem>>, vector<8x128xf32>
    %28 = arith.truncf %8 : vector<8x32xf32> to vector<8x32xbf16>
    %c0_35 = arith.constant 0 : index
    %c0_36 = arith.constant 0 : index
    %29 = vector.load %arg4[%c0_35, %c0_36] : memref<32x128xbf16, #tpu.memory_space<vmem>>, vector<32x128xbf16>
    %cst_37 = arith.constant dense<0.000000e+00> : vector<8x128xf32>
    %30 = tpu.matmul %28, %29, %cst_37 {dimension_numbers = #tpu.dot_dimension_numbers<[1], [0], [0], [1], [0, 0, 1, 1], [], []>} : vector<8x32xbf16>, vector<32x128xbf16>, vector<8x128xf32> -> vector<8x128xf32>
    %31 = arith.addf %27, %30 : vector<8x128xf32>
    %32 = arith.negf %31 : vector<8x128xf32>
    %33 = math.exp %32 : vector<8x128xf32>
    %cst_38 = arith.constant 1.000000e+00 : f32
    %34 = vector.broadcast %cst_38 : f32 to vector<8x128xf32>
    %35 = arith.addf %34, %33 : vector<8x128xf32>
    %36 = arith.divf %34, %35 : vector<8x128xf32>
    %37 = vector.extract_strided_slice %36 {offsets = [0, 0], sizes = [8, 32], strides = [1, 1]} : vector<8x128xf32> to vector<8x32xf32>
    %38 = vector.extract_strided_slice %36 {offsets = [0, 32], sizes = [8, 32], strides = [1, 1]} : vector<8x128xf32> to vector<8x32xf32>
    %39 = vector.extract_strided_slice %36 {offsets = [0, 64], sizes = [8, 32], strides = [1, 1]} : vector<8x128xf32> to vector<8x32xf32>
    %40 = vector.extract_strided_slice %36 {offsets = [0, 96], sizes = [8, 32], strides = [1, 1]} : vector<8x128xf32> to vector<8x32xf32>
    %cst_39 = arith.constant 2.000000e+00 : f32
    %41 = vector.broadcast %cst_39 : f32 to vector<8x32xf32>
    %42 = arith.mulf %40, %41 : vector<8x32xf32>
    %cst_40 = arith.constant 1.000000e+00 : f32
    %43 = vector.broadcast %cst_40 : f32 to vector<8x32xf32>
    %44 = arith.subf %42, %43 : vector<8x32xf32>
    %45 = arith.mulf %38, %18 : vector<8x32xf32>
    %46 = arith.mulf %37, %44 : vector<8x32xf32>
    %47 = arith.addf %45, %46 : vector<8x32xf32>
    %48 = math.tanh %47 : vector<8x32xf32>
    %49 = arith.mulf %39, %48 : vector<8x32xf32>
    %c8 = arith.constant 8 : index
    %c0_41 = arith.constant 0 : index
    %50 = vector.load %arg15[%c8, %c0_41] : memref<64x128xf32, #tpu.memory_space<vmem>>, vector<8x128xf32>
    %51 = arith.truncf %49 : vector<8x32xf32> to vector<8x32xbf16>
    %c0_42 = arith.constant 0 : index
    %c0_43 = arith.constant 0 : index
    %52 = vector.load %arg4[%c0_42, %c0_43] : memref<32x128xbf16, #tpu.memory_space<vmem>>, vector<32x128xbf16>
    %cst_44 = arith.constant dense<0.000000e+00> : vector<8x128xf32>
    %53 = tpu.matmul %51, %52, %cst_44 {dimension_numbers = #tpu.dot_dimension_numbers<[1], [0], [0], [1], [0, 0, 1, 1], [], []>} : vector<8x32xbf16>, vector<32x128xbf16>, vector<8x128xf32> -> vector<8x128xf32>
    %54 = arith.addf %50, %53 : vector<8x128xf32>
    %55 = tpu.concatenate %49, %10 in 1 : vector<8x32xf32>, vector<8x32xf32> -> vector<8x64xf32>
    %56 = arith.truncf %55 : vector<8x64xf32> to vector<8x64xbf16>
    %c0_45 = arith.constant 0 : index
    %c0_46 = arith.constant 0 : index
    %c0_47 = arith.constant 0 : index
    %57 = vector.load %arg5[%c0_45, %c0_46, %c0_47] : memref<4x64x128xbf16, #tpu.memory_space<vmem>>, vector<1x64x128xbf16>
    %58 = vector.shape_cast %57 : vector<1x64x128xbf16> to vector<64x128xbf16>
    %cst_48 = arith.constant dense<0.000000e+00> : vector<8x128xf32>
    %59 = tpu.matmul %56, %58, %cst_48 {dimension_numbers = #tpu.dot_dimension_numbers<[1], [0], [0], [1], [0, 0, 1, 1], [], []>} : vector<8x64xbf16>, vector<64x128xbf16>, vector<8x128xf32> -> vector<8x128xf32>
    %c0_49 = arith.constant 0 : index
    %c0_50 = arith.constant 0 : index
    %c0_51 = arith.constant 0 : index
    %60 = vector.load %arg7[%c0_49, %c0_50, %c0_51] : memref<4x1x128xf32, #tpu.memory_space<vmem>>, vector<1x1x128xf32>
    %61 = vector.shape_cast %60 : vector<1x1x128xf32> to vector<1x128xf32>
    %62 = vector.broadcast %61 : vector<1x128xf32> to vector<8x128xf32>
    %63 = arith.addf %59, %62 : vector<8x128xf32>
    %64 = arith.negf %54 : vector<8x128xf32>
    %65 = math.exp %64 : vector<8x128xf32>
    %cst_52 = arith.constant 1.000000e+00 : f32
    %66 = vector.broadcast %cst_52 : f32 to vector<8x128xf32>
    %67 = arith.addf %66, %65 : vector<8x128xf32>
    %68 = arith.divf %66, %67 : vector<8x128xf32>
    %69 = vector.extract_strided_slice %68 {offsets = [0, 0], sizes = [8, 32], strides = [1, 1]} : vector<8x128xf32> to vector<8x32xf32>
    %70 = vector.extract_strided_slice %68 {offsets = [0, 32], sizes = [8, 32], strides = [1, 1]} : vector<8x128xf32> to vector<8x32xf32>
    %71 = vector.extract_strided_slice %68 {offsets = [0, 64], sizes = [8, 32], strides = [1, 1]} : vector<8x128xf32> to vector<8x32xf32>
    %72 = vector.extract_strided_slice %68 {offsets = [0, 96], sizes = [8, 32], strides = [1, 1]} : vector<8x128xf32> to vector<8x32xf32>
    %cst_53 = arith.constant 2.000000e+00 : f32
    %73 = vector.broadcast %cst_53 : f32 to vector<8x32xf32>
    %74 = arith.mulf %72, %73 : vector<8x32xf32>
    %cst_54 = arith.constant 1.000000e+00 : f32
    %75 = vector.broadcast %cst_54 : f32 to vector<8x32xf32>
    %76 = arith.subf %74, %75 : vector<8x32xf32>
    %77 = arith.mulf %70, %47 : vector<8x32xf32>
    %78 = arith.mulf %69, %76 : vector<8x32xf32>
    %79 = arith.addf %77, %78 : vector<8x32xf32>
    %80 = math.tanh %79 : vector<8x32xf32>
    %81 = arith.mulf %71, %80 : vector<8x32xf32>
    %82 = arith.negf %63 : vector<8x128xf32>
    %83 = math.exp %82 : vector<8x128xf32>
    %cst_55 = arith.constant 1.000000e+00 : f32
    %84 = vector.broadcast %cst_55 : f32 to vector<8x128xf32>
    %85 = arith.addf %84, %83 : vector<8x128xf32>
    %86 = arith.divf %84, %85 : vector<8x128xf32>
    %87 = vector.extract_strided_slice %86 {offsets = [0, 0], sizes = [8, 32], strides = [1, 1]} : vector<8x128xf32> to vector<8x32xf32>
    %88 = vector.extract_strided_slice %86 {offsets = [0, 32], sizes = [8, 32], strides = [1, 1]} : vector<8x128xf32> to vector<8x32xf32>
    %89 = vector.extract_strided_slice %86 {offsets = [0, 64], sizes = [8, 32], strides = [1, 1]} : vector<8x128xf32> to vector<8x32xf32>
    %90 = vector.extract_strided_slice %86 {offsets = [0, 96], sizes = [8, 32], strides = [1, 1]} : vector<8x128xf32> to vector<8x32xf32>
    %cst_56 = arith.constant 2.000000e+00 : f32
    %91 = vector.broadcast %cst_56 : f32 to vector<8x32xf32>
    %92 = arith.mulf %90, %91 : vector<8x32xf32>
    %cst_57 = arith.constant 1.000000e+00 : f32
    %93 = vector.broadcast %cst_57 : f32 to vector<8x32xf32>
    %94 = arith.subf %92, %93 : vector<8x32xf32>
    %95 = arith.mulf %88, %20 : vector<8x32xf32>
    %96 = arith.mulf %87, %94 : vector<8x32xf32>
    %97 = arith.addf %95, %96 : vector<8x32xf32>
    %98 = math.tanh %97 : vector<8x32xf32>
    %99 = arith.mulf %89, %98 : vector<8x32xf32>
    %c16 = arith.constant 16 : index
    %c0_58 = arith.constant 0 : index
    %100 = vector.load %arg15[%c16, %c0_58] : memref<64x128xf32, #tpu.memory_space<vmem>>, vector<8x128xf32>
    %101 = arith.truncf %81 : vector<8x32xf32> to vector<8x32xbf16>
    %c0_59 = arith.constant 0 : index
    %c0_60 = arith.constant 0 : index
    %102 = vector.load %arg4[%c0_59, %c0_60] : memref<32x128xbf16, #tpu.memory_space<vmem>>, vector<32x128xbf16>
    %cst_61 = arith.constant dense<0.000000e+00> : vector<8x128xf32>
    %103 = tpu.matmul %101, %102, %cst_61 {dimension_numbers = #tpu.dot_dimension_numbers<[1], [0], [0], [1], [0, 0, 1, 1], [], []>} : vector<8x32xbf16>, vector<32x128xbf16>, vector<8x128xf32> -> vector<8x128xf32>
    %104 = arith.addf %100, %103 : vector<8x128xf32>
    %105 = tpu.concatenate %81, %99 in 1 : vector<8x32xf32>, vector<8x32xf32> -> vector<8x64xf32>
    %106 = arith.truncf %105 : vector<8x64xf32> to vector<8x64xbf16>
    %c0_62 = arith.constant 0 : index
    %c0_63 = arith.constant 0 : index
    %c0_64 = arith.constant 0 : index
    %107 = vector.load %arg5[%c0_62, %c0_63, %c0_64] : memref<4x64x128xbf16, #tpu.memory_space<vmem>>, vector<1x64x128xbf16>
    %108 = vector.shape_cast %107 : vector<1x64x128xbf16> to vector<64x128xbf16>
    %cst_65 = arith.constant dense<0.000000e+00> : vector<8x128xf32>
    %109 = tpu.matmul %106, %108, %cst_65 {dimension_numbers = #tpu.dot_dimension_numbers<[1], [0], [0], [1], [0, 0, 1, 1], [], []>} : vector<8x64xbf16>, vector<64x128xbf16>, vector<8x128xf32> -> vector<8x128xf32>
    %c0_66 = arith.constant 0 : index
    %c0_67 = arith.constant 0 : index
    %c0_68 = arith.constant 0 : index
    %110 = vector.load %arg7[%c0_66, %c0_67, %c0_68] : memref<4x1x128xf32, #tpu.memory_space<vmem>>, vector<1x1x128xf32>
    %111 = vector.shape_cast %110 : vector<1x1x128xf32> to vector<1x128xf32>
    %112 = vector.broadcast %111 : vector<1x128xf32> to vector<8x128xf32>
    %113 = arith.addf %109, %112 : vector<8x128xf32>
    %114 = tpu.concatenate %99, %12 in 1 : vector<8x32xf32>, vector<8x32xf32> -> vector<8x64xf32>
    %115 = arith.truncf %114 : vector<8x64xf32> to vector<8x64xbf16>
    %c1_69 = arith.constant 1 : index
    %c0_70 = arith.constant 0 : index
    %c0_71 = arith.constant 0 : index
    %116 = vector.load %arg5[%c1_69, %c0_70, %c0_71] : memref<4x64x128xbf16, #tpu.memory_space<vmem>>, vector<1x64x128xbf16>
    %117 = vector.shape_cast %116 : vector<1x64x128xbf16> to vector<64x128xbf16>
    %cst_72 = arith.constant dense<0.000000e+00> : vector<8x128xf32>
    %118 = tpu.matmul %115, %117, %cst_72 {dimension_numbers = #tpu.dot_dimension_numbers<[1], [0], [0], [1], [0, 0, 1, 1], [], []>} : vector<8x64xbf16>, vector<64x128xbf16>, vector<8x128xf32> -> vector<8x128xf32>
    %c1_73 = arith.constant 1 : index
    %c0_74 = arith.constant 0 : index
    %c0_75 = arith.constant 0 : index
    %119 = vector.load %arg7[%c1_73, %c0_74, %c0_75] : memref<4x1x128xf32, #tpu.memory_space<vmem>>, vector<1x1x128xf32>
    %120 = vector.shape_cast %119 : vector<1x1x128xf32> to vector<1x128xf32>
    %121 = vector.broadcast %120 : vector<1x128xf32> to vector<8x128xf32>
    %122 = arith.addf %118, %121 : vector<8x128xf32>
    %123 = arith.negf %104 : vector<8x128xf32>
    %124 = math.exp %123 : vector<8x128xf32>
    %cst_76 = arith.constant 1.000000e+00 : f32
    %125 = vector.broadcast %cst_76 : f32 to vector<8x128xf32>
    %126 = arith.addf %125, %124 : vector<8x128xf32>
    %127 = arith.divf %125, %126 : vector<8x128xf32>
    %128 = vector.extract_strided_slice %127 {offsets = [0, 0], sizes = [8, 32], strides = [1, 1]} : vector<8x128xf32> to vector<8x32xf32>
    %129 = vector.extract_strided_slice %127 {offsets = [0, 32], sizes = [8, 32], strides = [1, 1]} : vector<8x128xf32> to vector<8x32xf32>
    %130 = vector.extract_strided_slice %127 {offsets = [0, 64], sizes = [8, 32], strides = [1, 1]} : vector<8x128xf32> to vector<8x32xf32>
    %131 = vector.extract_strided_slice %127 {offsets = [0, 96], sizes = [8, 32], strides = [1, 1]} : vector<8x128xf32> to vector<8x32xf32>
    %cst_77 = arith.constant 2.000000e+00 : f32
    %132 = vector.broadcast %cst_77 : f32 to vector<8x32xf32>
    %133 = arith.mulf %131, %132 : vector<8x32xf32>
    %cst_78 = arith.constant 1.000000e+00 : f32
    %134 = vector.broadcast %cst_78 : f32 to vector<8x32xf32>
    %135 = arith.subf %133, %134 : vector<8x32xf32>
    %136 = arith.mulf %129, %79 : vector<8x32xf32>
    %137 = arith.mulf %128, %135 : vector<8x32xf32>
    %138 = arith.addf %136, %137 : vector<8x32xf32>
    %139 = math.tanh %138 : vector<8x32xf32>
    %140 = arith.mulf %130, %139 : vector<8x32xf32>
    %141 = arith.negf %113 : vector<8x128xf32>
    %142 = math.exp %141 : vector<8x128xf32>
    %cst_79 = arith.constant 1.000000e+00 : f32
    %143 = vector.broadcast %cst_79 : f32 to vector<8x128xf32>
    %144 = arith.addf %143, %142 : vector<8x128xf32>
    %145 = arith.divf %143, %144 : vector<8x128xf32>
    %146 = vector.extract_strided_slice %145 {offsets = [0, 0], sizes = [8, 32], strides = [1, 1]} : vector<8x128xf32> to vector<8x32xf32>
    %147 = vector.extract_strided_slice %145 {offsets = [0, 32], sizes = [8, 32], strides = [1, 1]} : vector<8x128xf32> to vector<8x32xf32>
    %148 = vector.extract_strided_slice %145 {offsets = [0, 64], sizes = [8, 32], strides = [1, 1]} : vector<8x128xf32> to vector<8x32xf32>
    %149 = vector.extract_strided_slice %145 {offsets = [0, 96], sizes = [8, 32], strides = [1, 1]} : vector<8x128xf32> to vector<8x32xf32>
    %cst_80 = arith.constant 2.000000e+00 : f32
    %150 = vector.broadcast %cst_80 : f32 to vector<8x32xf32>
    %151 = arith.mulf %149, %150 : vector<8x32xf32>
    %cst_81 = arith.constant 1.000000e+00 : f32
    %152 = vector.broadcast %cst_81 : f32 to vector<8x32xf32>
    %153 = arith.subf %151, %152 : vector<8x32xf32>
    %154 = arith.mulf %147, %97 : vector<8x32xf32>
    %155 = arith.mulf %146, %153 : vector<8x32xf32>
    %156 = arith.addf %154, %155 : vector<8x32xf32>
    %157 = math.tanh %156 : vector<8x32xf32>
    %158 = arith.mulf %148, %157 : vector<8x32xf32>
    %159 = arith.negf %122 : vector<8x128xf32>
    %160 = math.exp %159 : vector<8x128xf32>
    %cst_82 = arith.constant 1.000000e+00 : f32
    %161 = vector.broadcast %cst_82 : f32 to vector<8x128xf32>
    %162 = arith.addf %161, %160 : vector<8x128xf32>
    %163 = arith.divf %161, %162 : vector<8x128xf32>
    %164 = vector.extract_strided_slice %163 {offsets = [0, 0], sizes = [8, 32], strides = [1, 1]} : vector<8x128xf32> to vector<8x32xf32>
    %165 = vector.extract_strided_slice %163 {offsets = [0, 32], sizes = [8, 32], strides = [1, 1]} : vector<8x128xf32> to vector<8x32xf32>
    %166 = vector.extract_strided_slice %163 {offsets = [0, 64], sizes = [8, 32], strides = [1, 1]} : vector<8x128xf32> to vector<8x32xf32>
    %167 = vector.extract_strided_slice %163 {offsets = [0, 96], sizes = [8, 32], strides = [1, 1]} : vector<8x128xf32> to vector<8x32xf32>
    %cst_83 = arith.constant 2.000000e+00 : f32
    %168 = vector.broadcast %cst_83 : f32 to vector<8x32xf32>
    %169 = arith.mulf %167, %168 : vector<8x32xf32>
    %cst_84 = arith.constant 1.000000e+00 : f32
    %170 = vector.broadcast %cst_84 : f32 to vector<8x32xf32>
    %171 = arith.subf %169, %170 : vector<8x32xf32>
    %172 = arith.mulf %165, %22 : vector<8x32xf32>
    %173 = arith.mulf %164, %171 : vector<8x32xf32>
    %174 = arith.addf %172, %173 : vector<8x32xf32>
    %175 = math.tanh %174 : vector<8x32xf32>
    %176 = arith.mulf %166, %175 : vector<8x32xf32>
    %c24 = arith.constant 24 : index
    %c0_85 = arith.constant 0 : index
    %177 = vector.load %arg15[%c24, %c0_85] : memref<64x128xf32, #tpu.memory_space<vmem>>, vector<8x128xf32>
    %178 = arith.truncf %140 : vector<8x32xf32> to vector<8x32xbf16>
    %c0_86 = arith.constant 0 : index
    %c0_87 = arith.constant 0 : index
    %179 = vector.load %arg4[%c0_86, %c0_87] : memref<32x128xbf16, #tpu.memory_space<vmem>>, vector<32x128xbf16>
    %cst_88 = arith.constant dense<0.000000e+00> : vector<8x128xf32>
    %180 = tpu.matmul %178, %179, %cst_88 {dimension_numbers = #tpu.dot_dimension_numbers<[1], [0], [0], [1], [0, 0, 1, 1], [], []>} : vector<8x32xbf16>, vector<32x128xbf16>, vector<8x128xf32> -> vector<8x128xf32>
    %181 = arith.addf %177, %180 : vector<8x128xf32>
    %182 = tpu.concatenate %140, %158 in 1 : vector<8x32xf32>, vector<8x32xf32> -> vector<8x64xf32>
    %183 = arith.truncf %182 : vector<8x64xf32> to vector<8x64xbf16>
    %c0_89 = arith.constant 0 : index
    %c0_90 = arith.constant 0 : index
    %c0_91 = arith.constant 0 : index
    %184 = vector.load %arg5[%c0_89, %c0_90, %c0_91] : memref<4x64x128xbf16, #tpu.memory_space<vmem>>, vector<1x64x128xbf16>
    %185 = vector.shape_cast %184 : vector<1x64x128xbf16> to vector<64x128xbf16>
    %cst_92 = arith.constant dense<0.000000e+00> : vector<8x128xf32>
    %186 = tpu.matmul %183, %185, %cst_92 {dimension_numbers = #tpu.dot_dimension_numbers<[1], [0], [0], [1], [0, 0, 1, 1], [], []>} : vector<8x64xbf16>, vector<64x128xbf16>, vector<8x128xf32> -> vector<8x128xf32>
    %c0_93 = arith.constant 0 : index
    %c0_94 = arith.constant 0 : index
    %c0_95 = arith.constant 0 : index
    %187 = vector.load %arg7[%c0_93, %c0_94, %c0_95] : memref<4x1x128xf32, #tpu.memory_space<vmem>>, vector<1x1x128xf32>
    %188 = vector.shape_cast %187 : vector<1x1x128xf32> to vector<1x128xf32>
    %189 = vector.broadcast %188 : vector<1x128xf32> to vector<8x128xf32>
    %190 = arith.addf %186, %189 : vector<8x128xf32>
    %191 = tpu.concatenate %158, %176 in 1 : vector<8x32xf32>, vector<8x32xf32> -> vector<8x64xf32>
    %192 = arith.truncf %191 : vector<8x64xf32> to vector<8x64xbf16>
    %c1_96 = arith.constant 1 : index
    %c0_97 = arith.constant 0 : index
    %c0_98 = arith.constant 0 : index
    %193 = vector.load %arg5[%c1_96, %c0_97, %c0_98] : memref<4x64x128xbf16, #tpu.memory_space<vmem>>, vector<1x64x128xbf16>
    %194 = vector.shape_cast %193 : vector<1x64x128xbf16> to vector<64x128xbf16>
    %cst_99 = arith.constant dense<0.000000e+00> : vector<8x128xf32>
    %195 = tpu.matmul %192, %194, %cst_99 {dimension_numbers = #tpu.dot_dimension_numbers<[1], [0], [0], [1], [0, 0, 1, 1], [], []>} : vector<8x64xbf16>, vector<64x128xbf16>, vector<8x128xf32> -> vector<8x128xf32>
    %c1_100 = arith.constant 1 : index
    %c0_101 = arith.constant 0 : index
    %c0_102 = arith.constant 0 : index
    %196 = vector.load %arg7[%c1_100, %c0_101, %c0_102] : memref<4x1x128xf32, #tpu.memory_space<vmem>>, vector<1x1x128xf32>
    %197 = vector.shape_cast %196 : vector<1x1x128xf32> to vector<1x128xf32>
    %198 = vector.broadcast %197 : vector<1x128xf32> to vector<8x128xf32>
    %199 = arith.addf %195, %198 : vector<8x128xf32>
    %200 = tpu.concatenate %176, %14 in 1 : vector<8x32xf32>, vector<8x32xf32> -> vector<8x64xf32>
    %201 = arith.truncf %200 : vector<8x64xf32> to vector<8x64xbf16>
    %c2_103 = arith.constant 2 : index
    %c0_104 = arith.constant 0 : index
    %c0_105 = arith.constant 0 : index
    %202 = vector.load %arg5[%c2_103, %c0_104, %c0_105] : memref<4x64x128xbf16, #tpu.memory_space<vmem>>, vector<1x64x128xbf16>
    %203 = vector.shape_cast %202 : vector<1x64x128xbf16> to vector<64x128xbf16>
    %cst_106 = arith.constant dense<0.000000e+00> : vector<8x128xf32>
    %204 = tpu.matmul %201, %203, %cst_106 {dimension_numbers = #tpu.dot_dimension_numbers<[1], [0], [0], [1], [0, 0, 1, 1], [], []>} : vector<8x64xbf16>, vector<64x128xbf16>, vector<8x128xf32> -> vector<8x128xf32>
    %c2_107 = arith.constant 2 : index
    %c0_108 = arith.constant 0 : index
    %c0_109 = arith.constant 0 : index
    %205 = vector.load %arg7[%c2_107, %c0_108, %c0_109] : memref<4x1x128xf32, #tpu.memory_space<vmem>>, vector<1x1x128xf32>
    %206 = vector.shape_cast %205 : vector<1x1x128xf32> to vector<1x128xf32>
    %207 = vector.broadcast %206 : vector<1x128xf32> to vector<8x128xf32>
    %208 = arith.addf %204, %207 : vector<8x128xf32>
    %209 = arith.negf %181 : vector<8x128xf32>
    %210 = math.exp %209 : vector<8x128xf32>
    %cst_110 = arith.constant 1.000000e+00 : f32
    %211 = vector.broadcast %cst_110 : f32 to vector<8x128xf32>
    %212 = arith.addf %211, %210 : vector<8x128xf32>
    %213 = arith.divf %211, %212 : vector<8x128xf32>
    %214 = vector.extract_strided_slice %213 {offsets = [0, 0], sizes = [8, 32], strides = [1, 1]} : vector<8x128xf32> to vector<8x32xf32>
    %215 = vector.extract_strided_slice %213 {offsets = [0, 32], sizes = [8, 32], strides = [1, 1]} : vector<8x128xf32> to vector<8x32xf32>
    %216 = vector.extract_strided_slice %213 {offsets = [0, 64], sizes = [8, 32], strides = [1, 1]} : vector<8x128xf32> to vector<8x32xf32>
    %217 = vector.extract_strided_slice %213 {offsets = [0, 96], sizes = [8, 32], strides = [1, 1]} : vector<8x128xf32> to vector<8x32xf32>
    %cst_111 = arith.constant 2.000000e+00 : f32
    %218 = vector.broadcast %cst_111 : f32 to vector<8x32xf32>
    %219 = arith.mulf %217, %218 : vector<8x32xf32>
    %cst_112 = arith.constant 1.000000e+00 : f32
    %220 = vector.broadcast %cst_112 : f32 to vector<8x32xf32>
    %221 = arith.subf %219, %220 : vector<8x32xf32>
    %222 = arith.mulf %215, %138 : vector<8x32xf32>
    %223 = arith.mulf %214, %221 : vector<8x32xf32>
    %224 = arith.addf %222, %223 : vector<8x32xf32>
    %225 = math.tanh %224 : vector<8x32xf32>
    %226 = arith.mulf %216, %225 : vector<8x32xf32>
    %227 = arith.negf %190 : vector<8x128xf32>
    %228 = math.exp %227 : vector<8x128xf32>
    %cst_113 = arith.constant 1.000000e+00 : f32
    %229 = vector.broadcast %cst_113 : f32 to vector<8x128xf32>
    %230 = arith.addf %229, %228 : vector<8x128xf32>
    %231 = arith.divf %229, %230 : vector<8x128xf32>
    %232 = vector.extract_strided_slice %231 {offsets = [0, 0], sizes = [8, 32], strides = [1, 1]} : vector<8x128xf32> to vector<8x32xf32>
    %233 = vector.extract_strided_slice %231 {offsets = [0, 32], sizes = [8, 32], strides = [1, 1]} : vector<8x128xf32> to vector<8x32xf32>
    %234 = vector.extract_strided_slice %231 {offsets = [0, 64], sizes = [8, 32], strides = [1, 1]} : vector<8x128xf32> to vector<8x32xf32>
    %235 = vector.extract_strided_slice %231 {offsets = [0, 96], sizes = [8, 32], strides = [1, 1]} : vector<8x128xf32> to vector<8x32xf32>
    %cst_114 = arith.constant 2.000000e+00 : f32
    %236 = vector.broadcast %cst_114 : f32 to vector<8x32xf32>
    %237 = arith.mulf %235, %236 : vector<8x32xf32>
    %cst_115 = arith.constant 1.000000e+00 : f32
    %238 = vector.broadcast %cst_115 : f32 to vector<8x32xf32>
    %239 = arith.subf %237, %238 : vector<8x32xf32>
    %240 = arith.mulf %233, %156 : vector<8x32xf32>
    %241 = arith.mulf %232, %239 : vector<8x32xf32>
    %242 = arith.addf %240, %241 : vector<8x32xf32>
    %243 = math.tanh %242 : vector<8x32xf32>
    %244 = arith.mulf %234, %243 : vector<8x32xf32>
    %245 = arith.negf %199 : vector<8x128xf32>
    %246 = math.exp %245 : vector<8x128xf32>
    %cst_116 = arith.constant 1.000000e+00 : f32
    %247 = vector.broadcast %cst_116 : f32 to vector<8x128xf32>
    %248 = arith.addf %247, %246 : vector<8x128xf32>
    %249 = arith.divf %247, %248 : vector<8x128xf32>
    %250 = vector.extract_strided_slice %249 {offsets = [0, 0], sizes = [8, 32], strides = [1, 1]} : vector<8x128xf32> to vector<8x32xf32>
    %251 = vector.extract_strided_slice %249 {offsets = [0, 32], sizes = [8, 32], strides = [1, 1]} : vector<8x128xf32> to vector<8x32xf32>
    %252 = vector.extract_strided_slice %249 {offsets = [0, 64], sizes = [8, 32], strides = [1, 1]} : vector<8x128xf32> to vector<8x32xf32>
    %253 = vector.extract_strided_slice %249 {offsets = [0, 96], sizes = [8, 32], strides = [1, 1]} : vector<8x128xf32> to vector<8x32xf32>
    %cst_117 = arith.constant 2.000000e+00 : f32
    %254 = vector.broadcast %cst_117 : f32 to vector<8x32xf32>
    %255 = arith.mulf %253, %254 : vector<8x32xf32>
    %cst_118 = arith.constant 1.000000e+00 : f32
    %256 = vector.broadcast %cst_118 : f32 to vector<8x32xf32>
    %257 = arith.subf %255, %256 : vector<8x32xf32>
    %258 = arith.mulf %251, %174 : vector<8x32xf32>
    %259 = arith.mulf %250, %257 : vector<8x32xf32>
    %260 = arith.addf %258, %259 : vector<8x32xf32>
    %261 = math.tanh %260 : vector<8x32xf32>
    %262 = arith.mulf %252, %261 : vector<8x32xf32>
    %263 = arith.negf %208 : vector<8x128xf32>
    %264 = math.exp %263 : vector<8x128xf32>
    %cst_119 = arith.constant 1.000000e+00 : f32
    %265 = vector.broadcast %cst_119 : f32 to vector<8x128xf32>
    %266 = arith.addf %265, %264 : vector<8x128xf32>
    %267 = arith.divf %265, %266 : vector<8x128xf32>
    %268 = vector.extract_strided_slice %267 {offsets = [0, 0], sizes = [8, 32], strides = [1, 1]} : vector<8x128xf32> to vector<8x32xf32>
    %269 = vector.extract_strided_slice %267 {offsets = [0, 32], sizes = [8, 32], strides = [1, 1]} : vector<8x128xf32> to vector<8x32xf32>
    %270 = vector.extract_strided_slice %267 {offsets = [0, 64], sizes = [8, 32], strides = [1, 1]} : vector<8x128xf32> to vector<8x32xf32>
    %271 = vector.extract_strided_slice %267 {offsets = [0, 96], sizes = [8, 32], strides = [1, 1]} : vector<8x128xf32> to vector<8x32xf32>
    %cst_120 = arith.constant 2.000000e+00 : f32
    %272 = vector.broadcast %cst_120 : f32 to vector<8x32xf32>
    %273 = arith.mulf %271, %272 : vector<8x32xf32>
    %cst_121 = arith.constant 1.000000e+00 : f32
    %274 = vector.broadcast %cst_121 : f32 to vector<8x32xf32>
    %275 = arith.subf %273, %274 : vector<8x32xf32>
    %276 = arith.mulf %269, %24 : vector<8x32xf32>
    %277 = arith.mulf %268, %275 : vector<8x32xf32>
    %278 = arith.addf %276, %277 : vector<8x32xf32>
    %279 = math.tanh %278 : vector<8x32xf32>
    %280 = arith.mulf %270, %279 : vector<8x32xf32>
    %c32 = arith.constant 32 : index
    %c0_122 = arith.constant 0 : index
    %281 = vector.load %arg15[%c32, %c0_122] : memref<64x128xf32, #tpu.memory_space<vmem>>, vector<8x128xf32>
    %282 = arith.truncf %226 : vector<8x32xf32> to vector<8x32xbf16>
    %c0_123 = arith.constant 0 : index
    %c0_124 = arith.constant 0 : index
    %283 = vector.load %arg4[%c0_123, %c0_124] : memref<32x128xbf16, #tpu.memory_space<vmem>>, vector<32x128xbf16>
    %cst_125 = arith.constant dense<0.000000e+00> : vector<8x128xf32>
    %284 = tpu.matmul %282, %283, %cst_125 {dimension_numbers = #tpu.dot_dimension_numbers<[1], [0], [0], [1], [0, 0, 1, 1], [], []>} : vector<8x32xbf16>, vector<32x128xbf16>, vector<8x128xf32> -> vector<8x128xf32>
    %285 = arith.addf %281, %284 : vector<8x128xf32>
    %286 = tpu.concatenate %226, %244 in 1 : vector<8x32xf32>, vector<8x32xf32> -> vector<8x64xf32>
    %287 = arith.truncf %286 : vector<8x64xf32> to vector<8x64xbf16>
    %c0_126 = arith.constant 0 : index
    %c0_127 = arith.constant 0 : index
    %c0_128 = arith.constant 0 : index
    %288 = vector.load %arg5[%c0_126, %c0_127, %c0_128] : memref<4x64x128xbf16, #tpu.memory_space<vmem>>, vector<1x64x128xbf16>
    %289 = vector.shape_cast %288 : vector<1x64x128xbf16> to vector<64x128xbf16>
    %cst_129 = arith.constant dense<0.000000e+00> : vector<8x128xf32>
    %290 = tpu.matmul %287, %289, %cst_129 {dimension_numbers = #tpu.dot_dimension_numbers<[1], [0], [0], [1], [0, 0, 1, 1], [], []>} : vector<8x64xbf16>, vector<64x128xbf16>, vector<8x128xf32> -> vector<8x128xf32>
    %c0_130 = arith.constant 0 : index
    %c0_131 = arith.constant 0 : index
    %c0_132 = arith.constant 0 : index
    %291 = vector.load %arg7[%c0_130, %c0_131, %c0_132] : memref<4x1x128xf32, #tpu.memory_space<vmem>>, vector<1x1x128xf32>
    %292 = vector.shape_cast %291 : vector<1x1x128xf32> to vector<1x128xf32>
    %293 = vector.broadcast %292 : vector<1x128xf32> to vector<8x128xf32>
    %294 = arith.addf %290, %293 : vector<8x128xf32>
    %295 = tpu.concatenate %244, %262 in 1 : vector<8x32xf32>, vector<8x32xf32> -> vector<8x64xf32>
    %296 = arith.truncf %295 : vector<8x64xf32> to vector<8x64xbf16>
    %c1_133 = arith.constant 1 : index
    %c0_134 = arith.constant 0 : index
    %c0_135 = arith.constant 0 : index
    %297 = vector.load %arg5[%c1_133, %c0_134, %c0_135] : memref<4x64x128xbf16, #tpu.memory_space<vmem>>, vector<1x64x128xbf16>
    %298 = vector.shape_cast %297 : vector<1x64x128xbf16> to vector<64x128xbf16>
    %cst_136 = arith.constant dense<0.000000e+00> : vector<8x128xf32>
    %299 = tpu.matmul %296, %298, %cst_136 {dimension_numbers = #tpu.dot_dimension_numbers<[1], [0], [0], [1], [0, 0, 1, 1], [], []>} : vector<8x64xbf16>, vector<64x128xbf16>, vector<8x128xf32> -> vector<8x128xf32>
    %c1_137 = arith.constant 1 : index
    %c0_138 = arith.constant 0 : index
    %c0_139 = arith.constant 0 : index
    %300 = vector.load %arg7[%c1_137, %c0_138, %c0_139] : memref<4x1x128xf32, #tpu.memory_space<vmem>>, vector<1x1x128xf32>
    %301 = vector.shape_cast %300 : vector<1x1x128xf32> to vector<1x128xf32>
    %302 = vector.broadcast %301 : vector<1x128xf32> to vector<8x128xf32>
    %303 = arith.addf %299, %302 : vector<8x128xf32>
    %304 = tpu.concatenate %262, %280 in 1 : vector<8x32xf32>, vector<8x32xf32> -> vector<8x64xf32>
    %305 = arith.truncf %304 : vector<8x64xf32> to vector<8x64xbf16>
    %c2_140 = arith.constant 2 : index
    %c0_141 = arith.constant 0 : index
    %c0_142 = arith.constant 0 : index
    %306 = vector.load %arg5[%c2_140, %c0_141, %c0_142] : memref<4x64x128xbf16, #tpu.memory_space<vmem>>, vector<1x64x128xbf16>
    %307 = vector.shape_cast %306 : vector<1x64x128xbf16> to vector<64x128xbf16>
    %cst_143 = arith.constant dense<0.000000e+00> : vector<8x128xf32>
    %308 = tpu.matmul %305, %307, %cst_143 {dimension_numbers = #tpu.dot_dimension_numbers<[1], [0], [0], [1], [0, 0, 1, 1], [], []>} : vector<8x64xbf16>, vector<64x128xbf16>, vector<8x128xf32> -> vector<8x128xf32>
    %c2_144 = arith.constant 2 : index
    %c0_145 = arith.constant 0 : index
    %c0_146 = arith.constant 0 : index
    %309 = vector.load %arg7[%c2_144, %c0_145, %c0_146] : memref<4x1x128xf32, #tpu.memory_space<vmem>>, vector<1x1x128xf32>
    %310 = vector.shape_cast %309 : vector<1x1x128xf32> to vector<1x128xf32>
    %311 = vector.broadcast %310 : vector<1x128xf32> to vector<8x128xf32>
    %312 = arith.addf %308, %311 : vector<8x128xf32>
    %313 = tpu.concatenate %280, %16 in 1 : vector<8x32xf32>, vector<8x32xf32> -> vector<8x64xf32>
    %314 = arith.truncf %313 : vector<8x64xf32> to vector<8x64xbf16>
    %c3_147 = arith.constant 3 : index
    %c0_148 = arith.constant 0 : index
    %c0_149 = arith.constant 0 : index
    %315 = vector.load %arg5[%c3_147, %c0_148, %c0_149] : memref<4x64x128xbf16, #tpu.memory_space<vmem>>, vector<1x64x128xbf16>
    %316 = vector.shape_cast %315 : vector<1x64x128xbf16> to vector<64x128xbf16>
    %cst_150 = arith.constant dense<0.000000e+00> : vector<8x128xf32>
    %317 = tpu.matmul %314, %316, %cst_150 {dimension_numbers = #tpu.dot_dimension_numbers<[1], [0], [0], [1], [0, 0, 1, 1], [], []>} : vector<8x64xbf16>, vector<64x128xbf16>, vector<8x128xf32> -> vector<8x128xf32>
    %c3_151 = arith.constant 3 : index
    %c0_152 = arith.constant 0 : index
    %c0_153 = arith.constant 0 : index
    %318 = vector.load %arg7[%c3_151, %c0_152, %c0_153] : memref<4x1x128xf32, #tpu.memory_space<vmem>>, vector<1x1x128xf32>
    %319 = vector.shape_cast %318 : vector<1x1x128xf32> to vector<1x128xf32>
    %320 = vector.broadcast %319 : vector<1x128xf32> to vector<8x128xf32>
    %321 = arith.addf %317, %320 : vector<8x128xf32>
    %322 = arith.negf %285 : vector<8x128xf32>
    %323 = math.exp %322 : vector<8x128xf32>
    %cst_154 = arith.constant 1.000000e+00 : f32
    %324 = vector.broadcast %cst_154 : f32 to vector<8x128xf32>
    %325 = arith.addf %324, %323 : vector<8x128xf32>
    %326 = arith.divf %324, %325 : vector<8x128xf32>
    %327 = vector.extract_strided_slice %326 {offsets = [0, 0], sizes = [8, 32], strides = [1, 1]} : vector<8x128xf32> to vector<8x32xf32>
    %328 = vector.extract_strided_slice %326 {offsets = [0, 32], sizes = [8, 32], strides = [1, 1]} : vector<8x128xf32> to vector<8x32xf32>
    %329 = vector.extract_strided_slice %326 {offsets = [0, 64], sizes = [8, 32], strides = [1, 1]} : vector<8x128xf32> to vector<8x32xf32>
    %330 = vector.extract_strided_slice %326 {offsets = [0, 96], sizes = [8, 32], strides = [1, 1]} : vector<8x128xf32> to vector<8x32xf32>
    %cst_155 = arith.constant 2.000000e+00 : f32
    %331 = vector.broadcast %cst_155 : f32 to vector<8x32xf32>
    %332 = arith.mulf %330, %331 : vector<8x32xf32>
    %cst_156 = arith.constant 1.000000e+00 : f32
    %333 = vector.broadcast %cst_156 : f32 to vector<8x32xf32>
    %334 = arith.subf %332, %333 : vector<8x32xf32>
    %335 = arith.mulf %328, %224 : vector<8x32xf32>
    %336 = arith.mulf %327, %334 : vector<8x32xf32>
    %337 = arith.addf %335, %336 : vector<8x32xf32>
    %338 = math.tanh %337 : vector<8x32xf32>
    %339 = arith.mulf %329, %338 : vector<8x32xf32>
    %340 = arith.negf %294 : vector<8x128xf32>
    %341 = math.exp %340 : vector<8x128xf32>
    %cst_157 = arith.constant 1.000000e+00 : f32
    %342 = vector.broadcast %cst_157 : f32 to vector<8x128xf32>
    %343 = arith.addf %342, %341 : vector<8x128xf32>
    %344 = arith.divf %342, %343 : vector<8x128xf32>
    %345 = vector.extract_strided_slice %344 {offsets = [0, 0], sizes = [8, 32], strides = [1, 1]} : vector<8x128xf32> to vector<8x32xf32>
    %346 = vector.extract_strided_slice %344 {offsets = [0, 32], sizes = [8, 32], strides = [1, 1]} : vector<8x128xf32> to vector<8x32xf32>
    %347 = vector.extract_strided_slice %344 {offsets = [0, 64], sizes = [8, 32], strides = [1, 1]} : vector<8x128xf32> to vector<8x32xf32>
    %348 = vector.extract_strided_slice %344 {offsets = [0, 96], sizes = [8, 32], strides = [1, 1]} : vector<8x128xf32> to vector<8x32xf32>
    %cst_158 = arith.constant 2.000000e+00 : f32
    %349 = vector.broadcast %cst_158 : f32 to vector<8x32xf32>
    %350 = arith.mulf %348, %349 : vector<8x32xf32>
    %cst_159 = arith.constant 1.000000e+00 : f32
    %351 = vector.broadcast %cst_159 : f32 to vector<8x32xf32>
    %352 = arith.subf %350, %351 : vector<8x32xf32>
    %353 = arith.mulf %346, %242 : vector<8x32xf32>
    %354 = arith.mulf %345, %352 : vector<8x32xf32>
    %355 = arith.addf %353, %354 : vector<8x32xf32>
    %356 = math.tanh %355 : vector<8x32xf32>
    %357 = arith.mulf %347, %356 : vector<8x32xf32>
    %358 = arith.negf %303 : vector<8x128xf32>
    %359 = math.exp %358 : vector<8x128xf32>
    %cst_160 = arith.constant 1.000000e+00 : f32
    %360 = vector.broadcast %cst_160 : f32 to vector<8x128xf32>
    %361 = arith.addf %360, %359 : vector<8x128xf32>
    %362 = arith.divf %360, %361 : vector<8x128xf32>
    %363 = vector.extract_strided_slice %362 {offsets = [0, 0], sizes = [8, 32], strides = [1, 1]} : vector<8x128xf32> to vector<8x32xf32>
    %364 = vector.extract_strided_slice %362 {offsets = [0, 32], sizes = [8, 32], strides = [1, 1]} : vector<8x128xf32> to vector<8x32xf32>
    %365 = vector.extract_strided_slice %362 {offsets = [0, 64], sizes = [8, 32], strides = [1, 1]} : vector<8x128xf32> to vector<8x32xf32>
    %366 = vector.extract_strided_slice %362 {offsets = [0, 96], sizes = [8, 32], strides = [1, 1]} : vector<8x128xf32> to vector<8x32xf32>
    %cst_161 = arith.constant 2.000000e+00 : f32
    %367 = vector.broadcast %cst_161 : f32 to vector<8x32xf32>
    %368 = arith.mulf %366, %367 : vector<8x32xf32>
    %cst_162 = arith.constant 1.000000e+00 : f32
    %369 = vector.broadcast %cst_162 : f32 to vector<8x32xf32>
    %370 = arith.subf %368, %369 : vector<8x32xf32>
    %371 = arith.mulf %364, %260 : vector<8x32xf32>
    %372 = arith.mulf %363, %370 : vector<8x32xf32>
    %373 = arith.addf %371, %372 : vector<8x32xf32>
    %374 = math.tanh %373 : vector<8x32xf32>
    %375 = arith.mulf %365, %374 : vector<8x32xf32>
    %376 = arith.negf %312 : vector<8x128xf32>
    %377 = math.exp %376 : vector<8x128xf32>
    %cst_163 = arith.constant 1.000000e+00 : f32
    %378 = vector.broadcast %cst_163 : f32 to vector<8x128xf32>
    %379 = arith.addf %378, %377 : vector<8x128xf32>
    %380 = arith.divf %378, %379 : vector<8x128xf32>
    %381 = vector.extract_strided_slice %380 {offsets = [0, 0], sizes = [8, 32], strides = [1, 1]} : vector<8x128xf32> to vector<8x32xf32>
    %382 = vector.extract_strided_slice %380 {offsets = [0, 32], sizes = [8, 32], strides = [1, 1]} : vector<8x128xf32> to vector<8x32xf32>
    %383 = vector.extract_strided_slice %380 {offsets = [0, 64], sizes = [8, 32], strides = [1, 1]} : vector<8x128xf32> to vector<8x32xf32>
    %384 = vector.extract_strided_slice %380 {offsets = [0, 96], sizes = [8, 32], strides = [1, 1]} : vector<8x128xf32> to vector<8x32xf32>
    %cst_164 = arith.constant 2.000000e+00 : f32
    %385 = vector.broadcast %cst_164 : f32 to vector<8x32xf32>
    %386 = arith.mulf %384, %385 : vector<8x32xf32>
    %cst_165 = arith.constant 1.000000e+00 : f32
    %387 = vector.broadcast %cst_165 : f32 to vector<8x32xf32>
    %388 = arith.subf %386, %387 : vector<8x32xf32>
    %389 = arith.mulf %382, %278 : vector<8x32xf32>
    %390 = arith.mulf %381, %388 : vector<8x32xf32>
    %391 = arith.addf %389, %390 : vector<8x32xf32>
    %392 = math.tanh %391 : vector<8x32xf32>
    %393 = arith.mulf %383, %392 : vector<8x32xf32>
    %394 = arith.negf %321 : vector<8x128xf32>
    %395 = math.exp %394 : vector<8x128xf32>
    %cst_166 = arith.constant 1.000000e+00 : f32
    %396 = vector.broadcast %cst_166 : f32 to vector<8x128xf32>
    %397 = arith.addf %396, %395 : vector<8x128xf32>
    %398 = arith.divf %396, %397 : vector<8x128xf32>
    %399 = vector.extract_strided_slice %398 {offsets = [0, 0], sizes = [8, 32], strides = [1, 1]} : vector<8x128xf32> to vector<8x32xf32>
    %400 = vector.extract_strided_slice %398 {offsets = [0, 32], sizes = [8, 32], strides = [1, 1]} : vector<8x128xf32> to vector<8x32xf32>
    %401 = vector.extract_strided_slice %398 {offsets = [0, 64], sizes = [8, 32], strides = [1, 1]} : vector<8x128xf32> to vector<8x32xf32>
    %402 = vector.extract_strided_slice %398 {offsets = [0, 96], sizes = [8, 32], strides = [1, 1]} : vector<8x128xf32> to vector<8x32xf32>
    %cst_167 = arith.constant 2.000000e+00 : f32
    %403 = vector.broadcast %cst_167 : f32 to vector<8x32xf32>
    %404 = arith.mulf %402, %403 : vector<8x32xf32>
    %cst_168 = arith.constant 1.000000e+00 : f32
    %405 = vector.broadcast %cst_168 : f32 to vector<8x32xf32>
    %406 = arith.subf %404, %405 : vector<8x32xf32>
    %407 = arith.mulf %400, %26 : vector<8x32xf32>
    %408 = arith.mulf %399, %406 : vector<8x32xf32>
    %409 = arith.addf %407, %408 : vector<8x32xf32>
    %410 = math.tanh %409 : vector<8x32xf32>
    %411 = arith.mulf %401, %410 : vector<8x32xf32>
    %c40 = arith.constant 40 : index
    %c0_169 = arith.constant 0 : index
    %412 = vector.load %arg15[%c40, %c0_169] : memref<64x128xf32, #tpu.memory_space<vmem>>, vector<8x128xf32>
    %413 = arith.truncf %339 : vector<8x32xf32> to vector<8x32xbf16>
    %c0_170 = arith.constant 0 : index
    %c0_171 = arith.constant 0 : index
    %414 = vector.load %arg4[%c0_170, %c0_171] : memref<32x128xbf16, #tpu.memory_space<vmem>>, vector<32x128xbf16>
    %cst_172 = arith.constant dense<0.000000e+00> : vector<8x128xf32>
    %415 = tpu.matmul %413, %414, %cst_172 {dimension_numbers = #tpu.dot_dimension_numbers<[1], [0], [0], [1], [0, 0, 1, 1], [], []>} : vector<8x32xbf16>, vector<32x128xbf16>, vector<8x128xf32> -> vector<8x128xf32>
    %416 = arith.addf %412, %415 : vector<8x128xf32>
    %417 = tpu.concatenate %339, %357 in 1 : vector<8x32xf32>, vector<8x32xf32> -> vector<8x64xf32>
    %418 = arith.truncf %417 : vector<8x64xf32> to vector<8x64xbf16>
    %c0_173 = arith.constant 0 : index
    %c0_174 = arith.constant 0 : index
    %c0_175 = arith.constant 0 : index
    %419 = vector.load %arg5[%c0_173, %c0_174, %c0_175] : memref<4x64x128xbf16, #tpu.memory_space<vmem>>, vector<1x64x128xbf16>
    %420 = vector.shape_cast %419 : vector<1x64x128xbf16> to vector<64x128xbf16>
    %cst_176 = arith.constant dense<0.000000e+00> : vector<8x128xf32>
    %421 = tpu.matmul %418, %420, %cst_176 {dimension_numbers = #tpu.dot_dimension_numbers<[1], [0], [0], [1], [0, 0, 1, 1], [], []>} : vector<8x64xbf16>, vector<64x128xbf16>, vector<8x128xf32> -> vector<8x128xf32>
    %c0_177 = arith.constant 0 : index
    %c0_178 = arith.constant 0 : index
    %c0_179 = arith.constant 0 : index
    %422 = vector.load %arg7[%c0_177, %c0_178, %c0_179] : memref<4x1x128xf32, #tpu.memory_space<vmem>>, vector<1x1x128xf32>
    %423 = vector.shape_cast %422 : vector<1x1x128xf32> to vector<1x128xf32>
    %424 = vector.broadcast %423 : vector<1x128xf32> to vector<8x128xf32>
    %425 = arith.addf %421, %424 : vector<8x128xf32>
    %426 = tpu.concatenate %357, %375 in 1 : vector<8x32xf32>, vector<8x32xf32> -> vector<8x64xf32>
    %427 = arith.truncf %426 : vector<8x64xf32> to vector<8x64xbf16>
    %c1_180 = arith.constant 1 : index
    %c0_181 = arith.constant 0 : index
    %c0_182 = arith.constant 0 : index
    %428 = vector.load %arg5[%c1_180, %c0_181, %c0_182] : memref<4x64x128xbf16, #tpu.memory_space<vmem>>, vector<1x64x128xbf16>
    %429 = vector.shape_cast %428 : vector<1x64x128xbf16> to vector<64x128xbf16>
    %cst_183 = arith.constant dense<0.000000e+00> : vector<8x128xf32>
    %430 = tpu.matmul %427, %429, %cst_183 {dimension_numbers = #tpu.dot_dimension_numbers<[1], [0], [0], [1], [0, 0, 1, 1], [], []>} : vector<8x64xbf16>, vector<64x128xbf16>, vector<8x128xf32> -> vector<8x128xf32>
    %c1_184 = arith.constant 1 : index
    %c0_185 = arith.constant 0 : index
    %c0_186 = arith.constant 0 : index
    %431 = vector.load %arg7[%c1_184, %c0_185, %c0_186] : memref<4x1x128xf32, #tpu.memory_space<vmem>>, vector<1x1x128xf32>
    %432 = vector.shape_cast %431 : vector<1x1x128xf32> to vector<1x128xf32>
    %433 = vector.broadcast %432 : vector<1x128xf32> to vector<8x128xf32>
    %434 = arith.addf %430, %433 : vector<8x128xf32>
    %435 = tpu.concatenate %375, %393 in 1 : vector<8x32xf32>, vector<8x32xf32> -> vector<8x64xf32>
    %436 = arith.truncf %435 : vector<8x64xf32> to vector<8x64xbf16>
    %c2_187 = arith.constant 2 : index
    %c0_188 = arith.constant 0 : index
    %c0_189 = arith.constant 0 : index
    %437 = vector.load %arg5[%c2_187, %c0_188, %c0_189] : memref<4x64x128xbf16, #tpu.memory_space<vmem>>, vector<1x64x128xbf16>
    %438 = vector.shape_cast %437 : vector<1x64x128xbf16> to vector<64x128xbf16>
    %cst_190 = arith.constant dense<0.000000e+00> : vector<8x128xf32>
    %439 = tpu.matmul %436, %438, %cst_190 {dimension_numbers = #tpu.dot_dimension_numbers<[1], [0], [0], [1], [0, 0, 1, 1], [], []>} : vector<8x64xbf16>, vector<64x128xbf16>, vector<8x128xf32> -> vector<8x128xf32>
    %c2_191 = arith.constant 2 : index
    %c0_192 = arith.constant 0 : index
    %c0_193 = arith.constant 0 : index
    %440 = vector.load %arg7[%c2_191, %c0_192, %c0_193] : memref<4x1x128xf32, #tpu.memory_space<vmem>>, vector<1x1x128xf32>
    %441 = vector.shape_cast %440 : vector<1x1x128xf32> to vector<1x128xf32>
    %442 = vector.broadcast %441 : vector<1x128xf32> to vector<8x128xf32>
    %443 = arith.addf %439, %442 : vector<8x128xf32>
    %444 = tpu.concatenate %393, %411 in 1 : vector<8x32xf32>, vector<8x32xf32> -> vector<8x64xf32>
    %445 = arith.truncf %444 : vector<8x64xf32> to vector<8x64xbf16>
    %c3_194 = arith.constant 3 : index
    %c0_195 = arith.constant 0 : index
    %c0_196 = arith.constant 0 : index
    %446 = vector.load %arg5[%c3_194, %c0_195, %c0_196] : memref<4x64x128xbf16, #tpu.memory_space<vmem>>, vector<1x64x128xbf16>
    %447 = vector.shape_cast %446 : vector<1x64x128xbf16> to vector<64x128xbf16>
    %cst_197 = arith.constant dense<0.000000e+00> : vector<8x128xf32>
    %448 = tpu.matmul %445, %447, %cst_197 {dimension_numbers = #tpu.dot_dimension_numbers<[1], [0], [0], [1], [0, 0, 1, 1], [], []>} : vector<8x64xbf16>, vector<64x128xbf16>, vector<8x128xf32> -> vector<8x128xf32>
    %c3_198 = arith.constant 3 : index
    %c0_199 = arith.constant 0 : index
    %c0_200 = arith.constant 0 : index
    %449 = vector.load %arg7[%c3_198, %c0_199, %c0_200] : memref<4x1x128xf32, #tpu.memory_space<vmem>>, vector<1x1x128xf32>
    %450 = vector.shape_cast %449 : vector<1x1x128xf32> to vector<1x128xf32>
    %451 = vector.broadcast %450 : vector<1x128xf32> to vector<8x128xf32>
    %452 = arith.addf %448, %451 : vector<8x128xf32>
    %453 = arith.negf %416 : vector<8x128xf32>
    %454 = math.exp %453 : vector<8x128xf32>
    %cst_201 = arith.constant 1.000000e+00 : f32
    %455 = vector.broadcast %cst_201 : f32 to vector<8x128xf32>
    %456 = arith.addf %455, %454 : vector<8x128xf32>
    %457 = arith.divf %455, %456 : vector<8x128xf32>
    %458 = vector.extract_strided_slice %457 {offsets = [0, 0], sizes = [8, 32], strides = [1, 1]} : vector<8x128xf32> to vector<8x32xf32>
    %459 = vector.extract_strided_slice %457 {offsets = [0, 32], sizes = [8, 32], strides = [1, 1]} : vector<8x128xf32> to vector<8x32xf32>
    %460 = vector.extract_strided_slice %457 {offsets = [0, 64], sizes = [8, 32], strides = [1, 1]} : vector<8x128xf32> to vector<8x32xf32>
    %461 = vector.extract_strided_slice %457 {offsets = [0, 96], sizes = [8, 32], strides = [1, 1]} : vector<8x128xf32> to vector<8x32xf32>
    %cst_202 = arith.constant 2.000000e+00 : f32
    %462 = vector.broadcast %cst_202 : f32 to vector<8x32xf32>
    %463 = arith.mulf %461, %462 : vector<8x32xf32>
    %cst_203 = arith.constant 1.000000e+00 : f32
    %464 = vector.broadcast %cst_203 : f32 to vector<8x32xf32>
    %465 = arith.subf %463, %464 : vector<8x32xf32>
    %466 = arith.mulf %459, %337 : vector<8x32xf32>
    %467 = arith.mulf %458, %465 : vector<8x32xf32>
    %468 = arith.addf %466, %467 : vector<8x32xf32>
    %469 = math.tanh %468 : vector<8x32xf32>
    %470 = arith.mulf %460, %469 : vector<8x32xf32>
    %471 = arith.negf %425 : vector<8x128xf32>
    %472 = math.exp %471 : vector<8x128xf32>
    %cst_204 = arith.constant 1.000000e+00 : f32
    %473 = vector.broadcast %cst_204 : f32 to vector<8x128xf32>
    %474 = arith.addf %473, %472 : vector<8x128xf32>
    %475 = arith.divf %473, %474 : vector<8x128xf32>
    %476 = vector.extract_strided_slice %475 {offsets = [0, 0], sizes = [8, 32], strides = [1, 1]} : vector<8x128xf32> to vector<8x32xf32>
    %477 = vector.extract_strided_slice %475 {offsets = [0, 32], sizes = [8, 32], strides = [1, 1]} : vector<8x128xf32> to vector<8x32xf32>
    %478 = vector.extract_strided_slice %475 {offsets = [0, 64], sizes = [8, 32], strides = [1, 1]} : vector<8x128xf32> to vector<8x32xf32>
    %479 = vector.extract_strided_slice %475 {offsets = [0, 96], sizes = [8, 32], strides = [1, 1]} : vector<8x128xf32> to vector<8x32xf32>
    %cst_205 = arith.constant 2.000000e+00 : f32
    %480 = vector.broadcast %cst_205 : f32 to vector<8x32xf32>
    %481 = arith.mulf %479, %480 : vector<8x32xf32>
    %cst_206 = arith.constant 1.000000e+00 : f32
    %482 = vector.broadcast %cst_206 : f32 to vector<8x32xf32>
    %483 = arith.subf %481, %482 : vector<8x32xf32>
    %484 = arith.mulf %477, %355 : vector<8x32xf32>
    %485 = arith.mulf %476, %483 : vector<8x32xf32>
    %486 = arith.addf %484, %485 : vector<8x32xf32>
    %487 = math.tanh %486 : vector<8x32xf32>
    %488 = arith.mulf %478, %487 : vector<8x32xf32>
    %489 = arith.negf %434 : vector<8x128xf32>
    %490 = math.exp %489 : vector<8x128xf32>
    %cst_207 = arith.constant 1.000000e+00 : f32
    %491 = vector.broadcast %cst_207 : f32 to vector<8x128xf32>
    %492 = arith.addf %491, %490 : vector<8x128xf32>
    %493 = arith.divf %491, %492 : vector<8x128xf32>
    %494 = vector.extract_strided_slice %493 {offsets = [0, 0], sizes = [8, 32], strides = [1, 1]} : vector<8x128xf32> to vector<8x32xf32>
    %495 = vector.extract_strided_slice %493 {offsets = [0, 32], sizes = [8, 32], strides = [1, 1]} : vector<8x128xf32> to vector<8x32xf32>
    %496 = vector.extract_strided_slice %493 {offsets = [0, 64], sizes = [8, 32], strides = [1, 1]} : vector<8x128xf32> to vector<8x32xf32>
    %497 = vector.extract_strided_slice %493 {offsets = [0, 96], sizes = [8, 32], strides = [1, 1]} : vector<8x128xf32> to vector<8x32xf32>
    %cst_208 = arith.constant 2.000000e+00 : f32
    %498 = vector.broadcast %cst_208 : f32 to vector<8x32xf32>
    %499 = arith.mulf %497, %498 : vector<8x32xf32>
    %cst_209 = arith.constant 1.000000e+00 : f32
    %500 = vector.broadcast %cst_209 : f32 to vector<8x32xf32>
    %501 = arith.subf %499, %500 : vector<8x32xf32>
    %502 = arith.mulf %495, %373 : vector<8x32xf32>
    %503 = arith.mulf %494, %501 : vector<8x32xf32>
    %504 = arith.addf %502, %503 : vector<8x32xf32>
    %505 = math.tanh %504 : vector<8x32xf32>
    %506 = arith.mulf %496, %505 : vector<8x32xf32>
    %507 = arith.negf %443 : vector<8x128xf32>
    %508 = math.exp %507 : vector<8x128xf32>
    %cst_210 = arith.constant 1.000000e+00 : f32
    %509 = vector.broadcast %cst_210 : f32 to vector<8x128xf32>
    %510 = arith.addf %509, %508 : vector<8x128xf32>
    %511 = arith.divf %509, %510 : vector<8x128xf32>
    %512 = vector.extract_strided_slice %511 {offsets = [0, 0], sizes = [8, 32], strides = [1, 1]} : vector<8x128xf32> to vector<8x32xf32>
    %513 = vector.extract_strided_slice %511 {offsets = [0, 32], sizes = [8, 32], strides = [1, 1]} : vector<8x128xf32> to vector<8x32xf32>
    %514 = vector.extract_strided_slice %511 {offsets = [0, 64], sizes = [8, 32], strides = [1, 1]} : vector<8x128xf32> to vector<8x32xf32>
    %515 = vector.extract_strided_slice %511 {offsets = [0, 96], sizes = [8, 32], strides = [1, 1]} : vector<8x128xf32> to vector<8x32xf32>
    %cst_211 = arith.constant 2.000000e+00 : f32
    %516 = vector.broadcast %cst_211 : f32 to vector<8x32xf32>
    %517 = arith.mulf %515, %516 : vector<8x32xf32>
    %cst_212 = arith.constant 1.000000e+00 : f32
    %518 = vector.broadcast %cst_212 : f32 to vector<8x32xf32>
    %519 = arith.subf %517, %518 : vector<8x32xf32>
    %520 = arith.mulf %513, %391 : vector<8x32xf32>
    %521 = arith.mulf %512, %519 : vector<8x32xf32>
    %522 = arith.addf %520, %521 : vector<8x32xf32>
    %523 = math.tanh %522 : vector<8x32xf32>
    %524 = arith.mulf %514, %523 : vector<8x32xf32>
    %525 = arith.negf %452 : vector<8x128xf32>
    %526 = math.exp %525 : vector<8x128xf32>
    %cst_213 = arith.constant 1.000000e+00 : f32
    %527 = vector.broadcast %cst_213 : f32 to vector<8x128xf32>
    %528 = arith.addf %527, %526 : vector<8x128xf32>
    %529 = arith.divf %527, %528 : vector<8x128xf32>
    %530 = vector.extract_strided_slice %529 {offsets = [0, 0], sizes = [8, 32], strides = [1, 1]} : vector<8x128xf32> to vector<8x32xf32>
    %531 = vector.extract_strided_slice %529 {offsets = [0, 32], sizes = [8, 32], strides = [1, 1]} : vector<8x128xf32> to vector<8x32xf32>
    %532 = vector.extract_strided_slice %529 {offsets = [0, 64], sizes = [8, 32], strides = [1, 1]} : vector<8x128xf32> to vector<8x32xf32>
    %533 = vector.extract_strided_slice %529 {offsets = [0, 96], sizes = [8, 32], strides = [1, 1]} : vector<8x128xf32> to vector<8x32xf32>
    %cst_214 = arith.constant 2.000000e+00 : f32
    %534 = vector.broadcast %cst_214 : f32 to vector<8x32xf32>
    %535 = arith.mulf %533, %534 : vector<8x32xf32>
    %cst_215 = arith.constant 1.000000e+00 : f32
    %536 = vector.broadcast %cst_215 : f32 to vector<8x32xf32>
    %537 = arith.subf %535, %536 : vector<8x32xf32>
    %538 = arith.mulf %531, %409 : vector<8x32xf32>
    %539 = arith.mulf %530, %537 : vector<8x32xf32>
    %540 = arith.addf %538, %539 : vector<8x32xf32>
    %541 = math.tanh %540 : vector<8x32xf32>
    %542 = arith.mulf %532, %541 : vector<8x32xf32>
    %c48 = arith.constant 48 : index
    %c0_216 = arith.constant 0 : index
    %543 = vector.load %arg15[%c48, %c0_216] : memref<64x128xf32, #tpu.memory_space<vmem>>, vector<8x128xf32>
    %544 = arith.truncf %470 : vector<8x32xf32> to vector<8x32xbf16>
    %c0_217 = arith.constant 0 : index
    %c0_218 = arith.constant 0 : index
    %545 = vector.load %arg4[%c0_217, %c0_218] : memref<32x128xbf16, #tpu.memory_space<vmem>>, vector<32x128xbf16>
    %cst_219 = arith.constant dense<0.000000e+00> : vector<8x128xf32>
    %546 = tpu.matmul %544, %545, %cst_219 {dimension_numbers = #tpu.dot_dimension_numbers<[1], [0], [0], [1], [0, 0, 1, 1], [], []>} : vector<8x32xbf16>, vector<32x128xbf16>, vector<8x128xf32> -> vector<8x128xf32>
    %547 = arith.addf %543, %546 : vector<8x128xf32>
    %548 = tpu.concatenate %470, %488 in 1 : vector<8x32xf32>, vector<8x32xf32> -> vector<8x64xf32>
    %549 = arith.truncf %548 : vector<8x64xf32> to vector<8x64xbf16>
    %c0_220 = arith.constant 0 : index
    %c0_221 = arith.constant 0 : index
    %c0_222 = arith.constant 0 : index
    %550 = vector.load %arg5[%c0_220, %c0_221, %c0_222] : memref<4x64x128xbf16, #tpu.memory_space<vmem>>, vector<1x64x128xbf16>
    %551 = vector.shape_cast %550 : vector<1x64x128xbf16> to vector<64x128xbf16>
    %cst_223 = arith.constant dense<0.000000e+00> : vector<8x128xf32>
    %552 = tpu.matmul %549, %551, %cst_223 {dimension_numbers = #tpu.dot_dimension_numbers<[1], [0], [0], [1], [0, 0, 1, 1], [], []>} : vector<8x64xbf16>, vector<64x128xbf16>, vector<8x128xf32> -> vector<8x128xf32>
    %c0_224 = arith.constant 0 : index
    %c0_225 = arith.constant 0 : index
    %c0_226 = arith.constant 0 : index
    %553 = vector.load %arg7[%c0_224, %c0_225, %c0_226] : memref<4x1x128xf32, #tpu.memory_space<vmem>>, vector<1x1x128xf32>
    %554 = vector.shape_cast %553 : vector<1x1x128xf32> to vector<1x128xf32>
    %555 = vector.broadcast %554 : vector<1x128xf32> to vector<8x128xf32>
    %556 = arith.addf %552, %555 : vector<8x128xf32>
    %557 = tpu.concatenate %488, %506 in 1 : vector<8x32xf32>, vector<8x32xf32> -> vector<8x64xf32>
    %558 = arith.truncf %557 : vector<8x64xf32> to vector<8x64xbf16>
    %c1_227 = arith.constant 1 : index
    %c0_228 = arith.constant 0 : index
    %c0_229 = arith.constant 0 : index
    %559 = vector.load %arg5[%c1_227, %c0_228, %c0_229] : memref<4x64x128xbf16, #tpu.memory_space<vmem>>, vector<1x64x128xbf16>
    %560 = vector.shape_cast %559 : vector<1x64x128xbf16> to vector<64x128xbf16>
    %cst_230 = arith.constant dense<0.000000e+00> : vector<8x128xf32>
    %561 = tpu.matmul %558, %560, %cst_230 {dimension_numbers = #tpu.dot_dimension_numbers<[1], [0], [0], [1], [0, 0, 1, 1], [], []>} : vector<8x64xbf16>, vector<64x128xbf16>, vector<8x128xf32> -> vector<8x128xf32>
    %c1_231 = arith.constant 1 : index
    %c0_232 = arith.constant 0 : index
    %c0_233 = arith.constant 0 : index
    %562 = vector.load %arg7[%c1_231, %c0_232, %c0_233] : memref<4x1x128xf32, #tpu.memory_space<vmem>>, vector<1x1x128xf32>
    %563 = vector.shape_cast %562 : vector<1x1x128xf32> to vector<1x128xf32>
    %564 = vector.broadcast %563 : vector<1x128xf32> to vector<8x128xf32>
    %565 = arith.addf %561, %564 : vector<8x128xf32>
    %566 = tpu.concatenate %506, %524 in 1 : vector<8x32xf32>, vector<8x32xf32> -> vector<8x64xf32>
    %567 = arith.truncf %566 : vector<8x64xf32> to vector<8x64xbf16>
    %c2_234 = arith.constant 2 : index
    %c0_235 = arith.constant 0 : index
    %c0_236 = arith.constant 0 : index
    %568 = vector.load %arg5[%c2_234, %c0_235, %c0_236] : memref<4x64x128xbf16, #tpu.memory_space<vmem>>, vector<1x64x128xbf16>
    %569 = vector.shape_cast %568 : vector<1x64x128xbf16> to vector<64x128xbf16>
    %cst_237 = arith.constant dense<0.000000e+00> : vector<8x128xf32>
    %570 = tpu.matmul %567, %569, %cst_237 {dimension_numbers = #tpu.dot_dimension_numbers<[1], [0], [0], [1], [0, 0, 1, 1], [], []>} : vector<8x64xbf16>, vector<64x128xbf16>, vector<8x128xf32> -> vector<8x128xf32>
    %c2_238 = arith.constant 2 : index
    %c0_239 = arith.constant 0 : index
    %c0_240 = arith.constant 0 : index
    %571 = vector.load %arg7[%c2_238, %c0_239, %c0_240] : memref<4x1x128xf32, #tpu.memory_space<vmem>>, vector<1x1x128xf32>
    %572 = vector.shape_cast %571 : vector<1x1x128xf32> to vector<1x128xf32>
    %573 = vector.broadcast %572 : vector<1x128xf32> to vector<8x128xf32>
    %574 = arith.addf %570, %573 : vector<8x128xf32>
    %575 = tpu.concatenate %524, %542 in 1 : vector<8x32xf32>, vector<8x32xf32> -> vector<8x64xf32>
    %576 = arith.truncf %575 : vector<8x64xf32> to vector<8x64xbf16>
    %c3_241 = arith.constant 3 : index
    %c0_242 = arith.constant 0 : index
    %c0_243 = arith.constant 0 : index
    %577 = vector.load %arg5[%c3_241, %c0_242, %c0_243] : memref<4x64x128xbf16, #tpu.memory_space<vmem>>, vector<1x64x128xbf16>
    %578 = vector.shape_cast %577 : vector<1x64x128xbf16> to vector<64x128xbf16>
    %cst_244 = arith.constant dense<0.000000e+00> : vector<8x128xf32>
    %579 = tpu.matmul %576, %578, %cst_244 {dimension_numbers = #tpu.dot_dimension_numbers<[1], [0], [0], [1], [0, 0, 1, 1], [], []>} : vector<8x64xbf16>, vector<64x128xbf16>, vector<8x128xf32> -> vector<8x128xf32>
    %c3_245 = arith.constant 3 : index
    %c0_246 = arith.constant 0 : index
    %c0_247 = arith.constant 0 : index
    %580 = vector.load %arg7[%c3_245, %c0_246, %c0_247] : memref<4x1x128xf32, #tpu.memory_space<vmem>>, vector<1x1x128xf32>
    %581 = vector.shape_cast %580 : vector<1x1x128xf32> to vector<1x128xf32>
    %582 = vector.broadcast %581 : vector<1x128xf32> to vector<8x128xf32>
    %583 = arith.addf %579, %582 : vector<8x128xf32>
    %584 = arith.negf %547 : vector<8x128xf32>
    %585 = math.exp %584 : vector<8x128xf32>
    %cst_248 = arith.constant 1.000000e+00 : f32
    %586 = vector.broadcast %cst_248 : f32 to vector<8x128xf32>
    %587 = arith.addf %586, %585 : vector<8x128xf32>
    %588 = arith.divf %586, %587 : vector<8x128xf32>
    %589 = vector.extract_strided_slice %588 {offsets = [0, 0], sizes = [8, 32], strides = [1, 1]} : vector<8x128xf32> to vector<8x32xf32>
    %590 = vector.extract_strided_slice %588 {offsets = [0, 32], sizes = [8, 32], strides = [1, 1]} : vector<8x128xf32> to vector<8x32xf32>
    %591 = vector.extract_strided_slice %588 {offsets = [0, 64], sizes = [8, 32], strides = [1, 1]} : vector<8x128xf32> to vector<8x32xf32>
    %592 = vector.extract_strided_slice %588 {offsets = [0, 96], sizes = [8, 32], strides = [1, 1]} : vector<8x128xf32> to vector<8x32xf32>
    %cst_249 = arith.constant 2.000000e+00 : f32
    %593 = vector.broadcast %cst_249 : f32 to vector<8x32xf32>
    %594 = arith.mulf %592, %593 : vector<8x32xf32>
    %cst_250 = arith.constant 1.000000e+00 : f32
    %595 = vector.broadcast %cst_250 : f32 to vector<8x32xf32>
    %596 = arith.subf %594, %595 : vector<8x32xf32>
    %597 = arith.mulf %590, %468 : vector<8x32xf32>
    %598 = arith.mulf %589, %596 : vector<8x32xf32>
    %599 = arith.addf %597, %598 : vector<8x32xf32>
    %600 = math.tanh %599 : vector<8x32xf32>
    %601 = arith.mulf %591, %600 : vector<8x32xf32>
    %602 = arith.negf %556 : vector<8x128xf32>
    %603 = math.exp %602 : vector<8x128xf32>
    %cst_251 = arith.constant 1.000000e+00 : f32
    %604 = vector.broadcast %cst_251 : f32 to vector<8x128xf32>
    %605 = arith.addf %604, %603 : vector<8x128xf32>
    %606 = arith.divf %604, %605 : vector<8x128xf32>
    %607 = vector.extract_strided_slice %606 {offsets = [0, 0], sizes = [8, 32], strides = [1, 1]} : vector<8x128xf32> to vector<8x32xf32>
    %608 = vector.extract_strided_slice %606 {offsets = [0, 32], sizes = [8, 32], strides = [1, 1]} : vector<8x128xf32> to vector<8x32xf32>
    %609 = vector.extract_strided_slice %606 {offsets = [0, 64], sizes = [8, 32], strides = [1, 1]} : vector<8x128xf32> to vector<8x32xf32>
    %610 = vector.extract_strided_slice %606 {offsets = [0, 96], sizes = [8, 32], strides = [1, 1]} : vector<8x128xf32> to vector<8x32xf32>
    %cst_252 = arith.constant 2.000000e+00 : f32
    %611 = vector.broadcast %cst_252 : f32 to vector<8x32xf32>
    %612 = arith.mulf %610, %611 : vector<8x32xf32>
    %cst_253 = arith.constant 1.000000e+00 : f32
    %613 = vector.broadcast %cst_253 : f32 to vector<8x32xf32>
    %614 = arith.subf %612, %613 : vector<8x32xf32>
    %615 = arith.mulf %608, %486 : vector<8x32xf32>
    %616 = arith.mulf %607, %614 : vector<8x32xf32>
    %617 = arith.addf %615, %616 : vector<8x32xf32>
    %618 = math.tanh %617 : vector<8x32xf32>
    %619 = arith.mulf %609, %618 : vector<8x32xf32>
    %620 = arith.negf %565 : vector<8x128xf32>
    %621 = math.exp %620 : vector<8x128xf32>
    %cst_254 = arith.constant 1.000000e+00 : f32
    %622 = vector.broadcast %cst_254 : f32 to vector<8x128xf32>
    %623 = arith.addf %622, %621 : vector<8x128xf32>
    %624 = arith.divf %622, %623 : vector<8x128xf32>
    %625 = vector.extract_strided_slice %624 {offsets = [0, 0], sizes = [8, 32], strides = [1, 1]} : vector<8x128xf32> to vector<8x32xf32>
    %626 = vector.extract_strided_slice %624 {offsets = [0, 32], sizes = [8, 32], strides = [1, 1]} : vector<8x128xf32> to vector<8x32xf32>
    %627 = vector.extract_strided_slice %624 {offsets = [0, 64], sizes = [8, 32], strides = [1, 1]} : vector<8x128xf32> to vector<8x32xf32>
    %628 = vector.extract_strided_slice %624 {offsets = [0, 96], sizes = [8, 32], strides = [1, 1]} : vector<8x128xf32> to vector<8x32xf32>
    %cst_255 = arith.constant 2.000000e+00 : f32
    %629 = vector.broadcast %cst_255 : f32 to vector<8x32xf32>
    %630 = arith.mulf %628, %629 : vector<8x32xf32>
    %cst_256 = arith.constant 1.000000e+00 : f32
    %631 = vector.broadcast %cst_256 : f32 to vector<8x32xf32>
    %632 = arith.subf %630, %631 : vector<8x32xf32>
    %633 = arith.mulf %626, %504 : vector<8x32xf32>
    %634 = arith.mulf %625, %632 : vector<8x32xf32>
    %635 = arith.addf %633, %634 : vector<8x32xf32>
    %636 = math.tanh %635 : vector<8x32xf32>
    %637 = arith.mulf %627, %636 : vector<8x32xf32>
    %638 = arith.negf %574 : vector<8x128xf32>
    %639 = math.exp %638 : vector<8x128xf32>
    %cst_257 = arith.constant 1.000000e+00 : f32
    %640 = vector.broadcast %cst_257 : f32 to vector<8x128xf32>
    %641 = arith.addf %640, %639 : vector<8x128xf32>
    %642 = arith.divf %640, %641 : vector<8x128xf32>
    %643 = vector.extract_strided_slice %642 {offsets = [0, 0], sizes = [8, 32], strides = [1, 1]} : vector<8x128xf32> to vector<8x32xf32>
    %644 = vector.extract_strided_slice %642 {offsets = [0, 32], sizes = [8, 32], strides = [1, 1]} : vector<8x128xf32> to vector<8x32xf32>
    %645 = vector.extract_strided_slice %642 {offsets = [0, 64], sizes = [8, 32], strides = [1, 1]} : vector<8x128xf32> to vector<8x32xf32>
    %646 = vector.extract_strided_slice %642 {offsets = [0, 96], sizes = [8, 32], strides = [1, 1]} : vector<8x128xf32> to vector<8x32xf32>
    %cst_258 = arith.constant 2.000000e+00 : f32
    %647 = vector.broadcast %cst_258 : f32 to vector<8x32xf32>
    %648 = arith.mulf %646, %647 : vector<8x32xf32>
    %cst_259 = arith.constant 1.000000e+00 : f32
    %649 = vector.broadcast %cst_259 : f32 to vector<8x32xf32>
    %650 = arith.subf %648, %649 : vector<8x32xf32>
    %651 = arith.mulf %644, %522 : vector<8x32xf32>
    %652 = arith.mulf %643, %650 : vector<8x32xf32>
    %653 = arith.addf %651, %652 : vector<8x32xf32>
    %654 = math.tanh %653 : vector<8x32xf32>
    %655 = arith.mulf %645, %654 : vector<8x32xf32>
    %656 = arith.negf %583 : vector<8x128xf32>
    %657 = math.exp %656 : vector<8x128xf32>
    %cst_260 = arith.constant 1.000000e+00 : f32
    %658 = vector.broadcast %cst_260 : f32 to vector<8x128xf32>
    %659 = arith.addf %658, %657 : vector<8x128xf32>
    %660 = arith.divf %658, %659 : vector<8x128xf32>
    %661 = vector.extract_strided_slice %660 {offsets = [0, 0], sizes = [8, 32], strides = [1, 1]} : vector<8x128xf32> to vector<8x32xf32>
    %662 = vector.extract_strided_slice %660 {offsets = [0, 32], sizes = [8, 32], strides = [1, 1]} : vector<8x128xf32> to vector<8x32xf32>
    %663 = vector.extract_strided_slice %660 {offsets = [0, 64], sizes = [8, 32], strides = [1, 1]} : vector<8x128xf32> to vector<8x32xf32>
    %664 = vector.extract_strided_slice %660 {offsets = [0, 96], sizes = [8, 32], strides = [1, 1]} : vector<8x128xf32> to vector<8x32xf32>
    %cst_261 = arith.constant 2.000000e+00 : f32
    %665 = vector.broadcast %cst_261 : f32 to vector<8x32xf32>
    %666 = arith.mulf %664, %665 : vector<8x32xf32>
    %cst_262 = arith.constant 1.000000e+00 : f32
    %667 = vector.broadcast %cst_262 : f32 to vector<8x32xf32>
    %668 = arith.subf %666, %667 : vector<8x32xf32>
    %669 = arith.mulf %662, %540 : vector<8x32xf32>
    %670 = arith.mulf %661, %668 : vector<8x32xf32>
    %671 = arith.addf %669, %670 : vector<8x32xf32>
    %672 = math.tanh %671 : vector<8x32xf32>
    %673 = arith.mulf %663, %672 : vector<8x32xf32>
    %c56 = arith.constant 56 : index
    %c0_263 = arith.constant 0 : index
    %674 = vector.load %arg15[%c56, %c0_263] : memref<64x128xf32, #tpu.memory_space<vmem>>, vector<8x128xf32>
    %675 = arith.truncf %601 : vector<8x32xf32> to vector<8x32xbf16>
    %c0_264 = arith.constant 0 : index
    %c0_265 = arith.constant 0 : index
    %676 = vector.load %arg4[%c0_264, %c0_265] : memref<32x128xbf16, #tpu.memory_space<vmem>>, vector<32x128xbf16>
    %cst_266 = arith.constant dense<0.000000e+00> : vector<8x128xf32>
    %677 = tpu.matmul %675, %676, %cst_266 {dimension_numbers = #tpu.dot_dimension_numbers<[1], [0], [0], [1], [0, 0, 1, 1], [], []>} : vector<8x32xbf16>, vector<32x128xbf16>, vector<8x128xf32> -> vector<8x128xf32>
    %678 = arith.addf %674, %677 : vector<8x128xf32>
    %679 = tpu.concatenate %601, %619 in 1 : vector<8x32xf32>, vector<8x32xf32> -> vector<8x64xf32>
    %680 = arith.truncf %679 : vector<8x64xf32> to vector<8x64xbf16>
    %c0_267 = arith.constant 0 : index
    %c0_268 = arith.constant 0 : index
    %c0_269 = arith.constant 0 : index
    %681 = vector.load %arg5[%c0_267, %c0_268, %c0_269] : memref<4x64x128xbf16, #tpu.memory_space<vmem>>, vector<1x64x128xbf16>
    %682 = vector.shape_cast %681 : vector<1x64x128xbf16> to vector<64x128xbf16>
    %cst_270 = arith.constant dense<0.000000e+00> : vector<8x128xf32>
    %683 = tpu.matmul %680, %682, %cst_270 {dimension_numbers = #tpu.dot_dimension_numbers<[1], [0], [0], [1], [0, 0, 1, 1], [], []>} : vector<8x64xbf16>, vector<64x128xbf16>, vector<8x128xf32> -> vector<8x128xf32>
    %c0_271 = arith.constant 0 : index
    %c0_272 = arith.constant 0 : index
    %c0_273 = arith.constant 0 : index
    %684 = vector.load %arg7[%c0_271, %c0_272, %c0_273] : memref<4x1x128xf32, #tpu.memory_space<vmem>>, vector<1x1x128xf32>
    %685 = vector.shape_cast %684 : vector<1x1x128xf32> to vector<1x128xf32>
    %686 = vector.broadcast %685 : vector<1x128xf32> to vector<8x128xf32>
    %687 = arith.addf %683, %686 : vector<8x128xf32>
    %688 = tpu.concatenate %619, %637 in 1 : vector<8x32xf32>, vector<8x32xf32> -> vector<8x64xf32>
    %689 = arith.truncf %688 : vector<8x64xf32> to vector<8x64xbf16>
    %c1_274 = arith.constant 1 : index
    %c0_275 = arith.constant 0 : index
    %c0_276 = arith.constant 0 : index
    %690 = vector.load %arg5[%c1_274, %c0_275, %c0_276] : memref<4x64x128xbf16, #tpu.memory_space<vmem>>, vector<1x64x128xbf16>
    %691 = vector.shape_cast %690 : vector<1x64x128xbf16> to vector<64x128xbf16>
    %cst_277 = arith.constant dense<0.000000e+00> : vector<8x128xf32>
    %692 = tpu.matmul %689, %691, %cst_277 {dimension_numbers = #tpu.dot_dimension_numbers<[1], [0], [0], [1], [0, 0, 1, 1], [], []>} : vector<8x64xbf16>, vector<64x128xbf16>, vector<8x128xf32> -> vector<8x128xf32>
    %c1_278 = arith.constant 1 : index
    %c0_279 = arith.constant 0 : index
    %c0_280 = arith.constant 0 : index
    %693 = vector.load %arg7[%c1_278, %c0_279, %c0_280] : memref<4x1x128xf32, #tpu.memory_space<vmem>>, vector<1x1x128xf32>
    %694 = vector.shape_cast %693 : vector<1x1x128xf32> to vector<1x128xf32>
    %695 = vector.broadcast %694 : vector<1x128xf32> to vector<8x128xf32>
    %696 = arith.addf %692, %695 : vector<8x128xf32>
    %697 = tpu.concatenate %637, %655 in 1 : vector<8x32xf32>, vector<8x32xf32> -> vector<8x64xf32>
    %698 = arith.truncf %697 : vector<8x64xf32> to vector<8x64xbf16>
    %c2_281 = arith.constant 2 : index
    %c0_282 = arith.constant 0 : index
    %c0_283 = arith.constant 0 : index
    %699 = vector.load %arg5[%c2_281, %c0_282, %c0_283] : memref<4x64x128xbf16, #tpu.memory_space<vmem>>, vector<1x64x128xbf16>
    %700 = vector.shape_cast %699 : vector<1x64x128xbf16> to vector<64x128xbf16>
    %cst_284 = arith.constant dense<0.000000e+00> : vector<8x128xf32>
    %701 = tpu.matmul %698, %700, %cst_284 {dimension_numbers = #tpu.dot_dimension_numbers<[1], [0], [0], [1], [0, 0, 1, 1], [], []>} : vector<8x64xbf16>, vector<64x128xbf16>, vector<8x128xf32> -> vector<8x128xf32>
    %c2_285 = arith.constant 2 : index
    %c0_286 = arith.constant 0 : index
    %c0_287 = arith.constant 0 : index
    %702 = vector.load %arg7[%c2_285, %c0_286, %c0_287] : memref<4x1x128xf32, #tpu.memory_space<vmem>>, vector<1x1x128xf32>
    %703 = vector.shape_cast %702 : vector<1x1x128xf32> to vector<1x128xf32>
    %704 = vector.broadcast %703 : vector<1x128xf32> to vector<8x128xf32>
    %705 = arith.addf %701, %704 : vector<8x128xf32>
    %706 = tpu.concatenate %655, %673 in 1 : vector<8x32xf32>, vector<8x32xf32> -> vector<8x64xf32>
    %707 = arith.truncf %706 : vector<8x64xf32> to vector<8x64xbf16>
    %c3_288 = arith.constant 3 : index
    %c0_289 = arith.constant 0 : index
    %c0_290 = arith.constant 0 : index
    %708 = vector.load %arg5[%c3_288, %c0_289, %c0_290] : memref<4x64x128xbf16, #tpu.memory_space<vmem>>, vector<1x64x128xbf16>
    %709 = vector.shape_cast %708 : vector<1x64x128xbf16> to vector<64x128xbf16>
    %cst_291 = arith.constant dense<0.000000e+00> : vector<8x128xf32>
    %710 = tpu.matmul %707, %709, %cst_291 {dimension_numbers = #tpu.dot_dimension_numbers<[1], [0], [0], [1], [0, 0, 1, 1], [], []>} : vector<8x64xbf16>, vector<64x128xbf16>, vector<8x128xf32> -> vector<8x128xf32>
    %c3_292 = arith.constant 3 : index
    %c0_293 = arith.constant 0 : index
    %c0_294 = arith.constant 0 : index
    %711 = vector.load %arg7[%c3_292, %c0_293, %c0_294] : memref<4x1x128xf32, #tpu.memory_space<vmem>>, vector<1x1x128xf32>
    %712 = vector.shape_cast %711 : vector<1x1x128xf32> to vector<1x128xf32>
    %713 = vector.broadcast %712 : vector<1x128xf32> to vector<8x128xf32>
    %714 = arith.addf %710, %713 : vector<8x128xf32>
    %715 = arith.negf %678 : vector<8x128xf32>
    %716 = math.exp %715 : vector<8x128xf32>
    %cst_295 = arith.constant 1.000000e+00 : f32
    %717 = vector.broadcast %cst_295 : f32 to vector<8x128xf32>
    %718 = arith.addf %717, %716 : vector<8x128xf32>
    %719 = arith.divf %717, %718 : vector<8x128xf32>
    %720 = vector.extract_strided_slice %719 {offsets = [0, 0], sizes = [8, 32], strides = [1, 1]} : vector<8x128xf32> to vector<8x32xf32>
    %721 = vector.extract_strided_slice %719 {offsets = [0, 32], sizes = [8, 32], strides = [1, 1]} : vector<8x128xf32> to vector<8x32xf32>
    %722 = vector.extract_strided_slice %719 {offsets = [0, 64], sizes = [8, 32], strides = [1, 1]} : vector<8x128xf32> to vector<8x32xf32>
    %723 = vector.extract_strided_slice %719 {offsets = [0, 96], sizes = [8, 32], strides = [1, 1]} : vector<8x128xf32> to vector<8x32xf32>
    %cst_296 = arith.constant 2.000000e+00 : f32
    %724 = vector.broadcast %cst_296 : f32 to vector<8x32xf32>
    %725 = arith.mulf %723, %724 : vector<8x32xf32>
    %cst_297 = arith.constant 1.000000e+00 : f32
    %726 = vector.broadcast %cst_297 : f32 to vector<8x32xf32>
    %727 = arith.subf %725, %726 : vector<8x32xf32>
    %728 = arith.mulf %721, %599 : vector<8x32xf32>
    %729 = arith.mulf %720, %727 : vector<8x32xf32>
    %730 = arith.addf %728, %729 : vector<8x32xf32>
    %731 = math.tanh %730 : vector<8x32xf32>
    %732 = arith.mulf %722, %731 : vector<8x32xf32>
    %733 = arith.negf %687 : vector<8x128xf32>
    %734 = math.exp %733 : vector<8x128xf32>
    %cst_298 = arith.constant 1.000000e+00 : f32
    %735 = vector.broadcast %cst_298 : f32 to vector<8x128xf32>
    %736 = arith.addf %735, %734 : vector<8x128xf32>
    %737 = arith.divf %735, %736 : vector<8x128xf32>
    %738 = vector.extract_strided_slice %737 {offsets = [0, 0], sizes = [8, 32], strides = [1, 1]} : vector<8x128xf32> to vector<8x32xf32>
    %739 = vector.extract_strided_slice %737 {offsets = [0, 32], sizes = [8, 32], strides = [1, 1]} : vector<8x128xf32> to vector<8x32xf32>
    %740 = vector.extract_strided_slice %737 {offsets = [0, 64], sizes = [8, 32], strides = [1, 1]} : vector<8x128xf32> to vector<8x32xf32>
    %741 = vector.extract_strided_slice %737 {offsets = [0, 96], sizes = [8, 32], strides = [1, 1]} : vector<8x128xf32> to vector<8x32xf32>
    %cst_299 = arith.constant 2.000000e+00 : f32
    %742 = vector.broadcast %cst_299 : f32 to vector<8x32xf32>
    %743 = arith.mulf %741, %742 : vector<8x32xf32>
    %cst_300 = arith.constant 1.000000e+00 : f32
    %744 = vector.broadcast %cst_300 : f32 to vector<8x32xf32>
    %745 = arith.subf %743, %744 : vector<8x32xf32>
    %746 = arith.mulf %739, %617 : vector<8x32xf32>
    %747 = arith.mulf %738, %745 : vector<8x32xf32>
    %748 = arith.addf %746, %747 : vector<8x32xf32>
    %749 = math.tanh %748 : vector<8x32xf32>
    %750 = arith.mulf %740, %749 : vector<8x32xf32>
    %751 = arith.negf %696 : vector<8x128xf32>
    %752 = math.exp %751 : vector<8x128xf32>
    %cst_301 = arith.constant 1.000000e+00 : f32
    %753 = vector.broadcast %cst_301 : f32 to vector<8x128xf32>
    %754 = arith.addf %753, %752 : vector<8x128xf32>
    %755 = arith.divf %753, %754 : vector<8x128xf32>
    %756 = vector.extract_strided_slice %755 {offsets = [0, 0], sizes = [8, 32], strides = [1, 1]} : vector<8x128xf32> to vector<8x32xf32>
    %757 = vector.extract_strided_slice %755 {offsets = [0, 32], sizes = [8, 32], strides = [1, 1]} : vector<8x128xf32> to vector<8x32xf32>
    %758 = vector.extract_strided_slice %755 {offsets = [0, 64], sizes = [8, 32], strides = [1, 1]} : vector<8x128xf32> to vector<8x32xf32>
    %759 = vector.extract_strided_slice %755 {offsets = [0, 96], sizes = [8, 32], strides = [1, 1]} : vector<8x128xf32> to vector<8x32xf32>
    %cst_302 = arith.constant 2.000000e+00 : f32
    %760 = vector.broadcast %cst_302 : f32 to vector<8x32xf32>
    %761 = arith.mulf %759, %760 : vector<8x32xf32>
    %cst_303 = arith.constant 1.000000e+00 : f32
    %762 = vector.broadcast %cst_303 : f32 to vector<8x32xf32>
    %763 = arith.subf %761, %762 : vector<8x32xf32>
    %764 = arith.mulf %757, %635 : vector<8x32xf32>
    %765 = arith.mulf %756, %763 : vector<8x32xf32>
    %766 = arith.addf %764, %765 : vector<8x32xf32>
    %767 = math.tanh %766 : vector<8x32xf32>
    %768 = arith.mulf %758, %767 : vector<8x32xf32>
    %769 = arith.negf %705 : vector<8x128xf32>
    %770 = math.exp %769 : vector<8x128xf32>
    %cst_304 = arith.constant 1.000000e+00 : f32
    %771 = vector.broadcast %cst_304 : f32 to vector<8x128xf32>
    %772 = arith.addf %771, %770 : vector<8x128xf32>
    %773 = arith.divf %771, %772 : vector<8x128xf32>
    %774 = vector.extract_strided_slice %773 {offsets = [0, 0], sizes = [8, 32], strides = [1, 1]} : vector<8x128xf32> to vector<8x32xf32>
    %775 = vector.extract_strided_slice %773 {offsets = [0, 32], sizes = [8, 32], strides = [1, 1]} : vector<8x128xf32> to vector<8x32xf32>
    %776 = vector.extract_strided_slice %773 {offsets = [0, 64], sizes = [8, 32], strides = [1, 1]} : vector<8x128xf32> to vector<8x32xf32>
    %777 = vector.extract_strided_slice %773 {offsets = [0, 96], sizes = [8, 32], strides = [1, 1]} : vector<8x128xf32> to vector<8x32xf32>
    %cst_305 = arith.constant 2.000000e+00 : f32
    %778 = vector.broadcast %cst_305 : f32 to vector<8x32xf32>
    %779 = arith.mulf %777, %778 : vector<8x32xf32>
    %cst_306 = arith.constant 1.000000e+00 : f32
    %780 = vector.broadcast %cst_306 : f32 to vector<8x32xf32>
    %781 = arith.subf %779, %780 : vector<8x32xf32>
    %782 = arith.mulf %775, %653 : vector<8x32xf32>
    %783 = arith.mulf %774, %781 : vector<8x32xf32>
    %784 = arith.addf %782, %783 : vector<8x32xf32>
    %785 = math.tanh %784 : vector<8x32xf32>
    %786 = arith.mulf %776, %785 : vector<8x32xf32>
    %787 = arith.negf %714 : vector<8x128xf32>
    %788 = math.exp %787 : vector<8x128xf32>
    %cst_307 = arith.constant 1.000000e+00 : f32
    %789 = vector.broadcast %cst_307 : f32 to vector<8x128xf32>
    %790 = arith.addf %789, %788 : vector<8x128xf32>
    %791 = arith.divf %789, %790 : vector<8x128xf32>
    %792 = vector.extract_strided_slice %791 {offsets = [0, 0], sizes = [8, 32], strides = [1, 1]} : vector<8x128xf32> to vector<8x32xf32>
    %793 = vector.extract_strided_slice %791 {offsets = [0, 32], sizes = [8, 32], strides = [1, 1]} : vector<8x128xf32> to vector<8x32xf32>
    %794 = vector.extract_strided_slice %791 {offsets = [0, 64], sizes = [8, 32], strides = [1, 1]} : vector<8x128xf32> to vector<8x32xf32>
    %795 = vector.extract_strided_slice %791 {offsets = [0, 96], sizes = [8, 32], strides = [1, 1]} : vector<8x128xf32> to vector<8x32xf32>
    %cst_308 = arith.constant 2.000000e+00 : f32
    %796 = vector.broadcast %cst_308 : f32 to vector<8x32xf32>
    %797 = arith.mulf %795, %796 : vector<8x32xf32>
    %cst_309 = arith.constant 1.000000e+00 : f32
    %798 = vector.broadcast %cst_309 : f32 to vector<8x32xf32>
    %799 = arith.subf %797, %798 : vector<8x32xf32>
    %800 = arith.mulf %793, %671 : vector<8x32xf32>
    %801 = arith.mulf %792, %799 : vector<8x32xf32>
    %802 = arith.addf %800, %801 : vector<8x32xf32>
    %803 = math.tanh %802 : vector<8x32xf32>
    %804 = arith.mulf %794, %803 : vector<8x32xf32>
    %805 = tpu.concatenate %732, %750 in 1 : vector<8x32xf32>, vector<8x32xf32> -> vector<8x64xf32>
    %806 = arith.truncf %805 : vector<8x64xf32> to vector<8x64xbf16>
    %c0_310 = arith.constant 0 : index
    %c0_311 = arith.constant 0 : index
    %c0_312 = arith.constant 0 : index
    %807 = vector.load %arg5[%c0_310, %c0_311, %c0_312] : memref<4x64x128xbf16, #tpu.memory_space<vmem>>, vector<1x64x128xbf16>
    %808 = vector.shape_cast %807 : vector<1x64x128xbf16> to vector<64x128xbf16>
    %cst_313 = arith.constant dense<0.000000e+00> : vector<8x128xf32>
    %809 = tpu.matmul %806, %808, %cst_313 {dimension_numbers = #tpu.dot_dimension_numbers<[1], [0], [0], [1], [0, 0, 1, 1], [], []>} : vector<8x64xbf16>, vector<64x128xbf16>, vector<8x128xf32> -> vector<8x128xf32>
    %c0_314 = arith.constant 0 : index
    %c0_315 = arith.constant 0 : index
    %c0_316 = arith.constant 0 : index
    %810 = vector.load %arg7[%c0_314, %c0_315, %c0_316] : memref<4x1x128xf32, #tpu.memory_space<vmem>>, vector<1x1x128xf32>
    %811 = vector.shape_cast %810 : vector<1x1x128xf32> to vector<1x128xf32>
    %812 = vector.broadcast %811 : vector<1x128xf32> to vector<8x128xf32>
    %813 = arith.addf %809, %812 : vector<8x128xf32>
    %814 = tpu.concatenate %750, %768 in 1 : vector<8x32xf32>, vector<8x32xf32> -> vector<8x64xf32>
    %815 = arith.truncf %814 : vector<8x64xf32> to vector<8x64xbf16>
    %c1_317 = arith.constant 1 : index
    %c0_318 = arith.constant 0 : index
    %c0_319 = arith.constant 0 : index
    %816 = vector.load %arg5[%c1_317, %c0_318, %c0_319] : memref<4x64x128xbf16, #tpu.memory_space<vmem>>, vector<1x64x128xbf16>
    %817 = vector.shape_cast %816 : vector<1x64x128xbf16> to vector<64x128xbf16>
    %cst_320 = arith.constant dense<0.000000e+00> : vector<8x128xf32>
    %818 = tpu.matmul %815, %817, %cst_320 {dimension_numbers = #tpu.dot_dimension_numbers<[1], [0], [0], [1], [0, 0, 1, 1], [], []>} : vector<8x64xbf16>, vector<64x128xbf16>, vector<8x128xf32> -> vector<8x128xf32>
    %c1_321 = arith.constant 1 : index
    %c0_322 = arith.constant 0 : index
    %c0_323 = arith.constant 0 : index
    %819 = vector.load %arg7[%c1_321, %c0_322, %c0_323] : memref<4x1x128xf32, #tpu.memory_space<vmem>>, vector<1x1x128xf32>
    %820 = vector.shape_cast %819 : vector<1x1x128xf32> to vector<1x128xf32>
    %821 = vector.broadcast %820 : vector<1x128xf32> to vector<8x128xf32>
    %822 = arith.addf %818, %821 : vector<8x128xf32>
    %823 = tpu.concatenate %768, %786 in 1 : vector<8x32xf32>, vector<8x32xf32> -> vector<8x64xf32>
    %824 = arith.truncf %823 : vector<8x64xf32> to vector<8x64xbf16>
    %c2_324 = arith.constant 2 : index
    %c0_325 = arith.constant 0 : index
    %c0_326 = arith.constant 0 : index
    %825 = vector.load %arg5[%c2_324, %c0_325, %c0_326] : memref<4x64x128xbf16, #tpu.memory_space<vmem>>, vector<1x64x128xbf16>
    %826 = vector.shape_cast %825 : vector<1x64x128xbf16> to vector<64x128xbf16>
    %cst_327 = arith.constant dense<0.000000e+00> : vector<8x128xf32>
    %827 = tpu.matmul %824, %826, %cst_327 {dimension_numbers = #tpu.dot_dimension_numbers<[1], [0], [0], [1], [0, 0, 1, 1], [], []>} : vector<8x64xbf16>, vector<64x128xbf16>, vector<8x128xf32> -> vector<8x128xf32>
    %c2_328 = arith.constant 2 : index
    %c0_329 = arith.constant 0 : index
    %c0_330 = arith.constant 0 : index
    %828 = vector.load %arg7[%c2_328, %c0_329, %c0_330] : memref<4x1x128xf32, #tpu.memory_space<vmem>>, vector<1x1x128xf32>
    %829 = vector.shape_cast %828 : vector<1x1x128xf32> to vector<1x128xf32>
    %830 = vector.broadcast %829 : vector<1x128xf32> to vector<8x128xf32>
    %831 = arith.addf %827, %830 : vector<8x128xf32>
    %832 = tpu.concatenate %786, %804 in 1 : vector<8x32xf32>, vector<8x32xf32> -> vector<8x64xf32>
    %833 = arith.truncf %832 : vector<8x64xf32> to vector<8x64xbf16>
    %c3_331 = arith.constant 3 : index
    %c0_332 = arith.constant 0 : index
    %c0_333 = arith.constant 0 : index
    %834 = vector.load %arg5[%c3_331, %c0_332, %c0_333] : memref<4x64x128xbf16, #tpu.memory_space<vmem>>, vector<1x64x128xbf16>
    %835 = vector.shape_cast %834 : vector<1x64x128xbf16> to vector<64x128xbf16>
    %cst_334 = arith.constant dense<0.000000e+00> : vector<8x128xf32>
    %836 = tpu.matmul %833, %835, %cst_334 {dimension_numbers = #tpu.dot_dimension_numbers<[1], [0], [0], [1], [0, 0, 1, 1], [], []>} : vector<8x64xbf16>, vector<64x128xbf16>, vector<8x128xf32> -> vector<8x128xf32>
    %c3_335 = arith.constant 3 : index
    %c0_336 = arith.constant 0 : index
    %c0_337 = arith.constant 0 : index
    %837 = vector.load %arg7[%c3_335, %c0_336, %c0_337] : memref<4x1x128xf32, #tpu.memory_space<vmem>>, vector<1x1x128xf32>
    %838 = vector.shape_cast %837 : vector<1x1x128xf32> to vector<1x128xf32>
    %839 = vector.broadcast %838 : vector<1x128xf32> to vector<8x128xf32>
    %840 = arith.addf %836, %839 : vector<8x128xf32>
    %841 = arith.negf %813 : vector<8x128xf32>
    %842 = math.exp %841 : vector<8x128xf32>
    %cst_338 = arith.constant 1.000000e+00 : f32
    %843 = vector.broadcast %cst_338 : f32 to vector<8x128xf32>
    %844 = arith.addf %843, %842 : vector<8x128xf32>
    %845 = arith.divf %843, %844 : vector<8x128xf32>
    %846 = vector.extract_strided_slice %845 {offsets = [0, 0], sizes = [8, 32], strides = [1, 1]} : vector<8x128xf32> to vector<8x32xf32>
    %847 = vector.extract_strided_slice %845 {offsets = [0, 32], sizes = [8, 32], strides = [1, 1]} : vector<8x128xf32> to vector<8x32xf32>
    %848 = vector.extract_strided_slice %845 {offsets = [0, 64], sizes = [8, 32], strides = [1, 1]} : vector<8x128xf32> to vector<8x32xf32>
    %849 = vector.extract_strided_slice %845 {offsets = [0, 96], sizes = [8, 32], strides = [1, 1]} : vector<8x128xf32> to vector<8x32xf32>
    %cst_339 = arith.constant 2.000000e+00 : f32
    %850 = vector.broadcast %cst_339 : f32 to vector<8x32xf32>
    %851 = arith.mulf %849, %850 : vector<8x32xf32>
    %cst_340 = arith.constant 1.000000e+00 : f32
    %852 = vector.broadcast %cst_340 : f32 to vector<8x32xf32>
    %853 = arith.subf %851, %852 : vector<8x32xf32>
    %854 = arith.mulf %847, %748 : vector<8x32xf32>
    %855 = arith.mulf %846, %853 : vector<8x32xf32>
    %856 = arith.addf %854, %855 : vector<8x32xf32>
    %857 = math.tanh %856 : vector<8x32xf32>
    %858 = arith.mulf %848, %857 : vector<8x32xf32>
    %859 = arith.negf %822 : vector<8x128xf32>
    %860 = math.exp %859 : vector<8x128xf32>
    %cst_341 = arith.constant 1.000000e+00 : f32
    %861 = vector.broadcast %cst_341 : f32 to vector<8x128xf32>
    %862 = arith.addf %861, %860 : vector<8x128xf32>
    %863 = arith.divf %861, %862 : vector<8x128xf32>
    %864 = vector.extract_strided_slice %863 {offsets = [0, 0], sizes = [8, 32], strides = [1, 1]} : vector<8x128xf32> to vector<8x32xf32>
    %865 = vector.extract_strided_slice %863 {offsets = [0, 32], sizes = [8, 32], strides = [1, 1]} : vector<8x128xf32> to vector<8x32xf32>
    %866 = vector.extract_strided_slice %863 {offsets = [0, 64], sizes = [8, 32], strides = [1, 1]} : vector<8x128xf32> to vector<8x32xf32>
    %867 = vector.extract_strided_slice %863 {offsets = [0, 96], sizes = [8, 32], strides = [1, 1]} : vector<8x128xf32> to vector<8x32xf32>
    %cst_342 = arith.constant 2.000000e+00 : f32
    %868 = vector.broadcast %cst_342 : f32 to vector<8x32xf32>
    %869 = arith.mulf %867, %868 : vector<8x32xf32>
    %cst_343 = arith.constant 1.000000e+00 : f32
    %870 = vector.broadcast %cst_343 : f32 to vector<8x32xf32>
    %871 = arith.subf %869, %870 : vector<8x32xf32>
    %872 = arith.mulf %865, %766 : vector<8x32xf32>
    %873 = arith.mulf %864, %871 : vector<8x32xf32>
    %874 = arith.addf %872, %873 : vector<8x32xf32>
    %875 = math.tanh %874 : vector<8x32xf32>
    %876 = arith.mulf %866, %875 : vector<8x32xf32>
    %877 = arith.negf %831 : vector<8x128xf32>
    %878 = math.exp %877 : vector<8x128xf32>
    %cst_344 = arith.constant 1.000000e+00 : f32
    %879 = vector.broadcast %cst_344 : f32 to vector<8x128xf32>
    %880 = arith.addf %879, %878 : vector<8x128xf32>
    %881 = arith.divf %879, %880 : vector<8x128xf32>
    %882 = vector.extract_strided_slice %881 {offsets = [0, 0], sizes = [8, 32], strides = [1, 1]} : vector<8x128xf32> to vector<8x32xf32>
    %883 = vector.extract_strided_slice %881 {offsets = [0, 32], sizes = [8, 32], strides = [1, 1]} : vector<8x128xf32> to vector<8x32xf32>
    %884 = vector.extract_strided_slice %881 {offsets = [0, 64], sizes = [8, 32], strides = [1, 1]} : vector<8x128xf32> to vector<8x32xf32>
    %885 = vector.extract_strided_slice %881 {offsets = [0, 96], sizes = [8, 32], strides = [1, 1]} : vector<8x128xf32> to vector<8x32xf32>
    %cst_345 = arith.constant 2.000000e+00 : f32
    %886 = vector.broadcast %cst_345 : f32 to vector<8x32xf32>
    %887 = arith.mulf %885, %886 : vector<8x32xf32>
    %cst_346 = arith.constant 1.000000e+00 : f32
    %888 = vector.broadcast %cst_346 : f32 to vector<8x32xf32>
    %889 = arith.subf %887, %888 : vector<8x32xf32>
    %890 = arith.mulf %883, %784 : vector<8x32xf32>
    %891 = arith.mulf %882, %889 : vector<8x32xf32>
    %892 = arith.addf %890, %891 : vector<8x32xf32>
    %893 = math.tanh %892 : vector<8x32xf32>
    %894 = arith.mulf %884, %893 : vector<8x32xf32>
    %895 = arith.negf %840 : vector<8x128xf32>
    %896 = math.exp %895 : vector<8x128xf32>
    %cst_347 = arith.constant 1.000000e+00 : f32
    %897 = vector.broadcast %cst_347 : f32 to vector<8x128xf32>
    %898 = arith.addf %897, %896 : vector<8x128xf32>
    %899 = arith.divf %897, %898 : vector<8x128xf32>
    %900 = vector.extract_strided_slice %899 {offsets = [0, 0], sizes = [8, 32], strides = [1, 1]} : vector<8x128xf32> to vector<8x32xf32>
    %901 = vector.extract_strided_slice %899 {offsets = [0, 32], sizes = [8, 32], strides = [1, 1]} : vector<8x128xf32> to vector<8x32xf32>
    %902 = vector.extract_strided_slice %899 {offsets = [0, 64], sizes = [8, 32], strides = [1, 1]} : vector<8x128xf32> to vector<8x32xf32>
    %903 = vector.extract_strided_slice %899 {offsets = [0, 96], sizes = [8, 32], strides = [1, 1]} : vector<8x128xf32> to vector<8x32xf32>
    %cst_348 = arith.constant 2.000000e+00 : f32
    %904 = vector.broadcast %cst_348 : f32 to vector<8x32xf32>
    %905 = arith.mulf %903, %904 : vector<8x32xf32>
    %cst_349 = arith.constant 1.000000e+00 : f32
    %906 = vector.broadcast %cst_349 : f32 to vector<8x32xf32>
    %907 = arith.subf %905, %906 : vector<8x32xf32>
    %908 = arith.mulf %901, %802 : vector<8x32xf32>
    %909 = arith.mulf %900, %907 : vector<8x32xf32>
    %910 = arith.addf %908, %909 : vector<8x32xf32>
    %911 = math.tanh %910 : vector<8x32xf32>
    %912 = arith.mulf %902, %911 : vector<8x32xf32>
    %913 = tpu.concatenate %858, %876 in 1 : vector<8x32xf32>, vector<8x32xf32> -> vector<8x64xf32>
    %914 = arith.truncf %913 : vector<8x64xf32> to vector<8x64xbf16>
    %c1_350 = arith.constant 1 : index
    %c0_351 = arith.constant 0 : index
    %c0_352 = arith.constant 0 : index
    %915 = vector.load %arg5[%c1_350, %c0_351, %c0_352] : memref<4x64x128xbf16, #tpu.memory_space<vmem>>, vector<1x64x128xbf16>
    %916 = vector.shape_cast %915 : vector<1x64x128xbf16> to vector<64x128xbf16>
    %cst_353 = arith.constant dense<0.000000e+00> : vector<8x128xf32>
    %917 = tpu.matmul %914, %916, %cst_353 {dimension_numbers = #tpu.dot_dimension_numbers<[1], [0], [0], [1], [0, 0, 1, 1], [], []>} : vector<8x64xbf16>, vector<64x128xbf16>, vector<8x128xf32> -> vector<8x128xf32>
    %c1_354 = arith.constant 1 : index
    %c0_355 = arith.constant 0 : index
    %c0_356 = arith.constant 0 : index
    %918 = vector.load %arg7[%c1_354, %c0_355, %c0_356] : memref<4x1x128xf32, #tpu.memory_space<vmem>>, vector<1x1x128xf32>
    %919 = vector.shape_cast %918 : vector<1x1x128xf32> to vector<1x128xf32>
    %920 = vector.broadcast %919 : vector<1x128xf32> to vector<8x128xf32>
    %921 = arith.addf %917, %920 : vector<8x128xf32>
    %922 = tpu.concatenate %876, %894 in 1 : vector<8x32xf32>, vector<8x32xf32> -> vector<8x64xf32>
    %923 = arith.truncf %922 : vector<8x64xf32> to vector<8x64xbf16>
    %c2_357 = arith.constant 2 : index
    %c0_358 = arith.constant 0 : index
    %c0_359 = arith.constant 0 : index
    %924 = vector.load %arg5[%c2_357, %c0_358, %c0_359] : memref<4x64x128xbf16, #tpu.memory_space<vmem>>, vector<1x64x128xbf16>
    %925 = vector.shape_cast %924 : vector<1x64x128xbf16> to vector<64x128xbf16>
    %cst_360 = arith.constant dense<0.000000e+00> : vector<8x128xf32>
    %926 = tpu.matmul %923, %925, %cst_360 {dimension_numbers = #tpu.dot_dimension_numbers<[1], [0], [0], [1], [0, 0, 1, 1], [], []>} : vector<8x64xbf16>, vector<64x128xbf16>, vector<8x128xf32> -> vector<8x128xf32>
    %c2_361 = arith.constant 2 : index
    %c0_362 = arith.constant 0 : index
    %c0_363 = arith.constant 0 : index
    %927 = vector.load %arg7[%c2_361, %c0_362, %c0_363] : memref<4x1x128xf32, #tpu.memory_space<vmem>>, vector<1x1x128xf32>
    %928 = vector.shape_cast %927 : vector<1x1x128xf32> to vector<1x128xf32>
    %929 = vector.broadcast %928 : vector<1x128xf32> to vector<8x128xf32>
    %930 = arith.addf %926, %929 : vector<8x128xf32>
    %931 = tpu.concatenate %894, %912 in 1 : vector<8x32xf32>, vector<8x32xf32> -> vector<8x64xf32>
    %932 = arith.truncf %931 : vector<8x64xf32> to vector<8x64xbf16>
    %c3_364 = arith.constant 3 : index
    %c0_365 = arith.constant 0 : index
    %c0_366 = arith.constant 0 : index
    %933 = vector.load %arg5[%c3_364, %c0_365, %c0_366] : memref<4x64x128xbf16, #tpu.memory_space<vmem>>, vector<1x64x128xbf16>
    %934 = vector.shape_cast %933 : vector<1x64x128xbf16> to vector<64x128xbf16>
    %cst_367 = arith.constant dense<0.000000e+00> : vector<8x128xf32>
    %935 = tpu.matmul %932, %934, %cst_367 {dimension_numbers = #tpu.dot_dimension_numbers<[1], [0], [0], [1], [0, 0, 1, 1], [], []>} : vector<8x64xbf16>, vector<64x128xbf16>, vector<8x128xf32> -> vector<8x128xf32>
    %c3_368 = arith.constant 3 : index
    %c0_369 = arith.constant 0 : index
    %c0_370 = arith.constant 0 : index
    %936 = vector.load %arg7[%c3_368, %c0_369, %c0_370] : memref<4x1x128xf32, #tpu.memory_space<vmem>>, vector<1x1x128xf32>
    %937 = vector.shape_cast %936 : vector<1x1x128xf32> to vector<1x128xf32>
    %938 = vector.broadcast %937 : vector<1x128xf32> to vector<8x128xf32>
    %939 = arith.addf %935, %938 : vector<8x128xf32>
    %940 = arith.negf %921 : vector<8x128xf32>
    %941 = math.exp %940 : vector<8x128xf32>
    %cst_371 = arith.constant 1.000000e+00 : f32
    %942 = vector.broadcast %cst_371 : f32 to vector<8x128xf32>
    %943 = arith.addf %942, %941 : vector<8x128xf32>
    %944 = arith.divf %942, %943 : vector<8x128xf32>
    %945 = vector.extract_strided_slice %944 {offsets = [0, 0], sizes = [8, 32], strides = [1, 1]} : vector<8x128xf32> to vector<8x32xf32>
    %946 = vector.extract_strided_slice %944 {offsets = [0, 32], sizes = [8, 32], strides = [1, 1]} : vector<8x128xf32> to vector<8x32xf32>
    %947 = vector.extract_strided_slice %944 {offsets = [0, 64], sizes = [8, 32], strides = [1, 1]} : vector<8x128xf32> to vector<8x32xf32>
    %948 = vector.extract_strided_slice %944 {offsets = [0, 96], sizes = [8, 32], strides = [1, 1]} : vector<8x128xf32> to vector<8x32xf32>
    %cst_372 = arith.constant 2.000000e+00 : f32
    %949 = vector.broadcast %cst_372 : f32 to vector<8x32xf32>
    %950 = arith.mulf %948, %949 : vector<8x32xf32>
    %cst_373 = arith.constant 1.000000e+00 : f32
    %951 = vector.broadcast %cst_373 : f32 to vector<8x32xf32>
    %952 = arith.subf %950, %951 : vector<8x32xf32>
    %953 = arith.mulf %946, %874 : vector<8x32xf32>
    %954 = arith.mulf %945, %952 : vector<8x32xf32>
    %955 = arith.addf %953, %954 : vector<8x32xf32>
    %956 = math.tanh %955 : vector<8x32xf32>
    %957 = arith.mulf %947, %956 : vector<8x32xf32>
    %958 = arith.negf %930 : vector<8x128xf32>
    %959 = math.exp %958 : vector<8x128xf32>
    %cst_374 = arith.constant 1.000000e+00 : f32
    %960 = vector.broadcast %cst_374 : f32 to vector<8x128xf32>
    %961 = arith.addf %960, %959 : vector<8x128xf32>
    %962 = arith.divf %960, %961 : vector<8x128xf32>
    %963 = vector.extract_strided_slice %962 {offsets = [0, 0], sizes = [8, 32], strides = [1, 1]} : vector<8x128xf32> to vector<8x32xf32>
    %964 = vector.extract_strided_slice %962 {offsets = [0, 32], sizes = [8, 32], strides = [1, 1]} : vector<8x128xf32> to vector<8x32xf32>
    %965 = vector.extract_strided_slice %962 {offsets = [0, 64], sizes = [8, 32], strides = [1, 1]} : vector<8x128xf32> to vector<8x32xf32>
    %966 = vector.extract_strided_slice %962 {offsets = [0, 96], sizes = [8, 32], strides = [1, 1]} : vector<8x128xf32> to vector<8x32xf32>
    %cst_375 = arith.constant 2.000000e+00 : f32
    %967 = vector.broadcast %cst_375 : f32 to vector<8x32xf32>
    %968 = arith.mulf %966, %967 : vector<8x32xf32>
    %cst_376 = arith.constant 1.000000e+00 : f32
    %969 = vector.broadcast %cst_376 : f32 to vector<8x32xf32>
    %970 = arith.subf %968, %969 : vector<8x32xf32>
    %971 = arith.mulf %964, %892 : vector<8x32xf32>
    %972 = arith.mulf %963, %970 : vector<8x32xf32>
    %973 = arith.addf %971, %972 : vector<8x32xf32>
    %974 = math.tanh %973 : vector<8x32xf32>
    %975 = arith.mulf %965, %974 : vector<8x32xf32>
    %976 = arith.negf %939 : vector<8x128xf32>
    %977 = math.exp %976 : vector<8x128xf32>
    %cst_377 = arith.constant 1.000000e+00 : f32
    %978 = vector.broadcast %cst_377 : f32 to vector<8x128xf32>
    %979 = arith.addf %978, %977 : vector<8x128xf32>
    %980 = arith.divf %978, %979 : vector<8x128xf32>
    %981 = vector.extract_strided_slice %980 {offsets = [0, 0], sizes = [8, 32], strides = [1, 1]} : vector<8x128xf32> to vector<8x32xf32>
    %982 = vector.extract_strided_slice %980 {offsets = [0, 32], sizes = [8, 32], strides = [1, 1]} : vector<8x128xf32> to vector<8x32xf32>
    %983 = vector.extract_strided_slice %980 {offsets = [0, 64], sizes = [8, 32], strides = [1, 1]} : vector<8x128xf32> to vector<8x32xf32>
    %984 = vector.extract_strided_slice %980 {offsets = [0, 96], sizes = [8, 32], strides = [1, 1]} : vector<8x128xf32> to vector<8x32xf32>
    %cst_378 = arith.constant 2.000000e+00 : f32
    %985 = vector.broadcast %cst_378 : f32 to vector<8x32xf32>
    %986 = arith.mulf %984, %985 : vector<8x32xf32>
    %cst_379 = arith.constant 1.000000e+00 : f32
    %987 = vector.broadcast %cst_379 : f32 to vector<8x32xf32>
    %988 = arith.subf %986, %987 : vector<8x32xf32>
    %989 = arith.mulf %982, %910 : vector<8x32xf32>
    %990 = arith.mulf %981, %988 : vector<8x32xf32>
    %991 = arith.addf %989, %990 : vector<8x32xf32>
    %992 = math.tanh %991 : vector<8x32xf32>
    %993 = arith.mulf %983, %992 : vector<8x32xf32>
    %994 = tpu.concatenate %957, %975 in 1 : vector<8x32xf32>, vector<8x32xf32> -> vector<8x64xf32>
    %995 = arith.truncf %994 : vector<8x64xf32> to vector<8x64xbf16>
    %c2_380 = arith.constant 2 : index
    %c0_381 = arith.constant 0 : index
    %c0_382 = arith.constant 0 : index
    %996 = vector.load %arg5[%c2_380, %c0_381, %c0_382] : memref<4x64x128xbf16, #tpu.memory_space<vmem>>, vector<1x64x128xbf16>
    %997 = vector.shape_cast %996 : vector<1x64x128xbf16> to vector<64x128xbf16>
    %cst_383 = arith.constant dense<0.000000e+00> : vector<8x128xf32>
    %998 = tpu.matmul %995, %997, %cst_383 {dimension_numbers = #tpu.dot_dimension_numbers<[1], [0], [0], [1], [0, 0, 1, 1], [], []>} : vector<8x64xbf16>, vector<64x128xbf16>, vector<8x128xf32> -> vector<8x128xf32>
    %c2_384 = arith.constant 2 : index
    %c0_385 = arith.constant 0 : index
    %c0_386 = arith.constant 0 : index
    %999 = vector.load %arg7[%c2_384, %c0_385, %c0_386] : memref<4x1x128xf32, #tpu.memory_space<vmem>>, vector<1x1x128xf32>
    %1000 = vector.shape_cast %999 : vector<1x1x128xf32> to vector<1x128xf32>
    %1001 = vector.broadcast %1000 : vector<1x128xf32> to vector<8x128xf32>
    %1002 = arith.addf %998, %1001 : vector<8x128xf32>
    %1003 = tpu.concatenate %975, %993 in 1 : vector<8x32xf32>, vector<8x32xf32> -> vector<8x64xf32>
    %1004 = arith.truncf %1003 : vector<8x64xf32> to vector<8x64xbf16>
    %c3_387 = arith.constant 3 : index
    %c0_388 = arith.constant 0 : index
    %c0_389 = arith.constant 0 : index
    %1005 = vector.load %arg5[%c3_387, %c0_388, %c0_389] : memref<4x64x128xbf16, #tpu.memory_space<vmem>>, vector<1x64x128xbf16>
    %1006 = vector.shape_cast %1005 : vector<1x64x128xbf16> to vector<64x128xbf16>
    %cst_390 = arith.constant dense<0.000000e+00> : vector<8x128xf32>
    %1007 = tpu.matmul %1004, %1006, %cst_390 {dimension_numbers = #tpu.dot_dimension_numbers<[1], [0], [0], [1], [0, 0, 1, 1], [], []>} : vector<8x64xbf16>, vector<64x128xbf16>, vector<8x128xf32> -> vector<8x128xf32>
    %c3_391 = arith.constant 3 : index
    %c0_392 = arith.constant 0 : index
    %c0_393 = arith.constant 0 : index
    %1008 = vector.load %arg7[%c3_391, %c0_392, %c0_393] : memref<4x1x128xf32, #tpu.memory_space<vmem>>, vector<1x1x128xf32>
    %1009 = vector.shape_cast %1008 : vector<1x1x128xf32> to vector<1x128xf32>
    %1010 = vector.broadcast %1009 : vector<1x128xf32> to vector<8x128xf32>
    %1011 = arith.addf %1007, %1010 : vector<8x128xf32>
    %1012 = arith.negf %1002 : vector<8x128xf32>
    %1013 = math.exp %1012 : vector<8x128xf32>
    %cst_394 = arith.constant 1.000000e+00 : f32
    %1014 = vector.broadcast %cst_394 : f32 to vector<8x128xf32>
    %1015 = arith.addf %1014, %1013 : vector<8x128xf32>
    %1016 = arith.divf %1014, %1015 : vector<8x128xf32>
    %1017 = vector.extract_strided_slice %1016 {offsets = [0, 0], sizes = [8, 32], strides = [1, 1]} : vector<8x128xf32> to vector<8x32xf32>
    %1018 = vector.extract_strided_slice %1016 {offsets = [0, 32], sizes = [8, 32], strides = [1, 1]} : vector<8x128xf32> to vector<8x32xf32>
    %1019 = vector.extract_strided_slice %1016 {offsets = [0, 64], sizes = [8, 32], strides = [1, 1]} : vector<8x128xf32> to vector<8x32xf32>
    %1020 = vector.extract_strided_slice %1016 {offsets = [0, 96], sizes = [8, 32], strides = [1, 1]} : vector<8x128xf32> to vector<8x32xf32>
    %cst_395 = arith.constant 2.000000e+00 : f32
    %1021 = vector.broadcast %cst_395 : f32 to vector<8x32xf32>
    %1022 = arith.mulf %1020, %1021 : vector<8x32xf32>
    %cst_396 = arith.constant 1.000000e+00 : f32
    %1023 = vector.broadcast %cst_396 : f32 to vector<8x32xf32>
    %1024 = arith.subf %1022, %1023 : vector<8x32xf32>
    %1025 = arith.mulf %1018, %973 : vector<8x32xf32>
    %1026 = arith.mulf %1017, %1024 : vector<8x32xf32>
    %1027 = arith.addf %1025, %1026 : vector<8x32xf32>
    %1028 = math.tanh %1027 : vector<8x32xf32>
    %1029 = arith.mulf %1019, %1028 : vector<8x32xf32>
    %1030 = arith.negf %1011 : vector<8x128xf32>
    %1031 = math.exp %1030 : vector<8x128xf32>
    %cst_397 = arith.constant 1.000000e+00 : f32
    %1032 = vector.broadcast %cst_397 : f32 to vector<8x128xf32>
    %1033 = arith.addf %1032, %1031 : vector<8x128xf32>
    %1034 = arith.divf %1032, %1033 : vector<8x128xf32>
    %1035 = vector.extract_strided_slice %1034 {offsets = [0, 0], sizes = [8, 32], strides = [1, 1]} : vector<8x128xf32> to vector<8x32xf32>
    %1036 = vector.extract_strided_slice %1034 {offsets = [0, 32], sizes = [8, 32], strides = [1, 1]} : vector<8x128xf32> to vector<8x32xf32>
    %1037 = vector.extract_strided_slice %1034 {offsets = [0, 64], sizes = [8, 32], strides = [1, 1]} : vector<8x128xf32> to vector<8x32xf32>
    %1038 = vector.extract_strided_slice %1034 {offsets = [0, 96], sizes = [8, 32], strides = [1, 1]} : vector<8x128xf32> to vector<8x32xf32>
    %cst_398 = arith.constant 2.000000e+00 : f32
    %1039 = vector.broadcast %cst_398 : f32 to vector<8x32xf32>
    %1040 = arith.mulf %1038, %1039 : vector<8x32xf32>
    %cst_399 = arith.constant 1.000000e+00 : f32
    %1041 = vector.broadcast %cst_399 : f32 to vector<8x32xf32>
    %1042 = arith.subf %1040, %1041 : vector<8x32xf32>
    %1043 = arith.mulf %1036, %991 : vector<8x32xf32>
    %1044 = arith.mulf %1035, %1042 : vector<8x32xf32>
    %1045 = arith.addf %1043, %1044 : vector<8x32xf32>
    %1046 = math.tanh %1045 : vector<8x32xf32>
    %1047 = arith.mulf %1037, %1046 : vector<8x32xf32>
    %1048 = tpu.concatenate %1029, %1047 in 1 : vector<8x32xf32>, vector<8x32xf32> -> vector<8x64xf32>
    %1049 = arith.truncf %1048 : vector<8x64xf32> to vector<8x64xbf16>
    %c3_400 = arith.constant 3 : index
    %c0_401 = arith.constant 0 : index
    %c0_402 = arith.constant 0 : index
    %1050 = vector.load %arg5[%c3_400, %c0_401, %c0_402] : memref<4x64x128xbf16, #tpu.memory_space<vmem>>, vector<1x64x128xbf16>
    %1051 = vector.shape_cast %1050 : vector<1x64x128xbf16> to vector<64x128xbf16>
    %cst_403 = arith.constant dense<0.000000e+00> : vector<8x128xf32>
    %1052 = tpu.matmul %1049, %1051, %cst_403 {dimension_numbers = #tpu.dot_dimension_numbers<[1], [0], [0], [1], [0, 0, 1, 1], [], []>} : vector<8x64xbf16>, vector<64x128xbf16>, vector<8x128xf32> -> vector<8x128xf32>
    %c3_404 = arith.constant 3 : index
    %c0_405 = arith.constant 0 : index
    %c0_406 = arith.constant 0 : index
    %1053 = vector.load %arg7[%c3_404, %c0_405, %c0_406] : memref<4x1x128xf32, #tpu.memory_space<vmem>>, vector<1x1x128xf32>
    %1054 = vector.shape_cast %1053 : vector<1x1x128xf32> to vector<1x128xf32>
    %1055 = vector.broadcast %1054 : vector<1x128xf32> to vector<8x128xf32>
    %1056 = arith.addf %1052, %1055 : vector<8x128xf32>
    %1057 = arith.negf %1056 : vector<8x128xf32>
    %1058 = math.exp %1057 : vector<8x128xf32>
    %cst_407 = arith.constant 1.000000e+00 : f32
    %1059 = vector.broadcast %cst_407 : f32 to vector<8x128xf32>
    %1060 = arith.addf %1059, %1058 : vector<8x128xf32>
    %1061 = arith.divf %1059, %1060 : vector<8x128xf32>
    %1062 = vector.extract_strided_slice %1061 {offsets = [0, 0], sizes = [8, 32], strides = [1, 1]} : vector<8x128xf32> to vector<8x32xf32>
    %1063 = vector.extract_strided_slice %1061 {offsets = [0, 32], sizes = [8, 32], strides = [1, 1]} : vector<8x128xf32> to vector<8x32xf32>
    %1064 = vector.extract_strided_slice %1061 {offsets = [0, 64], sizes = [8, 32], strides = [1, 1]} : vector<8x128xf32> to vector<8x32xf32>
    %1065 = vector.extract_strided_slice %1061 {offsets = [0, 96], sizes = [8, 32], strides = [1, 1]} : vector<8x128xf32> to vector<8x32xf32>
    %cst_408 = arith.constant 2.000000e+00 : f32
    %1066 = vector.broadcast %cst_408 : f32 to vector<8x32xf32>
    %1067 = arith.mulf %1065, %1066 : vector<8x32xf32>
    %cst_409 = arith.constant 1.000000e+00 : f32
    %1068 = vector.broadcast %cst_409 : f32 to vector<8x32xf32>
    %1069 = arith.subf %1067, %1068 : vector<8x32xf32>
    %1070 = arith.mulf %1063, %1045 : vector<8x32xf32>
    %1071 = arith.mulf %1062, %1069 : vector<8x32xf32>
    %1072 = arith.addf %1070, %1071 : vector<8x32xf32>
    %1073 = math.tanh %1072 : vector<8x32xf32>
    %1074 = arith.mulf %1064, %1073 : vector<8x32xf32>
    %c0_410 = arith.constant 0 : index
    %c0_411 = arith.constant 0 : index
    %c0_412 = arith.constant 0 : index
    %1075 = vector.load %arg13[%c0_410, %c0_411, %c0_412] : memref<5x8x32xf32, #tpu.memory_space<vmem>>, vector<1x8x32xf32>
    %1076 = vector.shape_cast %1075 : vector<1x8x32xf32> to vector<8x32xf32>
    %1077 = vector.shape_cast %732 : vector<8x32xf32> to vector<1x8x32xf32>
    tpu.vector_store %arg13[%c0_410, %c0_411, %c0_412], %1077 {strides = array<i32>} : memref<5x8x32xf32, #tpu.memory_space<vmem>>, vector<1x8x32xf32>,
    %c0_413 = arith.constant 0 : index
    %c0_414 = arith.constant 0 : index
    %c0_415 = arith.constant 0 : index
    %1078 = vector.load %arg14[%c0_413, %c0_414, %c0_415] : memref<5x8x32xf32, #tpu.memory_space<vmem>>, vector<1x8x32xf32>
    %1079 = vector.shape_cast %1078 : vector<1x8x32xf32> to vector<8x32xf32>
    %1080 = vector.shape_cast %730 : vector<8x32xf32> to vector<1x8x32xf32>
    tpu.vector_store %arg14[%c0_413, %c0_414, %c0_415], %1080 {strides = array<i32>} : memref<5x8x32xf32, #tpu.memory_space<vmem>>, vector<1x8x32xf32>,
    %c1_416 = arith.constant 1 : index
    %c0_417 = arith.constant 0 : index
    %c0_418 = arith.constant 0 : index
    %1081 = vector.load %arg13[%c1_416, %c0_417, %c0_418] : memref<5x8x32xf32, #tpu.memory_space<vmem>>, vector<1x8x32xf32>
    %1082 = vector.shape_cast %1081 : vector<1x8x32xf32> to vector<8x32xf32>
    %1083 = vector.shape_cast %858 : vector<8x32xf32> to vector<1x8x32xf32>
    tpu.vector_store %arg13[%c1_416, %c0_417, %c0_418], %1083 {strides = array<i32>} : memref<5x8x32xf32, #tpu.memory_space<vmem>>, vector<1x8x32xf32>,
    %c1_419 = arith.constant 1 : index
    %c0_420 = arith.constant 0 : index
    %c0_421 = arith.constant 0 : index
    %1084 = vector.load %arg14[%c1_419, %c0_420, %c0_421] : memref<5x8x32xf32, #tpu.memory_space<vmem>>, vector<1x8x32xf32>
    %1085 = vector.shape_cast %1084 : vector<1x8x32xf32> to vector<8x32xf32>
    %1086 = vector.shape_cast %856 : vector<8x32xf32> to vector<1x8x32xf32>
    tpu.vector_store %arg14[%c1_419, %c0_420, %c0_421], %1086 {strides = array<i32>} : memref<5x8x32xf32, #tpu.memory_space<vmem>>, vector<1x8x32xf32>,
    %c2_422 = arith.constant 2 : index
    %c0_423 = arith.constant 0 : index
    %c0_424 = arith.constant 0 : index
    %1087 = vector.load %arg13[%c2_422, %c0_423, %c0_424] : memref<5x8x32xf32, #tpu.memory_space<vmem>>, vector<1x8x32xf32>
    %1088 = vector.shape_cast %1087 : vector<1x8x32xf32> to vector<8x32xf32>
    %1089 = vector.shape_cast %957 : vector<8x32xf32> to vector<1x8x32xf32>
    tpu.vector_store %arg13[%c2_422, %c0_423, %c0_424], %1089 {strides = array<i32>} : memref<5x8x32xf32, #tpu.memory_space<vmem>>, vector<1x8x32xf32>,
    %c2_425 = arith.constant 2 : index
    %c0_426 = arith.constant 0 : index
    %c0_427 = arith.constant 0 : index
    %1090 = vector.load %arg14[%c2_425, %c0_426, %c0_427] : memref<5x8x32xf32, #tpu.memory_space<vmem>>, vector<1x8x32xf32>
    %1091 = vector.shape_cast %1090 : vector<1x8x32xf32> to vector<8x32xf32>
    %1092 = vector.shape_cast %955 : vector<8x32xf32> to vector<1x8x32xf32>
    tpu.vector_store %arg14[%c2_425, %c0_426, %c0_427], %1092 {strides = array<i32>} : memref<5x8x32xf32, #tpu.memory_space<vmem>>, vector<1x8x32xf32>,
    %c3_428 = arith.constant 3 : index
    %c0_429 = arith.constant 0 : index
    %c0_430 = arith.constant 0 : index
    %1093 = vector.load %arg13[%c3_428, %c0_429, %c0_430] : memref<5x8x32xf32, #tpu.memory_space<vmem>>, vector<1x8x32xf32>
    %1094 = vector.shape_cast %1093 : vector<1x8x32xf32> to vector<8x32xf32>
    %1095 = vector.shape_cast %1029 : vector<8x32xf32> to vector<1x8x32xf32>
    tpu.vector_store %arg13[%c3_428, %c0_429, %c0_430], %1095 {strides = array<i32>} : memref<5x8x32xf32, #tpu.memory_space<vmem>>, vector<1x8x32xf32>,
    %c3_431 = arith.constant 3 : index
    %c0_432 = arith.constant 0 : index
    %c0_433 = arith.constant 0 : index
    %1096 = vector.load %arg14[%c3_431, %c0_432, %c0_433] : memref<5x8x32xf32, #tpu.memory_space<vmem>>, vector<1x8x32xf32>
    %1097 = vector.shape_cast %1096 : vector<1x8x32xf32> to vector<8x32xf32>
    %1098 = vector.shape_cast %1027 : vector<8x32xf32> to vector<1x8x32xf32>
    tpu.vector_store %arg14[%c3_431, %c0_432, %c0_433], %1098 {strides = array<i32>} : memref<5x8x32xf32, #tpu.memory_space<vmem>>, vector<1x8x32xf32>,
    %c4_434 = arith.constant 4 : index
    %c0_435 = arith.constant 0 : index
    %c0_436 = arith.constant 0 : index
    %1099 = vector.load %arg13[%c4_434, %c0_435, %c0_436] : memref<5x8x32xf32, #tpu.memory_space<vmem>>, vector<1x8x32xf32>
    %1100 = vector.shape_cast %1099 : vector<1x8x32xf32> to vector<8x32xf32>
    %1101 = vector.shape_cast %1074 : vector<8x32xf32> to vector<1x8x32xf32>
    tpu.vector_store %arg13[%c4_434, %c0_435, %c0_436], %1101 {strides = array<i32>} : memref<5x8x32xf32, #tpu.memory_space<vmem>>, vector<1x8x32xf32>,
    %c4_437 = arith.constant 4 : index
    %c0_438 = arith.constant 0 : index
    %c0_439 = arith.constant 0 : index
    %1102 = vector.load %arg14[%c4_437, %c0_438, %c0_439] : memref<5x8x32xf32, #tpu.memory_space<vmem>>, vector<1x8x32xf32>
    %1103 = vector.shape_cast %1102 : vector<1x8x32xf32> to vector<8x32xf32>
    %1104 = vector.shape_cast %1072 : vector<8x32xf32> to vector<1x8x32xf32>
    tpu.vector_store %arg14[%c4_437, %c0_438, %c0_439], %1104 {strides = array<i32>} : memref<5x8x32xf32, #tpu.memory_space<vmem>>, vector<1x8x32xf32>,
    %1105 = arith.truncf %1074 : vector<8x32xf32> to vector<8x32xbf16>
    %c0_440 = arith.constant 0 : index
    %c0_441 = arith.constant 0 : index
    %1106 = vector.load %arg8[%c0_440, %c0_441] : memref<32x10xbf16, #tpu.memory_space<vmem>>, vector<32x10xbf16>
    %cst_442 = arith.constant dense<0.000000e+00> : vector<8x10xf32>
    %1107 = tpu.matmul %1105, %1106, %cst_442 {dimension_numbers = #tpu.dot_dimension_numbers<[1], [0], [0], [1], [0, 0, 1, 1], [], []>} : vector<8x32xbf16>, vector<32x10xbf16>, vector<8x10xf32> -> vector<8x10xf32>
    %c0_443 = arith.constant 0 : index
    %c0_444 = arith.constant 0 : index
    %1108 = vector.load %arg9[%c0_443, %c0_444] : memref<1x10xf32, #tpu.memory_space<vmem>>, vector<1x10xf32>
    %1109 = vector.broadcast %1108 : vector<1x10xf32> to vector<8x10xf32>
    %1110 = arith.addf %1107, %1109 : vector<8x10xf32>
    %cst_445 = arith.constant 0.000000e+00 : f32
    %1111 = vector.broadcast %cst_445 : f32 to vector<8x10xf32>
    %1112 = arith.maximumf %1110, %1111 : vector<8x10xf32>
    %c0_446 = arith.constant 0 : index
    %c0_447 = arith.constant 0 : index
    %1113 = vector.load %arg10[%c0_446, %c0_447] : memref<10x1xf32, #tpu.memory_space<vmem>>, vector<10x1xf32>
    %cst_448 = arith.constant dense<0.000000e+00> : vector<8x1xf32>
    %1114 = tpu.matmul %1112, %1113, %cst_448 {dimension_numbers = #tpu.dot_dimension_numbers<[1], [0], [0], [1], [0, 0, 1, 1], [], []>} : vector<8x10xf32>, vector<10x1xf32>, vector<8x1xf32> -> vector<8x1xf32>
    %c0_449 = arith.constant 0 : index
    %c0_450 = arith.constant 0 : index
    %1115 = memref.load %arg11[%c0_449, %c0_450] : memref<1x1xf32, #tpu.memory_space<smem>>
    %1116 = vector.broadcast %1115 : f32 to vector<8x1xf32>
    %1117 = arith.addf %1114, %1116 : vector<8x1xf32>
    %c0_451 = arith.constant 0 : index
    %c0_452 = arith.constant 0 : index
    %1118 = vector.load %arg12[%c0_451, %c0_452] : memref<8x1xf32, #tpu.memory_space<vmem>>, vector<8x1xf32>
    tpu.vector_store %arg12[%c0_451, %c0_452], %1117 {strides = array<i32>} : memref<8x1xf32, #tpu.memory_space<vmem>>, vector<8x1xf32>,
    return
  }
}

</mosaic_0001>

<llo_original>
// kernel: mv_lstm_forward.1
$region0: #{mv_lstm_forward.1}
  #allocation0 [shape = 'u32[]', space=smem, size = 0x4, offset = 0x4, fixed_abs, tag = 'smem constant byte address 0x4 - core index']
  #allocation1 [shape = 'u32[72,128]{1,0:T(1,128)}', space=vmem, size = 0x9000, scoped, tag = 'internal scratch']
  #allocation2 [shape = 'f32[64,128]{1,0:T(8,128)}', space=vmem, size = 0x8000, scoped, tag = 'scratch operand']
  #allocation3 [shape = 'f32[1,1]{1,0:T(1,128)S(6)}', space=smem, size = 0x200, scoped, tag = 'scoped memory for mv_lstm_forward.1']
  %s0 = inlined_call_operand.vmem [shape: bf16[64,4], index: 0, kind: input, shape index: {}]
  %s1 = inlined_call_operand.vmem [shape: f32[5,8,32], index: 1, kind: input, shape index: {}]
  %s2 = inlined_call_operand.vmem [shape: f32[5,8,32], index: 2, kind: input, shape index: {}]
  %s3 = inlined_call_operand.vmem [shape: bf16[4,128], index: 3, kind: input, shape index: {}]
  %s4 = inlined_call_operand.vmem [shape: bf16[32,128], index: 4, kind: input, shape index: {}]
  %s5 = inlined_call_operand.hbm [shape: bf16[4,64,128], index: 5, kind: input, shape index: {}]
  %s6 = inlined_call_operand.vmem [shape: f32[1,128], index: 6, kind: input, shape index: {}]
  %s7 = inlined_call_operand.vmem [shape: f32[4,1,128], index: 7, kind: input, shape index: {}]
  %s8 = inlined_call_operand.vmem [shape: bf16[32,10], index: 8, kind: input, shape index: {}]
  %s9 = inlined_call_operand.vmem [shape: f32[1,10], index: 9, kind: input, shape index: {}]
  %s10 = inlined_call_operand.vmem [shape: f32[10,1], index: 10, kind: input, shape index: {}]
  %s11 = inlined_call_operand.<no memory space> [shape: f32[1,1], index: 11, kind: input, shape index: {}]
  %s12 = inlined_call_operand.vmem [shape: f32[8,1], index: 12, kind: output, shape index: {0}]
  %s13 = inlined_call_operand.hbm [shape: f32[5,8,32], index: 13, kind: output, shape index: {1}]
  %s14 = inlined_call_operand.hbm [shape: f32[5,8,32], index: 14, kind: output, shape index: {2}]
  %15 = xla_tuple %s12, %s13, %s14
  %s16 = sld [smem:[#allocation0]]
  $region78: #{mv_lstm_forward.1} parent=0
    _
  %s18 = ssub.s32 1, %s16
  %s19 = scalar_select 0, %s18, %s16
  %20 = sst [smem:[#allocation3]] %s11
  $region1: #{mv_lstm_forward.1} parent=0
    #allocation4 [shape = 'u8[65536]{0}', space=vmem, size = 0x10000, scoped, tag = 'input window, operand 5, single buffered']
    #allocation5 [shape = 's32[1]{0}', space=sflag, size = 0x4, scoped, tag = 'scoped memory for mv_lstm_forward.1']
    #allocation6 [shape = 's32[1]{0}', space=sflag, size = 0x4, scoped, tag = 'scoped memory for mv_lstm_forward.1']
    #allocation7 [shape = 'u8[20480]{0}', space=vmem, size = 0x5000, scoped, tag = 'output window, operand 1, single buffered']
    #allocation8 [shape = 'u8[20480]{0}', space=vmem, size = 0x5000, scoped, tag = 'output window, operand 2, single buffered']
    #allocation9 [shape = 's32[1]{0}', space=sflag, size = 0x4, scoped, tag = 'scoped memory for mv_lstm_forward.1']
    %21 = vsyncpa [#allocation5], 0
    %22 = vsyncpa [#allocation6], 0
    %23 = vsyncpa [#allocation9], 0
    // Predicated region
    $region2: #{mv_lstm_forward.1} parent=1 // pred_check
      _
    $region3: #{mv_lstm_forward.1} parent=1 // pred_check_branch
      %25 = sbr.rel (0) target = $region5
    $region4: #{mv_lstm_forward.1} parent=1 // pred_region
      _
    $region5: #{mv_lstm_forward.1} parent=1 // pred_fallthru
      _
    // Predicated region
    $region6: #{mv_lstm_forward.1} parent=1 // pred_check
      _
    $region7: #{mv_lstm_forward.1} parent=1 // pred_check_branch
      %27 = sbr.rel (0) target = $region9
    $region8: #{mv_lstm_forward.1} parent=1 // pred_region
      _
    $region9: #{mv_lstm_forward.1} parent=1 // pred_fallthru
      _
    // Predicated region
    $region10: #{mv_lstm_forward.1} parent=1 // pred_check
      _
    $region11: #{mv_lstm_forward.1} parent=1 // pred_check_branch
      %29 = sbr.rel (0) target = $region13
    $region12: #{mv_lstm_forward.1} parent=1 // pred_region
      _
    $region13: #{mv_lstm_forward.1} parent=1 // pred_fallthru
      _
    // Predicated region
    $region14: #{mv_lstm_forward.1} parent=1 // pred_check
      _
    $region15: #{mv_lstm_forward.1} parent=1 // pred_check_branch
      %31 = sbr.rel (0) target = $region17
    $region16: #{mv_lstm_forward.1} parent=1 // pred_region
      _
    $region17: #{mv_lstm_forward.1} parent=1 // pred_fallthru
      _
    // Predicated region
    $region18: #{mv_lstm_forward.1} parent=1 // pred_check
      _
    $region19: #{mv_lstm_forward.1} parent=1 // pred_check_branch
      %33 = sbr.rel (0) target = $region21
    $region20: #{mv_lstm_forward.1} parent=1 // pred_region
      _
    $region21: #{mv_lstm_forward.1} parent=1 // pred_fallthru
      _
    // Predicated region
    $region22: #{mv_lstm_forward.1} parent=1 // pred_check
      _
    $region23: #{mv_lstm_forward.1} parent=1 // pred_check_branch
      %35 = sbr.rel (0) target = $region25
    $region24: #{mv_lstm_forward.1} parent=1 // pred_region
      %37 = vsyncadd [#allocation5], 0
      %s38 = sshll.u32 %s5, 4
      %s39 = int_to_ptr.hbm [resolvable:$true] %s38
      %s40 = sshll.u32 [#allocation4], 4
      %s41 = int_to_ptr.vmem [resolvable:$true] %s40
      %46 = dma.hbm_to_vmem [thread:$0]  %s39, 2048, %s41, [#allocation5], 64, 64, 4
    $region25: #{mv_lstm_forward.1} parent=1 // pred_fallthru
      _
    // Predicated region
    $region26: #{mv_lstm_forward.1} parent=1 // pred_check
      _
    $region27: #{mv_lstm_forward.1} parent=1 // pred_check_branch
      %48 = sbr.rel (0) target = $region29
    $region28: #{mv_lstm_forward.1} parent=1 // pred_region
      _
    $region29: #{mv_lstm_forward.1} parent=1 // pred_fallthru
      _
    // Predicated region
    $region30: #{mv_lstm_forward.1} parent=1 // pred_check
      _
    $region31: #{mv_lstm_forward.1} parent=1 // pred_check_branch
      %50 = sbr.rel (0) target = $region33
    $region32: #{mv_lstm_forward.1} parent=1 // pred_region
      _
    $region33: #{mv_lstm_forward.1} parent=1 // pred_fallthru
      _
    // Predicated region
    $region34: #{mv_lstm_forward.1} parent=1 // pred_check
      _
    $region35: #{mv_lstm_forward.1} parent=1 // pred_check_branch
      %52 = sbr.rel (0) target = $region37
    $region36: #{mv_lstm_forward.1} parent=1 // pred_region
      _
    $region37: #{mv_lstm_forward.1} parent=1 // pred_fallthru
      _
    // Predicated region
    $region38: #{mv_lstm_forward.1} parent=1 // pred_check
      _
    $region39: #{mv_lstm_forward.1} parent=1 // pred_check_branch
      %54 = sbr.rel (0) target = $region41
    $region40: #{mv_lstm_forward.1} parent=1 // pred_region
      _
    $region41: #{mv_lstm_forward.1} parent=1 // pred_fallthru
      _
    // Predicated region
    $region42: #{mv_lstm_forward.1} parent=1 // pred_check
      _
    $region43: #{mv_lstm_forward.1} parent=1 // pred_check_branch
      %56 = sbr.rel (0) target = $region45
    $region44: #{mv_lstm_forward.1} parent=1 // pred_region
      _
    $region45: #{mv_lstm_forward.1} parent=1 // pred_fallthru
      _
    // Predicated region
    $region46: #{mv_lstm_forward.1} parent=1 // pred_check
      _
    $region47: #{mv_lstm_forward.1} parent=1 // pred_check_branch
      %58 = sbr.rel (0) target = $region49
    $region48: #{mv_lstm_forward.1} parent=1 // pred_region
      _
    $region49: #{mv_lstm_forward.1} parent=1 // pred_fallthru
      _
    // Predicated region
    $region50: #{mv_lstm_forward.1} parent=1 // pred_check
      _
    $region51: #{mv_lstm_forward.1} parent=1 // pred_check_branch
      %60 = sbr.rel (0) target = $region53
    $region52: #{mv_lstm_forward.1} parent=1 // pred_region
      %62 = dma.done [#allocation5], 2048
    $region53: #{mv_lstm_forward.1} parent=1 // pred_fallthru
      _
    %v64 = vld [vmem:[%s0] sm:$0xf]
    %v65 = vld [vmem:[%s0 + $0x4] sm:$0xf]
    %v66 = vld [vmem:[%s0 + $0x8] sm:$0xf]
    %v67 = vld [vmem:[%s0 + $0xc] sm:$0xf]
    %v68 = vld [vmem:[%s0 + $0x10] sm:$0xf]
    %v69 = vld [vmem:[%s0 + $0x14] sm:$0xf]
    %v70 = vld [vmem:[%s0 + $0x18] sm:$0xf]
    %v71 = vld [vmem:[%s0 + $0x1c] sm:$0xf]
    %v72 = vld [vmem:[%s3] sm:$0x3]
    %v73 = vld [vmem:[%s6] sm:$0x1]
    %v75 = vperm.slane %v73, 0
    %v85 = vunpack.c.l.b16 %v64
    %v86 = vunpack.c.l.b16 %v65
    %v87 = vunpack.c.l.b16 %v66
    %v88 = vunpack.c.l.b16 %v67
    %v89 = vunpack.c.l.b16 %v68
    %v90 = vunpack.c.l.b16 %v69
    %v91 = vunpack.c.l.b16 %v70
    %v92 = vunpack.c.l.b16 %v71
    %v93 = vpack.c.b16 %v86, %v85
    %v94 = vpack.c.b16 %v88, %v87
    %v95 = vpack.c.b16 %v90, %v89
    %v96 = vpack.c.b16 %v92, %v91
    %vm97 = vcmask 31744
    %v99 = vsel %vm97, %v93, 0
    %v102 = vsel %vm97, %v94, 0
    %v105 = vsel %vm97, %v95, 0
    %v108 = vsel %vm97, %v96, 0
    %vm110 = vcmask 1041408
    %v112 = vsel %vm110, %v72, 0
    %114 = vmatpush.bf16.msra.mxu0 0
    %115 = vmatpush.bf16.msra.mxu0 0
    %116 = vmatpush.bf16.msra.mxu0 0
    %117 = vmatpush.bf16.msra.mxu0 0
    %118 = vmatpush.bf16.msra.mxu0 0
    %119 = vmatpush.bf16.msra.mxu0 0
    %120 = vmatpush.bf16.msra.mxu0 0
    %121 = vmatpush.bf16.msra.mxu0 %v112
    %122 = vmatmul.bf16.gmra.mxu0 %v99
    %v123 = vpop.f32.mrf.mxu0
    %v124 = vadd.f32 %v75, %v123
    %v125 = vpop.f32.mrf.mxu0
    %v126 = vadd.f32 %v75, %v125
    %127 = vmatmul.bf16.gmra.mxu0 %v102
    %v128 = vpop.f32.mrf.mxu0
    %v129 = vadd.f32 %v75, %v128
    %v130 = vpop.f32.mrf.mxu0
    %v131 = vadd.f32 %v75, %v130
    %132 = vmatmul.bf16.gmra.mxu0 %v105
    %v133 = vpop.f32.mrf.mxu0
    %v134 = vadd.f32 %v75, %v133
    %v135 = vpop.f32.mrf.mxu0
    %v136 = vadd.f32 %v75, %v135
    %137 = vmatmul.bf16.gmra.mxu0 %v108
    %v138 = vpop.f32.mrf.mxu0
    %v139 = vadd.f32 %v75, %v138
    %v140 = vpop.f32.mrf.mxu0
    %v141 = vadd.f32 %v75, %v140
    %142 = vdwg.mxu0
    %143 = vst [vmem:[#allocation2] sm:$0xff] %v124
    %144 = vst [vmem:[#allocation2 + $0x8] sm:$0xff] %v126
    %145 = vst [vmem:[#allocation2 + $0x10] sm:$0xff] %v129
    %146 = vst [vmem:[#allocation2 + $0x18] sm:$0xff] %v131
    %147 = vst [vmem:[#allocation2 + $0x20] sm:$0xff] %v134
    %148 = vst [vmem:[#allocation2 + $0x28] sm:$0xff] %v136
    %149 = vst [vmem:[#allocation2 + $0x30] sm:$0xff] %v139
    %150 = vst [vmem:[#allocation2 + $0x38] sm:$0xff] %v141
    %v151 = vld [vmem:[%s1] sm:$0xff]
    %s152 = scalar_lea.vmem %s1, 8
    %v153 = vld [vmem:[%s152] sm:$0xff]
    %s154 = scalar_lea.vmem %s1, 16
    %v155 = vld [vmem:[%s154] sm:$0xff]
    %s156 = scalar_lea.vmem %s1, 24
    %v157 = vld [vmem:[%s156] sm:$0xff]
    %s158 = scalar_lea.vmem %s1, 32
    %v159 = vld [vmem:[%s158] sm:$0xff]
    %v160 = vld [vmem:[%s2] sm:$0xff]
    %s161 = scalar_lea.vmem %s2, 8
    %v162 = vld [vmem:[%s161] sm:$0xff]
    %s163 = scalar_lea.vmem %s2, 16
    %v164 = vld [vmem:[%s163] sm:$0xff]
    %s165 = scalar_lea.vmem %s2, 24
    %v166 = vld [vmem:[%s165] sm:$0xff]
    %s167 = scalar_lea.vmem %s2, 32
    %v168 = vld [vmem:[%s167] sm:$0xff]
    %v169 = vld [vmem:[#allocation2] sm:$0xff]
    %v170 = vpack.c.bf16 %v151, %v151
    %v171 = vld [vmem:[%s4] sm:$0xf]
    %v172 = vld [vmem:[%s4 + $0x4] sm:$0xf]
    %v173 = vld [vmem:[%s4 + $0x8] sm:$0xf]
    %v174 = vld [vmem:[%s4 + $0xc] sm:$0xf]
    %v179 = vunpack.c.l.b16 %v171
    %v180 = vunpack.c.l.b16 %v172
    %v181 = vunpack.c.l.b16 %v173
    %v182 = vunpack.c.l.b16 %v174
    %v183 = vpack.c.b16 %v180, %v179
    %v184 = vpack.c.b16 %v182, %v181
    %vm187 = vcmask 261120
    %v189 = vsel %vm187, %v170, 0
    %191 = vmatpush.bf16.msra.mxu0 0
    %192 = vmatpush.bf16.msra.mxu0 0
    %193 = vmatpush.bf16.msra.mxu0 0
    %194 = vmatpush.bf16.msra.mxu0 0
    %195 = vmatpush.bf16.msra.mxu0 0
    %196 = vmatpush.bf16.msra.mxu0 0
    %197 = vmatpush.bf16.msra.mxu0 %v184
    %198 = vmatpush.bf16.msra.mxu0 %v183
    %199 = vmatmul.bf16.gmra.mxu0 %v189
    %v200 = vpop.f32.mrf.mxu0
    %v201 = vadd.f32 0.0, %v200
    %v202 = vpop.f32.mrf.mxu0
    %203 = vdwg.mxu0
    %v204 = vadd.f32 %v169, %v201
    %v205 = vxor.u32 %v204, 2147483648
    %v206 = vmul.f32 %v205, 1.442695
    %v207 = vpow.pop %v206
    %v208 = vadd.f32 %v207, 1.0
    %v209 = vrcp.pop %v208
    %v210 = vmul.f32 %v208, %v209
    %v211 = vsub.f32 1.0, %v210
    %v212 = vmul.f32 %v209, %v211
    %v213 = vadd.f32 %v209, %v212
    %vm214 = vweird.f32 %v208
    %vm215 = vweird.f32 %v209
    %vm216 = vmor %vm214, %vm215
    %v217 = vsel %vm216, %v209, %v213
    %v218 = vand.u32 2147483647, %v208
    %vm219 = vcmp.eq.f32.partialorder %v218, 8.507059e+37
    %v220 = vand.u32 %v208, 2147483648
    %v221 = vor.u32 1.1754944e-38, %v220
    %v222 = vsel %vm219, %v221, %v217
    %v223 = vmul.f32 1.0, %v222
    %v224 = vmul.f32 %v223, 2.0
    %v225 = vsub.f32 %v224, 1.0
    %227 = vrot.lane.b32.xlu0 %v160, 32
    %v228 = vpop.permute.xlu0 %227
    %v230 = vmul.f32 %v223, %v228
    %232 = vrot.lane.b32.xlu0 %v225, 32
    %v233 = vpop.permute.xlu0 %232
    %v235 = vmul.f32 %v223, %v233
    %237 = vrot.lane.b32.xlu0 %v235, 32
    %v238 = vpop.permute.xlu0 %237
    %v240 = vadd.f32 %v230, %v238
    %v241 = vtanh.pop %v240
    %243 = vrot.lane.b32.xlu0 %v241, 32
    %v244 = vpop.permute.xlu0 %243
    %v246 = vmul.f32 %v223, %v244
    %v247 = vld [vmem:[#allocation2 + $0x8] sm:$0xff]
    %v248 = vpack.c.bf16 %v246, %v246
    %250 = vrot.lane.b32.xlu0 %v248, 64
    %v251 = vpop.permute.xlu0 %250
    %v253 = vsel %vm187, %v251, 0
    %255 = vmatpush.bf16.msra.mxu0 0
    %256 = vmatpush.bf16.msra.mxu0 0
    %257 = vmatpush.bf16.msra.mxu0 0
    %258 = vmatpush.bf16.msra.mxu0 0
    %259 = vmatpush.bf16.msra.mxu0 0
    %260 = vmatpush.bf16.msra.mxu0 0
    %261 = vmatpush.bf16.msra.mxu0 %v184
    %262 = vmatpush.bf16.msra.mxu0 %v183
    %263 = vmatmul.bf16.gmra.mxu0 %v253
    %v264 = vpop.f32.mrf.mxu0
    %v265 = vadd.f32 0.0, %v264
    %v266 = vpop.f32.mrf.mxu0
    %267 = vdwg.mxu0
    %v268 = vadd.f32 %v247, %v265
    %270 = vrot.lane.b32.xlu0 %v246, 64
    %v271 = vpop.permute.xlu0 %270
    %274 = vrot.lane.b32.xlu0 %v153, 32
    %v275 = vpop.permute.xlu0 %274
    %v277 = vsel %vm187, %v271, %v275
    %v278 = vpack.c.bf16 %v277, %v277
    %v279 = vld [vmem:[#allocation4] sm:$0xf]
    %v280 = vld [vmem:[#allocation4 + $0x4] sm:$0xf]
    %v281 = vld [vmem:[#allocation4 + $0x8] sm:$0xf]
    %v282 = vld [vmem:[#allocation4 + $0xc] sm:$0xf]
    %v283 = vld [vmem:[#allocation4 + $0x10] sm:$0xf]
    %v284 = vld [vmem:[#allocation4 + $0x14] sm:$0xf]
    %v285 = vld [vmem:[#allocation4 + $0x18] sm:$0xf]
    %v286 = vld [vmem:[#allocation4 + $0x1c] sm:$0xf]
    %v287 = vld [vmem:[%s7] sm:$0x1]
    %v289 = vperm.slane %v287, 0
    %v299 = vunpack.c.l.b16 %v279
    %v300 = vunpack.c.l.b16 %v280
    %v301 = vunpack.c.l.b16 %v281
    %v302 = vunpack.c.l.b16 %v282
    %v303 = vunpack.c.l.b16 %v283
    %v304 = vunpack.c.l.b16 %v284
    %v305 = vunpack.c.l.b16 %v285
    %v306 = vunpack.c.l.b16 %v286
    %v307 = vpack.c.b16 %v300, %v299
    %v308 = vpack.c.b16 %v302, %v301
    %v309 = vpack.c.b16 %v304, %v303
    %v310 = vpack.c.b16 %v306, %v305
    %vm315 = vcmask 523264
    %v317 = vsel %vm315, %v278, 0
    %319 = vmatpush.bf16.msra.mxu0 0
    %320 = vmatpush.bf16.msra.mxu0 0
    %321 = vmatpush.bf16.msra.mxu0 0
    %322 = vmatpush.bf16.msra.mxu0 0
    %323 = vmatpush.bf16.msra.mxu0 %v310
    %324 = vmatpush.bf16.msra.mxu0 %v309
    %325 = vmatpush.bf16.msra.mxu0 %v308
    %326 = vmatpush.bf16.msra.mxu0 %v307
    %327 = vmatmul.bf16.gmra.mxu0 %v317
    %v328 = vpop.f32.mrf.mxu0
    %v329 = vadd.f32 %v289, %v328
    %v330 = vpop.f32.mrf.mxu0
    %331 = vdwg.mxu0
    %v332 = vxor.u32 %v268, 2147483648
    %v333 = vmul.f32 %v332, 1.442695
    %v334 = vpow.pop %v333
    %v335 = vadd.f32 %v334, 1.0
    %v336 = vrcp.pop %v335
    %v337 = vmul.f32 %v335, %v336
    %v338 = vsub.f32 1.0, %v337
    %v339 = vmul.f32 %v336, %v338
    %v340 = vadd.f32 %v336, %v339
    %vm341 = vweird.f32 %v335
    %vm342 = vweird.f32 %v336
    %vm343 = vmor %vm341, %vm342
    %v344 = vsel %vm343, %v336, %v340
    %v345 = vand.u32 2147483647, %v335
    %vm346 = vcmp.eq.f32.partialorder %v345, 8.507059e+37
    %v347 = vand.u32 %v335, 2147483648
    %v348 = vor.u32 1.1754944e-38, %v347
    %v349 = vsel %vm346, %v348, %v344
    %v350 = vmul.f32 1.0, %v349
    %v351 = vmul.f32 %v350, 2.0
    %v352 = vsub.f32 %v351, 1.0
    %v353 = vmul.f32 %v350, %v240
    %355 = vrot.lane.b32.xlu0 %v352, 32
    %v356 = vpop.permute.xlu0 %355
    %v358 = vmul.f32 %v350, %v356
    %360 = vrot.lane.b32.xlu0 %v358, 32
    %v361 = vpop.permute.xlu0 %360
    %v363 = vadd.f32 %v353, %v361
    %v364 = vtanh.pop %v363
    %366 = vrot.lane.b32.xlu0 %v364, 32
    %v367 = vpop.permute.xlu0 %366
    %v369 = vmul.f32 %v350, %v367
    %v370 = vxor.u32 %v329, 2147483648
    %v371 = vmul.f32 %v370, 1.442695
    %v372 = vpow.pop %v371
    %v373 = vadd.f32 %v372, 1.0
    %v374 = vrcp.pop %v373
    %v375 = vmul.f32 %v373, %v374
    %v376 = vsub.f32 1.0, %v375
    %v377 = vmul.f32 %v374, %v376
    %v378 = vadd.f32 %v374, %v377
    %vm379 = vweird.f32 %v373
    %vm380 = vweird.f32 %v374
    %vm381 = vmor %vm379, %vm380
    %v382 = vsel %vm381, %v374, %v378
    %v383 = vand.u32 2147483647, %v373
    %vm384 = vcmp.eq.f32.partialorder %v383, 8.507059e+37
    %v385 = vand.u32 %v373, 2147483648
    %v386 = vor.u32 1.1754944e-38, %v385
    %v387 = vsel %vm384, %v386, %v382
    %v388 = vmul.f32 1.0, %v387
    %v389 = vmul.f32 %v388, 2.0
    %v390 = vsub.f32 %v389, 1.0
    %392 = vrot.lane.b32.xlu0 %v162, 32
    %v393 = vpop.permute.xlu0 %392
    %v395 = vmul.f32 %v388, %v393
    %397 = vrot.lane.b32.xlu0 %v390, 32
    %v398 = vpop.permute.xlu0 %397
    %v400 = vmul.f32 %v388, %v398
    %402 = vrot.lane.b32.xlu0 %v400, 32
    %v403 = vpop.permute.xlu0 %402
    %v405 = vadd.f32 %v395, %v403
    %v406 = vtanh.pop %v405
    %408 = vrot.lane.b32.xlu0 %v406, 32
    %v409 = vpop.permute.xlu0 %408
    %v411 = vmul.f32 %v388, %v409
    %v412 = vld [vmem:[#allocation2 + $0x10] sm:$0xff]
    %v413 = vpack.c.bf16 %v369, %v369
    %415 = vrot.lane.b32.xlu0 %v413, 64
    %v416 = vpop.permute.xlu0 %415
    %v418 = vsel %vm187, %v416, 0
    %420 = vmatpush.bf16.msra.mxu0 0
    %421 = vmatpush.bf16.msra.mxu0 0
    %422 = vmatpush.bf16.msra.mxu0 0
    %423 = vmatpush.bf16.msra.mxu0 0
    %424 = vmatpush.bf16.msra.mxu0 0
    %425 = vmatpush.bf16.msra.mxu0 0
    %426 = vmatpush.bf16.msra.mxu0 %v184
    %427 = vmatpush.bf16.msra.mxu0 %v183
    %428 = vmatmul.bf16.gmra.mxu0 %v418
    %v429 = vpop.f32.mrf.mxu0
    %v430 = vadd.f32 0.0, %v429
    %v431 = vpop.f32.mrf.mxu0
    %432 = vdwg.mxu0
    %v433 = vadd.f32 %v412, %v430
    %435 = vrot.lane.b32.xlu0 %v369, 64
    %v436 = vpop.permute.xlu0 %435
    %439 = vrot.lane.b32.xlu0 %v411, 96
    %v440 = vpop.permute.xlu0 %439
    %v442 = vsel %vm187, %v436, %v440
    %v443 = vpack.c.bf16 %v442, %v442
    %v445 = vsel %vm315, %v443, 0
    %447 = vmatpush.bf16.msra.mxu0 0
    %448 = vmatpush.bf16.msra.mxu0 0
    %449 = vmatpush.bf16.msra.mxu0 0
    %450 = vmatpush.bf16.msra.mxu0 0
    %451 = vmatpush.bf16.msra.mxu0 %v310
    %452 = vmatpush.bf16.msra.mxu0 %v309
    %453 = vmatpush.bf16.msra.mxu0 %v308
    %454 = vmatpush.bf16.msra.mxu0 %v307
    %455 = vmatmul.bf16.gmra.mxu0 %v445
    %v456 = vpop.f32.mrf.mxu0
    %v457 = vadd.f32 %v289, %v456
    %v458 = vpop.f32.mrf.mxu0
    %459 = vdwg.mxu0
    %460 = vrot.lane.b32.xlu0 %v411, 64
    %v461 = vpop.permute.xlu0 %460
    %464 = vrot.lane.b32.xlu0 %v155, 32
    %v465 = vpop.permute.xlu0 %464
    %v467 = vsel %vm187, %v461, %v465
    %v468 = vpack.c.bf16 %v467, %v467
    %s469 = scalar_lea.vmem [#allocation4], 32
    %v470 = vld [vmem:[%s469] sm:$0xf]
    %v471 = vld [vmem:[%s469 + $0x4] sm:$0xf]
    %v472 = vld [vmem:[%s469 + $0x8] sm:$0xf]
    %v473 = vld [vmem:[%s469 + $0xc] sm:$0xf]
    %v474 = vld [vmem:[%s469 + $0x10] sm:$0xf]
    %v475 = vld [vmem:[%s469 + $0x14] sm:$0xf]
    %v476 = vld [vmem:[%s469 + $0x18] sm:$0xf]
    %v477 = vld [vmem:[%s469 + $0x1c] sm:$0xf]
    %s478 = scalar_lea.vmem %s7, 1
    %v479 = vld [vmem:[%s478] sm:$0x1]
    %v481 = vperm.slane %v479, 0
    %v491 = vunpack.c.l.b16 %v470
    %v492 = vunpack.c.l.b16 %v471
    %v493 = vunpack.c.l.b16 %v472
    %v494 = vunpack.c.l.b16 %v473
    %v495 = vunpack.c.l.b16 %v474
    %v496 = vunpack.c.l.b16 %v475
    %v497 = vunpack.c.l.b16 %v476
    %v498 = vunpack.c.l.b16 %v477
    %v499 = vpack.c.b16 %v492, %v491
    %v500 = vpack.c.b16 %v494, %v493
    %v501 = vpack.c.b16 %v496, %v495
    %v502 = vpack.c.b16 %v498, %v497
    %v508 = vsel %vm315, %v468, 0
    %510 = vmatpush.bf16.msra.mxu0 0
    %511 = vmatpush.bf16.msra.mxu0 0
    %512 = vmatpush.bf16.msra.mxu0 0
    %513 = vmatpush.bf16.msra.mxu0 0
    %514 = vmatpush.bf16.msra.mxu0 %v502
    %515 = vmatpush.bf16.msra.mxu0 %v501
    %516 = vmatpush.bf16.msra.mxu0 %v500
    %517 = vmatpush.bf16.msra.mxu0 %v499
    %518 = vmatmul.bf16.gmra.mxu0 %v508
    %v519 = vpop.f32.mrf.mxu0
    %v520 = vadd.f32 %v481, %v519
    %v521 = vpop.f32.mrf.mxu0
    %522 = vdwg.mxu0
    %v523 = vxor.u32 %v433, 2147483648
    %v524 = vmul.f32 %v523, 1.442695
    %v525 = vpow.pop %v524
    %v526 = vadd.f32 %v525, 1.0
    %v527 = vrcp.pop %v526
    %v528 = vmul.f32 %v526, %v527
    %v529 = vsub.f32 1.0, %v528
    %v530 = vmul.f32 %v527, %v529
    %v531 = vadd.f32 %v527, %v530
    %vm532 = vweird.f32 %v526
    %vm533 = vweird.f32 %v527
    %vm534 = vmor %vm532, %vm533
    %v535 = vsel %vm534, %v527, %v531
    %v536 = vand.u32 2147483647, %v526
    %vm537 = vcmp.eq.f32.partialorder %v536, 8.507059e+37
    %v538 = vand.u32 %v526, 2147483648
    %v539 = vor.u32 1.1754944e-38, %v538
    %v540 = vsel %vm537, %v539, %v535
    %v541 = vmul.f32 1.0, %v540
    %v542 = vmul.f32 %v541, 2.0
    %v543 = vsub.f32 %v542, 1.0
    %v544 = vmul.f32 %v541, %v363
    %546 = vrot.lane.b32.xlu0 %v543, 32
    %v547 = vpop.permute.xlu0 %546
    %v549 = vmul.f32 %v541, %v547
    %551 = vrot.lane.b32.xlu0 %v549, 32
    %v552 = vpop.permute.xlu0 %551
    %v554 = vadd.f32 %v544, %v552
    %v555 = vtanh.pop %v554
    %557 = vrot.lane.b32.xlu0 %v555, 32
    %v558 = vpop.permute.xlu0 %557
    %v560 = vmul.f32 %v541, %v558
    %v561 = vxor.u32 %v457, 2147483648
    %v562 = vmul.f32 %v561, 1.442695
    %v563 = vpow.pop %v562
    %v564 = vadd.f32 %v563, 1.0
    %v565 = vrcp.pop %v564
    %v566 = vmul.f32 %v564, %v565
    %v567 = vsub.f32 1.0, %v566
    %v568 = vmul.f32 %v565, %v567
    %v569 = vadd.f32 %v565, %v568
    %vm570 = vweird.f32 %v564
    %vm571 = vweird.f32 %v565
    %vm572 = vmor %vm570, %vm571
    %v573 = vsel %vm572, %v565, %v569
    %v574 = vand.u32 2147483647, %v564
    %vm575 = vcmp.eq.f32.partialorder %v574, 8.507059e+37
    %v576 = vand.u32 %v564, 2147483648
    %v577 = vor.u32 1.1754944e-38, %v576
    %v578 = vsel %vm575, %v577, %v573
    %v579 = vmul.f32 1.0, %v578
    %v580 = vmul.f32 %v579, 2.0
    %v581 = vsub.f32 %v580, 1.0
    %v582 = vmul.f32 %v579, %v405
    %584 = vrot.lane.b32.xlu0 %v581, 32
    %v585 = vpop.permute.xlu0 %584
    %v587 = vmul.f32 %v579, %v585
    %589 = vrot.lane.b32.xlu0 %v587, 32
    %v590 = vpop.permute.xlu0 %589
    %v592 = vadd.f32 %v582, %v590
    %v593 = vtanh.pop %v592
    %595 = vrot.lane.b32.xlu0 %v593, 32
    %v596 = vpop.permute.xlu0 %595
    %v598 = vmul.f32 %v579, %v596
    %v599 = vxor.u32 %v520, 2147483648
    %v600 = vmul.f32 %v599, 1.442695
    %v601 = vpow.pop %v600
    %v602 = vadd.f32 %v601, 1.0
    %v603 = vrcp.pop %v602
    %v604 = vmul.f32 %v602, %v603
    %v605 = vsub.f32 1.0, %v604
    %v606 = vmul.f32 %v603, %v605
    %v607 = vadd.f32 %v603, %v606
    %vm608 = vweird.f32 %v602
    %vm609 = vweird.f32 %v603
    %vm610 = vmor %vm608, %vm609
    %v611 = vsel %vm610, %v603, %v607
    %v612 = vand.u32 2147483647, %v602
    %vm613 = vcmp.eq.f32.partialorder %v612, 8.507059e+37
    %v614 = vand.u32 %v602, 2147483648
    %v615 = vor.u32 1.1754944e-38, %v614
    %v616 = vsel %vm613, %v615, %v611
    %v617 = vmul.f32 1.0, %v616
    %v618 = vmul.f32 %v617, 2.0
    %v619 = vsub.f32 %v618, 1.0
    %621 = vrot.lane.b32.xlu0 %v164, 32
    %v622 = vpop.permute.xlu0 %621
    %v624 = vmul.f32 %v617, %v622
    %626 = vrot.lane.b32.xlu0 %v619, 32
    %v627 = vpop.permute.xlu0 %626
    %v629 = vmul.f32 %v617, %v627
    %631 = vrot.lane.b32.xlu0 %v629, 32
    %v632 = vpop.permute.xlu0 %631
    %v634 = vadd.f32 %v624, %v632
    %v635 = vtanh.pop %v634
    %637 = vrot.lane.b32.xlu0 %v635, 32
    %v638 = vpop.permute.xlu0 %637
    %v640 = vmul.f32 %v617, %v638
    %v641 = vld [vmem:[#allocation2 + $0x18] sm:$0xff]
    %v642 = vpack.c.bf16 %v560, %v560
    %644 = vrot.lane.b32.xlu0 %v642, 64
    %v645 = vpop.permute.xlu0 %644
    %v647 = vsel %vm187, %v645, 0
    %649 = vmatpush.bf16.msra.mxu0 0
    %650 = vmatpush.bf16.msra.mxu0 0
    %651 = vmatpush.bf16.msra.mxu0 0
    %652 = vmatpush.bf16.msra.mxu0 0
    %653 = vmatpush.bf16.msra.mxu0 0
    %654 = vmatpush.bf16.msra.mxu0 0
    %655 = vmatpush.bf16.msra.mxu0 %v184
    %656 = vmatpush.bf16.msra.mxu0 %v183
    %657 = vmatmul.bf16.gmra.mxu0 %v647
    %v658 = vpop.f32.mrf.mxu0
    %v659 = vadd.f32 0.0, %v658
    %v660 = vpop.f32.mrf.mxu0
    %661 = vdwg.mxu0
    %v662 = vadd.f32 %v641, %v659
    %664 = vrot.lane.b32.xlu0 %v560, 64
    %v665 = vpop.permute.xlu0 %664
    %668 = vrot.lane.b32.xlu0 %v598, 96
    %v669 = vpop.permute.xlu0 %668
    %v671 = vsel %vm187, %v665, %v669
    %v672 = vpack.c.bf16 %v671, %v671
    %v674 = vsel %vm315, %v672, 0
    %676 = vmatpush.bf16.msra.mxu0 0
    %677 = vmatpush.bf16.msra.mxu0 0
    %678 = vmatpush.bf16.msra.mxu0 0
    %679 = vmatpush.bf16.msra.mxu0 0
    %680 = vmatpush.bf16.msra.mxu0 %v310
    %681 = vmatpush.bf16.msra.mxu0 %v309
    %682 = vmatpush.bf16.msra.mxu0 %v308
    %683 = vmatpush.bf16.msra.mxu0 %v307
    %684 = vmatmul.bf16.gmra.mxu0 %v674
    %v685 = vpop.f32.mrf.mxu0
    %v686 = vadd.f32 %v289, %v685
    %v687 = vpop.f32.mrf.mxu0
    %688 = vdwg.mxu0
    %689 = vrot.lane.b32.xlu0 %v598, 64
    %v690 = vpop.permute.xlu0 %689
    %693 = vrot.lane.b32.xlu0 %v640, 96
    %v694 = vpop.permute.xlu0 %693
    %v696 = vsel %vm187, %v690, %v694
    %v697 = vpack.c.bf16 %v696, %v696
    %v699 = vsel %vm315, %v697, 0
    %701 = vmatpush.bf16.msra.mxu0 0
    %702 = vmatpush.bf16.msra.mxu0 0
    %703 = vmatpush.bf16.msra.mxu0 0
    %704 = vmatpush.bf16.msra.mxu0 0
    %705 = vmatpush.bf16.msra.mxu0 %v502
    %706 = vmatpush.bf16.msra.mxu0 %v501
    %707 = vmatpush.bf16.msra.mxu0 %v500
    %708 = vmatpush.bf16.msra.mxu0 %v499
    %709 = vmatmul.bf16.gmra.mxu0 %v699
    %v710 = vpop.f32.mrf.mxu0
    %v711 = vadd.f32 %v481, %v710
    %v712 = vpop.f32.mrf.mxu0
    %713 = vdwg.mxu0
    %714 = vrot.lane.b32.xlu0 %v640, 64
    %v715 = vpop.permute.xlu0 %714
    %718 = vrot.lane.b32.xlu0 %v157, 32
    %v719 = vpop.permute.xlu0 %718
    %v721 = vsel %vm187, %v715, %v719
    %v722 = vpack.c.bf16 %v721, %v721
    %s723 = scalar_lea.vmem [#allocation4], 64
    %v724 = vld [vmem:[%s723] sm:$0xf]
    %v725 = vld [vmem:[%s723 + $0x4] sm:$0xf]
    %v726 = vld [vmem:[%s723 + $0x8] sm:$0xf]
    %v727 = vld [vmem:[%s723 + $0xc] sm:$0xf]
    %v728 = vld [vmem:[%s723 + $0x10] sm:$0xf]
    %v729 = vld [vmem:[%s723 + $0x14] sm:$0xf]
    %v730 = vld [vmem:[%s723 + $0x18] sm:$0xf]
    %v731 = vld [vmem:[%s723 + $0x1c] sm:$0xf]
    %s732 = scalar_lea.vmem %s7, 2
    %v733 = vld [vmem:[%s732] sm:$0x1]
    %v735 = vperm.slane %v733, 0
    %v745 = vunpack.c.l.b16 %v724
    %v746 = vunpack.c.l.b16 %v725
    %v747 = vunpack.c.l.b16 %v726
    %v748 = vunpack.c.l.b16 %v727
    %v749 = vunpack.c.l.b16 %v728
    %v750 = vunpack.c.l.b16 %v729
    %v751 = vunpack.c.l.b16 %v730
    %v752 = vunpack.c.l.b16 %v731
    %v753 = vpack.c.b16 %v746, %v745
    %v754 = vpack.c.b16 %v748, %v747
    %v755 = vpack.c.b16 %v750, %v749
    %v756 = vpack.c.b16 %v752, %v751
    %v762 = vsel %vm315, %v722, 0
    %764 = vmatpush.bf16.msra.mxu0 0
    %765 = vmatpush.bf16.msra.mxu0 0
    %766 = vmatpush.bf16.msra.mxu0 0
    %767 = vmatpush.bf16.msra.mxu0 0
    %768 = vmatpush.bf16.msra.mxu0 %v756
    %769 = vmatpush.bf16.msra.mxu0 %v755
    %770 = vmatpush.bf16.msra.mxu0 %v754
    %771 = vmatpush.bf16.msra.mxu0 %v753
    %772 = vmatmul.bf16.gmra.mxu0 %v762
    %v773 = vpop.f32.mrf.mxu0
    %v774 = vadd.f32 %v735, %v773
    %v775 = vpop.f32.mrf.mxu0
    %776 = vdwg.mxu0
    %v777 = vxor.u32 %v662, 2147483648
    %v778 = vmul.f32 %v777, 1.442695
    %v779 = vpow.pop %v778
    %v780 = vadd.f32 %v779, 1.0
    %v781 = vrcp.pop %v780
    %v782 = vmul.f32 %v780, %v781
    %v783 = vsub.f32 1.0, %v782
    %v784 = vmul.f32 %v781, %v783
    %v785 = vadd.f32 %v781, %v784
    %vm786 = vweird.f32 %v780
    %vm787 = vweird.f32 %v781
    %vm788 = vmor %vm786, %vm787
    %v789 = vsel %vm788, %v781, %v785
    %v790 = vand.u32 2147483647, %v780
    %vm791 = vcmp.eq.f32.partialorder %v790, 8.507059e+37
    %v792 = vand.u32 %v780, 2147483648
    %v793 = vor.u32 1.1754944e-38, %v792
    %v794 = vsel %vm791, %v793, %v789
    %v795 = vmul.f32 1.0, %v794
    %v796 = vmul.f32 %v795, 2.0
    %v797 = vsub.f32 %v796, 1.0
    %v798 = vmul.f32 %v795, %v554
    %800 = vrot.lane.b32.xlu0 %v797, 32
    %v801 = vpop.permute.xlu0 %800
    %v803 = vmul.f32 %v795, %v801
    %805 = vrot.lane.b32.xlu0 %v803, 32
    %v806 = vpop.permute.xlu0 %805
    %v808 = vadd.f32 %v798, %v806
    %v809 = vtanh.pop %v808
    %811 = vrot.lane.b32.xlu0 %v809, 32
    %v812 = vpop.permute.xlu0 %811
    %v814 = vmul.f32 %v795, %v812
    %v815 = vxor.u32 %v686, 2147483648
    %v816 = vmul.f32 %v815, 1.442695
    %v817 = vpow.pop %v816
    %v818 = vadd.f32 %v817, 1.0
    %v819 = vrcp.pop %v818
    %v820 = vmul.f32 %v818, %v819
    %v821 = vsub.f32 1.0, %v820
    %v822 = vmul.f32 %v819, %v821
    %v823 = vadd.f32 %v819, %v822
    %vm824 = vweird.f32 %v818
    %vm825 = vweird.f32 %v819
    %vm826 = vmor %vm824, %vm825
    %v827 = vsel %vm826, %v819, %v823
    %v828 = vand.u32 2147483647, %v818
    %vm829 = vcmp.eq.f32.partialorder %v828, 8.507059e+37
    %v830 = vand.u32 %v818, 2147483648
    %v831 = vor.u32 1.1754944e-38, %v830
    %v832 = vsel %vm829, %v831, %v827
    %v833 = vmul.f32 1.0, %v832
    %v834 = vmul.f32 %v833, 2.0
    %v835 = vsub.f32 %v834, 1.0
    %v836 = vmul.f32 %v833, %v592
    %838 = vrot.lane.b32.xlu0 %v835, 32
    %v839 = vpop.permute.xlu0 %838
    %v841 = vmul.f32 %v833, %v839
    %843 = vrot.lane.b32.xlu0 %v841, 32
    %v844 = vpop.permute.xlu0 %843
    %v846 = vadd.f32 %v836, %v844
    %v847 = vtanh.pop %v846
    %849 = vrot.lane.b32.xlu0 %v847, 32
    %v850 = vpop.permute.xlu0 %849
    %v852 = vmul.f32 %v833, %v850
    %v853 = vxor.u32 %v711, 2147483648
    %v854 = vmul.f32 %v853, 1.442695
    %v855 = vpow.pop %v854
    %v856 = vadd.f32 %v855, 1.0
    %v857 = vrcp.pop %v856
    %v858 = vmul.f32 %v856, %v857
    %v859 = vsub.f32 1.0, %v858
    %v860 = vmul.f32 %v857, %v859
    %v861 = vadd.f32 %v857, %v860
    %vm862 = vweird.f32 %v856
    %vm863 = vweird.f32 %v857
    %vm864 = vmor %vm862, %vm863
    %v865 = vsel %vm864, %v857, %v861
    %v866 = vand.u32 2147483647, %v856
    %vm867 = vcmp.eq.f32.partialorder %v866, 8.507059e+37
    %v868 = vand.u32 %v856, 2147483648
    %v869 = vor.u32 1.1754944e-38, %v868
    %v870 = vsel %vm867, %v869, %v865
    %v871 = vmul.f32 1.0, %v870
    %v872 = vmul.f32 %v871, 2.0
    %v873 = vsub.f32 %v872, 1.0
    %v874 = vmul.f32 %v871, %v634
    %876 = vrot.lane.b32.xlu0 %v873, 32
    %v877 = vpop.permute.xlu0 %876
    %v879 = vmul.f32 %v871, %v877
    %881 = vrot.lane.b32.xlu0 %v879, 32
    %v882 = vpop.permute.xlu0 %881
    %v884 = vadd.f32 %v874, %v882
    %v885 = vtanh.pop %v884
    %887 = vrot.lane.b32.xlu0 %v885, 32
    %v888 = vpop.permute.xlu0 %887
    %v890 = vmul.f32 %v871, %v888
    %v891 = vxor.u32 %v774, 2147483648
    %v892 = vmul.f32 %v891, 1.442695
    %v893 = vpow.pop %v892
    %v894 = vadd.f32 %v893, 1.0
    %v895 = vrcp.pop %v894
    %v896 = vmul.f32 %v894, %v895
    %v897 = vsub.f32 1.0, %v896
    %v898 = vmul.f32 %v895, %v897
    %v899 = vadd.f32 %v895, %v898
    %vm900 = vweird.f32 %v894
    %vm901 = vweird.f32 %v895
    %vm902 = vmor %vm900, %vm901
    %v903 = vsel %vm902, %v895, %v899
    %v904 = vand.u32 2147483647, %v894
    %vm905 = vcmp.eq.f32.partialorder %v904, 8.507059e+37
    %v906 = vand.u32 %v894, 2147483648
    %v907 = vor.u32 1.1754944e-38, %v906
    %v908 = vsel %vm905, %v907, %v903
    %v909 = vmul.f32 1.0, %v908
    %v910 = vmul.f32 %v909, 2.0
    %v911 = vsub.f32 %v910, 1.0
    %913 = vrot.lane.b32.xlu0 %v166, 32
    %v914 = vpop.permute.xlu0 %913
    %v916 = vmul.f32 %v909, %v914
    %918 = vrot.lane.b32.xlu0 %v911, 32
    %v919 = vpop.permute.xlu0 %918
    %v921 = vmul.f32 %v909, %v919
    %923 = vrot.lane.b32.xlu0 %v921, 32
    %v924 = vpop.permute.xlu0 %923
    %v926 = vadd.f32 %v916, %v924
    %v927 = vtanh.pop %v926
    %929 = vrot.lane.b32.xlu0 %v927, 32
    %v930 = vpop.permute.xlu0 %929
    %v932 = vmul.f32 %v909, %v930
    %v933 = vld [vmem:[#allocation2 + $0x20] sm:$0xff]
    %v934 = vpack.c.bf16 %v814, %v814
    %936 = vrot.lane.b32.xlu0 %v934, 64
    %v937 = vpop.permute.xlu0 %936
    %v939 = vsel %vm187, %v937, 0
    %941 = vmatpush.bf16.msra.mxu0 0
    %942 = vmatpush.bf16.msra.mxu0 0
    %943 = vmatpush.bf16.msra.mxu0 0
    %944 = vmatpush.bf16.msra.mxu0 0
    %945 = vmatpush.bf16.msra.mxu0 0
    %946 = vmatpush.bf16.msra.mxu0 0
    %947 = vmatpush.bf16.msra.mxu0 %v184
    %948 = vmatpush.bf16.msra.mxu0 %v183
    %949 = vmatmul.bf16.gmra.mxu0 %v939
    %v950 = vpop.f32.mrf.mxu0
    %v951 = vadd.f32 0.0, %v950
    %v952 = vpop.f32.mrf.mxu0
    %953 = vdwg.mxu0
    %v954 = vadd.f32 %v933, %v951
    %956 = vrot.lane.b32.xlu0 %v814, 64
    %v957 = vpop.permute.xlu0 %956
    %960 = vrot.lane.b32.xlu0 %v852, 96
    %v961 = vpop.permute.xlu0 %960
    %v963 = vsel %vm187, %v957, %v961
    %v964 = vpack.c.bf16 %v963, %v963
    %v966 = vsel %vm315, %v964, 0
    %968 = vmatpush.bf16.msra.mxu0 0
    %969 = vmatpush.bf16.msra.mxu0 0
    %970 = vmatpush.bf16.msra.mxu0 0
    %971 = vmatpush.bf16.msra.mxu0 0
    %972 = vmatpush.bf16.msra.mxu0 %v310
    %973 = vmatpush.bf16.msra.mxu0 %v309
    %974 = vmatpush.bf16.msra.mxu0 %v308
    %975 = vmatpush.bf16.msra.mxu0 %v307
    %976 = vmatmul.bf16.gmra.mxu0 %v966
    %v977 = vpop.f32.mrf.mxu0
    %v978 = vadd.f32 %v289, %v977
    %v979 = vpop.f32.mrf.mxu0
    %980 = vdwg.mxu0
    %981 = vrot.lane.b32.xlu0 %v852, 64
    %v982 = vpop.permute.xlu0 %981
    %985 = vrot.lane.b32.xlu0 %v890, 96
    %v986 = vpop.permute.xlu0 %985
    %v988 = vsel %vm187, %v982, %v986
    %v989 = vpack.c.bf16 %v988, %v988
    %v991 = vsel %vm315, %v989, 0
    %993 = vmatpush.bf16.msra.mxu0 0
    %994 = vmatpush.bf16.msra.mxu0 0
    %995 = vmatpush.bf16.msra.mxu0 0
    %996 = vmatpush.bf16.msra.mxu0 0
    %997 = vmatpush.bf16.msra.mxu0 %v502
    %998 = vmatpush.bf16.msra.mxu0 %v501
    %999 = vmatpush.bf16.msra.mxu0 %v500
    %1000 = vmatpush.bf16.msra.mxu0 %v499
    %1001 = vmatmul.bf16.gmra.mxu0 %v991
    %v1002 = vpop.f32.mrf.mxu0
    %v1003 = vadd.f32 %v481, %v1002
    %v1004 = vpop.f32.mrf.mxu0
    %1005 = vdwg.mxu0
    %1006 = vrot.lane.b32.xlu0 %v890, 64
    %v1007 = vpop.permute.xlu0 %1006
    %1010 = vrot.lane.b32.xlu0 %v932, 96
    %v1011 = vpop.permute.xlu0 %1010
    %v1013 = vsel %vm187, %v1007, %v1011
    %v1014 = vpack.c.bf16 %v1013, %v1013
    %v1016 = vsel %vm315, %v1014, 0
    %1018 = vmatpush.bf16.msra.mxu0 0
    %1019 = vmatpush.bf16.msra.mxu0 0
    %1020 = vmatpush.bf16.msra.mxu0 0
    %1021 = vmatpush.bf16.msra.mxu0 0
    %1022 = vmatpush.bf16.msra.mxu0 %v756
    %1023 = vmatpush.bf16.msra.mxu0 %v755
    %1024 = vmatpush.bf16.msra.mxu0 %v754
    %1025 = vmatpush.bf16.msra.mxu0 %v753
    %1026 = vmatmul.bf16.gmra.mxu0 %v1016
    %v1027 = vpop.f32.mrf.mxu0
    %v1028 = vadd.f32 %v735, %v1027
    %v1029 = vpop.f32.mrf.mxu0
    %1030 = vdwg.mxu0
    %1031 = vrot.lane.b32.xlu0 %v932, 64
    %v1032 = vpop.permute.xlu0 %1031
    %1035 = vrot.lane.b32.xlu0 %v159, 32
    %v1036 = vpop.permute.xlu0 %1035
    %v1038 = vsel %vm187, %v1032, %v1036
    %v1039 = vpack.c.bf16 %v1038, %v1038
    %s1040 = scalar_lea.vmem [#allocation4], 96
    %v1041 = vld [vmem:[%s1040] sm:$0xf]
    %v1042 = vld [vmem:[%s1040 + $0x4] sm:$0xf]
    %v1043 = vld [vmem:[%s1040 + $0x8] sm:$0xf]
    %v1044 = vld [vmem:[%s1040 + $0xc] sm:$0xf]
    %v1045 = vld [vmem:[%s1040 + $0x10] sm:$0xf]
    %v1046 = vld [vmem:[%s1040 + $0x14] sm:$0xf]
    %v1047 = vld [vmem:[%s1040 + $0x18] sm:$0xf]
    %v1048 = vld [vmem:[%s1040 + $0x1c] sm:$0xf]
    %s1049 = scalar_lea.vmem %s7, 3
    %v1050 = vld [vmem:[%s1049] sm:$0x1]
    %v1052 = vperm.slane %v1050, 0
    %v1062 = vunpack.c.l.b16 %v1041
    %v1063 = vunpack.c.l.b16 %v1042
    %v1064 = vunpack.c.l.b16 %v1043
    %v1065 = vunpack.c.l.b16 %v1044
    %v1066 = vunpack.c.l.b16 %v1045
    %v1067 = vunpack.c.l.b16 %v1046
    %v1068 = vunpack.c.l.b16 %v1047
    %v1069 = vunpack.c.l.b16 %v1048
    %v1070 = vpack.c.b16 %v1063, %v1062
    %v1071 = vpack.c.b16 %v1065, %v1064
    %v1072 = vpack.c.b16 %v1067, %v1066
    %v1073 = vpack.c.b16 %v1069, %v1068
    %v1079 = vsel %vm315, %v1039, 0
    %1081 = vmatpush.bf16.msra.mxu0 0
    %1082 = vmatpush.bf16.msra.mxu0 0
    %1083 = vmatpush.bf16.msra.mxu0 0
    %1084 = vmatpush.bf16.msra.mxu0 0
    %1085 = vmatpush.bf16.msra.mxu0 %v1073
    %1086 = vmatpush.bf16.msra.mxu0 %v1072
    %1087 = vmatpush.bf16.msra.mxu0 %v1071
    %1088 = vmatpush.bf16.msra.mxu0 %v1070
    %1089 = vmatmul.bf16.gmra.mxu0 %v1079
    %v1090 = vpop.f32.mrf.mxu0
    %v1091 = vadd.f32 %v1052, %v1090
    %v1092 = vpop.f32.mrf.mxu0
    %1093 = vdwg.mxu0
    %v1094 = vxor.u32 %v954, 2147483648
    %v1095 = vmul.f32 %v1094, 1.442695
    %v1096 = vpow.pop %v1095
    %v1097 = vadd.f32 %v1096, 1.0
    %v1098 = vrcp.pop %v1097
    %v1099 = vmul.f32 %v1097, %v1098
    %v1100 = vsub.f32 1.0, %v1099
    %v1101 = vmul.f32 %v1098, %v1100
    %v1102 = vadd.f32 %v1098, %v1101
    %vm1103 = vweird.f32 %v1097
    %vm1104 = vweird.f32 %v1098
    %vm1105 = vmor %vm1103, %vm1104
    %v1106 = vsel %vm1105, %v1098, %v1102
    %v1107 = vand.u32 2147483647, %v1097
    %vm1108 = vcmp.eq.f32.partialorder %v1107, 8.507059e+37
    %v1109 = vand.u32 %v1097, 2147483648
    %v1110 = vor.u32 1.1754944e-38, %v1109
    %v1111 = vsel %vm1108, %v1110, %v1106
    %v1112 = vmul.f32 1.0, %v1111
    %v1113 = vmul.f32 %v1112, 2.0
    %v1114 = vsub.f32 %v1113, 1.0
    %v1115 = vmul.f32 %v1112, %v808
    %1117 = vrot.lane.b32.xlu0 %v1114, 32
    %v1118 = vpop.permute.xlu0 %1117
    %v1120 = vmul.f32 %v1112, %v1118
    %1122 = vrot.lane.b32.xlu0 %v1120, 32
    %v1123 = vpop.permute.xlu0 %1122
    %v1125 = vadd.f32 %v1115, %v1123
    %v1126 = vtanh.pop %v1125
    %1128 = vrot.lane.b32.xlu0 %v1126, 32
    %v1129 = vpop.permute.xlu0 %1128
    %v1131 = vmul.f32 %v1112, %v1129
    %v1132 = vxor.u32 %v978, 2147483648
    %v1133 = vmul.f32 %v1132, 1.442695
    %v1134 = vpow.pop %v1133
    %v1135 = vadd.f32 %v1134, 1.0
    %v1136 = vrcp.pop %v1135
    %v1137 = vmul.f32 %v1135, %v1136
    %v1138 = vsub.f32 1.0, %v1137
    %v1139 = vmul.f32 %v1136, %v1138
    %v1140 = vadd.f32 %v1136, %v1139
    %vm1141 = vweird.f32 %v1135
    %vm1142 = vweird.f32 %v1136
    %vm1143 = vmor %vm1141, %vm1142
    %v1144 = vsel %vm1143, %v1136, %v1140
    %v1145 = vand.u32 2147483647, %v1135
    %vm1146 = vcmp.eq.f32.partialorder %v1145, 8.507059e+37
    %v1147 = vand.u32 %v1135, 2147483648
    %v1148 = vor.u32 1.1754944e-38, %v1147
    %v1149 = vsel %vm1146, %v1148, %v1144
    %v1150 = vmul.f32 1.0, %v1149
    %v1151 = vmul.f32 %v1150, 2.0
    %v1152 = vsub.f32 %v1151, 1.0
    %v1153 = vmul.f32 %v1150, %v846
    %1155 = vrot.lane.b32.xlu0 %v1152, 32
    %v1156 = vpop.permute.xlu0 %1155
    %v1158 = vmul.f32 %v1150, %v1156
    %1160 = vrot.lane.b32.xlu0 %v1158, 32
    %v1161 = vpop.permute.xlu0 %1160
    %v1163 = vadd.f32 %v1153, %v1161
    %v1164 = vtanh.pop %v1163
    %1166 = vrot.lane.b32.xlu0 %v1164, 32
    %v1167 = vpop.permute.xlu0 %1166
    %v1169 = vmul.f32 %v1150, %v1167
    %v1170 = vxor.u32 %v1003, 2147483648
    %v1171 = vmul.f32 %v1170, 1.442695
    %v1172 = vpow.pop %v1171
    %v1173 = vadd.f32 %v1172, 1.0
    %v1174 = vrcp.pop %v1173
    %v1175 = vmul.f32 %v1173, %v1174
    %v1176 = vsub.f32 1.0, %v1175
    %v1177 = vmul.f32 %v1174, %v1176
    %v1178 = vadd.f32 %v1174, %v1177
    %vm1179 = vweird.f32 %v1173
    %vm1180 = vweird.f32 %v1174
    %vm1181 = vmor %vm1179, %vm1180
    %v1182 = vsel %vm1181, %v1174, %v1178
    %v1183 = vand.u32 2147483647, %v1173
    %vm1184 = vcmp.eq.f32.partialorder %v1183, 8.507059e+37
    %v1185 = vand.u32 %v1173, 2147483648
    %v1186 = vor.u32 1.1754944e-38, %v1185
    %v1187 = vsel %vm1184, %v1186, %v1182
    %v1188 = vmul.f32 1.0, %v1187
    %v1189 = vmul.f32 %v1188, 2.0
    %v1190 = vsub.f32 %v1189, 1.0
    %v1191 = vmul.f32 %v1188, %v884
    %1193 = vrot.lane.b32.xlu0 %v1190, 32
    %v1194 = vpop.permute.xlu0 %1193
    %v1196 = vmul.f32 %v1188, %v1194
    %1198 = vrot.lane.b32.xlu0 %v1196, 32
    %v1199 = vpop.permute.xlu0 %1198
    %v1201 = vadd.f32 %v1191, %v1199
    %v1202 = vtanh.pop %v1201
    %1204 = vrot.lane.b32.xlu0 %v1202, 32
    %v1205 = vpop.permute.xlu0 %1204
    %v1207 = vmul.f32 %v1188, %v1205
    %v1208 = vxor.u32 %v1028, 2147483648
    %v1209 = vmul.f32 %v1208, 1.442695
    %v1210 = vpow.pop %v1209
    %v1211 = vadd.f32 %v1210, 1.0
    %v1212 = vrcp.pop %v1211
    %v1213 = vmul.f32 %v1211, %v1212
    %v1214 = vsub.f32 1.0, %v1213
    %v1215 = vmul.f32 %v1212, %v1214
    %v1216 = vadd.f32 %v1212, %v1215
    %vm1217 = vweird.f32 %v1211
    %vm1218 = vweird.f32 %v1212
    %vm1219 = vmor %vm1217, %vm1218
    %v1220 = vsel %vm1219, %v1212, %v1216
    %v1221 = vand.u32 2147483647, %v1211
    %vm1222 = vcmp.eq.f32.partialorder %v1221, 8.507059e+37
    %v1223 = vand.u32 %v1211, 2147483648
    %v1224 = vor.u32 1.1754944e-38, %v1223
    %v1225 = vsel %vm1222, %v1224, %v1220
    %v1226 = vmul.f32 1.0, %v1225
    %v1227 = vmul.f32 %v1226, 2.0
    %v1228 = vsub.f32 %v1227, 1.0
    %v1229 = vmul.f32 %v1226, %v926
    %1231 = vrot.lane.b32.xlu0 %v1228, 32
    %v1232 = vpop.permute.xlu0 %1231
    %v1234 = vmul.f32 %v1226, %v1232
    %1236 = vrot.lane.b32.xlu0 %v1234, 32
    %v1237 = vpop.permute.xlu0 %1236
    %v1239 = vadd.f32 %v1229, %v1237
    %v1240 = vtanh.pop %v1239
    %1242 = vrot.lane.b32.xlu0 %v1240, 32
    %v1243 = vpop.permute.xlu0 %1242
    %v1245 = vmul.f32 %v1226, %v1243
    %v1246 = vxor.u32 %v1091, 2147483648
    %v1247 = vmul.f32 %v1246, 1.442695
    %v1248 = vpow.pop %v1247
    %v1249 = vadd.f32 %v1248, 1.0
    %v1250 = vrcp.pop %v1249
    %v1251 = vmul.f32 %v1249, %v1250
    %v1252 = vsub.f32 1.0, %v1251
    %v1253 = vmul.f32 %v1250, %v1252
    %v1254 = vadd.f32 %v1250, %v1253
    %vm1255 = vweird.f32 %v1249
    %vm1256 = vweird.f32 %v1250
    %vm1257 = vmor %vm1255, %vm1256
    %v1258 = vsel %vm1257, %v1250, %v1254
    %v1259 = vand.u32 2147483647, %v1249
    %vm1260 = vcmp.eq.f32.partialorder %v1259, 8.507059e+37
    %v1261 = vand.u32 %v1249, 2147483648
    %v1262 = vor.u32 1.1754944e-38, %v1261
    %v1263 = vsel %vm1260, %v1262, %v1258
    %v1264 = vmul.f32 1.0, %v1263
    %v1265 = vmul.f32 %v1264, 2.0
    %v1266 = vsub.f32 %v1265, 1.0
    %1268 = vrot.lane.b32.xlu0 %v168, 32
    %v1269 = vpop.permute.xlu0 %1268
    %v1271 = vmul.f32 %v1264, %v1269
    %1273 = vrot.lane.b32.xlu0 %v1266, 32
    %v1274 = vpop.permute.xlu0 %1273
    %v1276 = vmul.f32 %v1264, %v1274
    %1278 = vrot.lane.b32.xlu0 %v1276, 32
    %v1279 = vpop.permute.xlu0 %1278
    %v1281 = vadd.f32 %v1271, %v1279
    %v1282 = vtanh.pop %v1281
    %1284 = vrot.lane.b32.xlu0 %v1282, 32
    %v1285 = vpop.permute.xlu0 %1284
    %v1287 = vmul.f32 %v1264, %v1285
    %v1288 = vld [vmem:[#allocation2 + $0x28] sm:$0xff]
    %v1289 = vpack.c.bf16 %v1131, %v1131
    %1291 = vrot.lane.b32.xlu0 %v1289, 64
    %v1292 = vpop.permute.xlu0 %1291
    %v1294 = vsel %vm187, %v1292, 0
    %1296 = vmatpush.bf16.msra.mxu0 0
    %1297 = vmatpush.bf16.msra.mxu0 0
    %1298 = vmatpush.bf16.msra.mxu0 0
    %1299 = vmatpush.bf16.msra.mxu0 0
    %1300 = vmatpush.bf16.msra.mxu0 0
    %1301 = vmatpush.bf16.msra.mxu0 0
    %1302 = vmatpush.bf16.msra.mxu0 %v184
    %1303 = vmatpush.bf16.msra.mxu0 %v183
    %1304 = vmatmul.bf16.gmra.mxu0 %v1294
    %v1305 = vpop.f32.mrf.mxu0
    %v1306 = vadd.f32 0.0, %v1305
    %v1307 = vpop.f32.mrf.mxu0
    %1308 = vdwg.mxu0
    %v1309 = vadd.f32 %v1288, %v1306
    %1311 = vrot.lane.b32.xlu0 %v1131, 64
    %v1312 = vpop.permute.xlu0 %1311
    %1315 = vrot.lane.b32.xlu0 %v1169, 96
    %v1316 = vpop.permute.xlu0 %1315
    %v1318 = vsel %vm187, %v1312, %v1316
    %v1319 = vpack.c.bf16 %v1318, %v1318
    %v1321 = vsel %vm315, %v1319, 0
    %1323 = vmatpush.bf16.msra.mxu0 0
    %1324 = vmatpush.bf16.msra.mxu0 0
    %1325 = vmatpush.bf16.msra.mxu0 0
    %1326 = vmatpush.bf16.msra.mxu0 0
    %1327 = vmatpush.bf16.msra.mxu0 %v310
    %1328 = vmatpush.bf16.msra.mxu0 %v309
    %1329 = vmatpush.bf16.msra.mxu0 %v308
    %1330 = vmatpush.bf16.msra.mxu0 %v307
    %1331 = vmatmul.bf16.gmra.mxu0 %v1321
    %v1332 = vpop.f32.mrf.mxu0
    %v1333 = vadd.f32 %v289, %v1332
    %v1334 = vpop.f32.mrf.mxu0
    %1335 = vdwg.mxu0
    %1336 = vrot.lane.b32.xlu0 %v1169, 64
    %v1337 = vpop.permute.xlu0 %1336
    %1340 = vrot.lane.b32.xlu0 %v1207, 96
    %v1341 = vpop.permute.xlu0 %1340
    %v1343 = vsel %vm187, %v1337, %v1341
    %v1344 = vpack.c.bf16 %v1343, %v1343
    %v1346 = vsel %vm315, %v1344, 0
    %1348 = vmatpush.bf16.msra.mxu0 0
    %1349 = vmatpush.bf16.msra.mxu0 0
    %1350 = vmatpush.bf16.msra.mxu0 0
    %1351 = vmatpush.bf16.msra.mxu0 0
    %1352 = vmatpush.bf16.msra.mxu0 %v502
    %1353 = vmatpush.bf16.msra.mxu0 %v501
    %1354 = vmatpush.bf16.msra.mxu0 %v500
    %1355 = vmatpush.bf16.msra.mxu0 %v499
    %1356 = vmatmul.bf16.gmra.mxu0 %v1346
    %v1357 = vpop.f32.mrf.mxu0
    %v1358 = vadd.f32 %v481, %v1357
    %v1359 = vpop.f32.mrf.mxu0
    %1360 = vdwg.mxu0
    %1361 = vrot.lane.b32.xlu0 %v1207, 64
    %v1362 = vpop.permute.xlu0 %1361
    %1365 = vrot.lane.b32.xlu0 %v1245, 96
    %v1366 = vpop.permute.xlu0 %1365
    %v1368 = vsel %vm187, %v1362, %v1366
    %v1369 = vpack.c.bf16 %v1368, %v1368
    %v1371 = vsel %vm315, %v1369, 0
    %1373 = vmatpush.bf16.msra.mxu0 0
    %1374 = vmatpush.bf16.msra.mxu0 0
    %1375 = vmatpush.bf16.msra.mxu0 0
    %1376 = vmatpush.bf16.msra.mxu0 0
    %1377 = vmatpush.bf16.msra.mxu0 %v756
    %1378 = vmatpush.bf16.msra.mxu0 %v755
    %1379 = vmatpush.bf16.msra.mxu0 %v754
    %1380 = vmatpush.bf16.msra.mxu0 %v753
    %1381 = vmatmul.bf16.gmra.mxu0 %v1371
    %v1382 = vpop.f32.mrf.mxu0
    %v1383 = vadd.f32 %v735, %v1382
    %v1384 = vpop.f32.mrf.mxu0
    %1385 = vdwg.mxu0
    %1386 = vrot.lane.b32.xlu0 %v1245, 64
    %v1387 = vpop.permute.xlu0 %1386
    %1390 = vrot.lane.b32.xlu0 %v1287, 96
    %v1391 = vpop.permute.xlu0 %1390
    %v1393 = vsel %vm187, %v1387, %v1391
    %v1394 = vpack.c.bf16 %v1393, %v1393
    %v1396 = vsel %vm315, %v1394, 0
    %1398 = vmatpush.bf16.msra.mxu0 0
    %1399 = vmatpush.bf16.msra.mxu0 0
    %1400 = vmatpush.bf16.msra.mxu0 0
    %1401 = vmatpush.bf16.msra.mxu0 0
    %1402 = vmatpush.bf16.msra.mxu0 %v1073
    %1403 = vmatpush.bf16.msra.mxu0 %v1072
    %1404 = vmatpush.bf16.msra.mxu0 %v1071
    %1405 = vmatpush.bf16.msra.mxu0 %v1070
    %1406 = vmatmul.bf16.gmra.mxu0 %v1396
    %v1407 = vpop.f32.mrf.mxu0
    %v1408 = vadd.f32 %v1052, %v1407
    %v1409 = vpop.f32.mrf.mxu0
    %1410 = vdwg.mxu0
    %v1411 = vxor.u32 %v1309, 2147483648
    %v1412 = vmul.f32 %v1411, 1.442695
    %v1413 = vpow.pop %v1412
    %v1414 = vadd.f32 %v1413, 1.0
    %v1415 = vrcp.pop %v1414
    %v1416 = vmul.f32 %v1414, %v1415
    %v1417 = vsub.f32 1.0, %v1416
    %v1418 = vmul.f32 %v1415, %v1417
    %v1419 = vadd.f32 %v1415, %v1418
    %vm1420 = vweird.f32 %v1414
    %vm1421 = vweird.f32 %v1415
    %vm1422 = vmor %vm1420, %vm1421
    %v1423 = vsel %vm1422, %v1415, %v1419
    %v1424 = vand.u32 2147483647, %v1414
    %vm1425 = vcmp.eq.f32.partialorder %v1424, 8.507059e+37
    %v1426 = vand.u32 %v1414, 2147483648
    %v1427 = vor.u32 1.1754944e-38, %v1426
    %v1428 = vsel %vm1425, %v1427, %v1423
    %v1429 = vmul.f32 1.0, %v1428
    %v1430 = vmul.f32 %v1429, 2.0
    %v1431 = vsub.f32 %v1430, 1.0
    %v1432 = vmul.f32 %v1429, %v1125
    %1434 = vrot.lane.b32.xlu0 %v1431, 32
    %v1435 = vpop.permute.xlu0 %1434
    %v1437 = vmul.f32 %v1429, %v1435
    %1439 = vrot.lane.b32.xlu0 %v1437, 32
    %v1440 = vpop.permute.xlu0 %1439
    %v1442 = vadd.f32 %v1432, %v1440
    %v1443 = vtanh.pop %v1442
    %1445 = vrot.lane.b32.xlu0 %v1443, 32
    %v1446 = vpop.permute.xlu0 %1445
    %v1448 = vmul.f32 %v1429, %v1446
    %v1449 = vxor.u32 %v1333, 2147483648
    %v1450 = vmul.f32 %v1449, 1.442695
    %v1451 = vpow.pop %v1450
    %v1452 = vadd.f32 %v1451, 1.0
    %v1453 = vrcp.pop %v1452
    %v1454 = vmul.f32 %v1452, %v1453
    %v1455 = vsub.f32 1.0, %v1454
    %v1456 = vmul.f32 %v1453, %v1455
    %v1457 = vadd.f32 %v1453, %v1456
    %vm1458 = vweird.f32 %v1452
    %vm1459 = vweird.f32 %v1453
    %vm1460 = vmor %vm1458, %vm1459
    %v1461 = vsel %vm1460, %v1453, %v1457
    %v1462 = vand.u32 2147483647, %v1452
    %vm1463 = vcmp.eq.f32.partialorder %v1462, 8.507059e+37
    %v1464 = vand.u32 %v1452, 2147483648
    %v1465 = vor.u32 1.1754944e-38, %v1464
    %v1466 = vsel %vm1463, %v1465, %v1461
    %v1467 = vmul.f32 1.0, %v1466
    %v1468 = vmul.f32 %v1467, 2.0
    %v1469 = vsub.f32 %v1468, 1.0
    %v1470 = vmul.f32 %v1467, %v1163
    %1472 = vrot.lane.b32.xlu0 %v1469, 32
    %v1473 = vpop.permute.xlu0 %1472
    %v1475 = vmul.f32 %v1467, %v1473
    %1477 = vrot.lane.b32.xlu0 %v1475, 32
    %v1478 = vpop.permute.xlu0 %1477
    %v1480 = vadd.f32 %v1470, %v1478
    %v1481 = vtanh.pop %v1480
    %1483 = vrot.lane.b32.xlu0 %v1481, 32
    %v1484 = vpop.permute.xlu0 %1483
    %v1486 = vmul.f32 %v1467, %v1484
    %v1487 = vxor.u32 %v1358, 2147483648
    %v1488 = vmul.f32 %v1487, 1.442695
    %v1489 = vpow.pop %v1488
    %v1490 = vadd.f32 %v1489, 1.0
    %v1491 = vrcp.pop %v1490
    %v1492 = vmul.f32 %v1490, %v1491
    %v1493 = vsub.f32 1.0, %v1492
    %v1494 = vmul.f32 %v1491, %v1493
    %v1495 = vadd.f32 %v1491, %v1494
    %vm1496 = vweird.f32 %v1490
    %vm1497 = vweird.f32 %v1491
    %vm1498 = vmor %vm1496, %vm1497
    %v1499 = vsel %vm1498, %v1491, %v1495
    %v1500 = vand.u32 2147483647, %v1490
    %vm1501 = vcmp.eq.f32.partialorder %v1500, 8.507059e+37
    %v1502 = vand.u32 %v1490, 2147483648
    %v1503 = vor.u32 1.1754944e-38, %v1502
    %v1504 = vsel %vm1501, %v1503, %v1499
    %v1505 = vmul.f32 1.0, %v1504
    %v1506 = vmul.f32 %v1505, 2.0
    %v1507 = vsub.f32 %v1506, 1.0
    %v1508 = vmul.f32 %v1505, %v1201
    %1510 = vrot.lane.b32.xlu0 %v1507, 32
    %v1511 = vpop.permute.xlu0 %1510
    %v1513 = vmul.f32 %v1505, %v1511
    %1515 = vrot.lane.b32.xlu0 %v1513, 32
    %v1516 = vpop.permute.xlu0 %1515
    %v1518 = vadd.f32 %v1508, %v1516
    %v1519 = vtanh.pop %v1518
    %1521 = vrot.lane.b32.xlu0 %v1519, 32
    %v1522 = vpop.permute.xlu0 %1521
    %v1524 = vmul.f32 %v1505, %v1522
    %v1525 = vxor.u32 %v1383, 2147483648
    %v1526 = vmul.f32 %v1525, 1.442695
    %v1527 = vpow.pop %v1526
    %v1528 = vadd.f32 %v1527, 1.0
    %v1529 = vrcp.pop %v1528
    %v1530 = vmul.f32 %v1528, %v1529
    %v1531 = vsub.f32 1.0, %v1530
    %v1532 = vmul.f32 %v1529, %v1531
    %v1533 = vadd.f32 %v1529, %v1532
    %vm1534 = vweird.f32 %v1528
    %vm1535 = vweird.f32 %v1529
    %vm1536 = vmor %vm1534, %vm1535
    %v1537 = vsel %vm1536, %v1529, %v1533
    %v1538 = vand.u32 2147483647, %v1528
    %vm1539 = vcmp.eq.f32.partialorder %v1538, 8.507059e+37
    %v1540 = vand.u32 %v1528, 2147483648
    %v1541 = vor.u32 1.1754944e-38, %v1540
    %v1542 = vsel %vm1539, %v1541, %v1537
    %v1543 = vmul.f32 1.0, %v1542
    %v1544 = vmul.f32 %v1543, 2.0
    %v1545 = vsub.f32 %v1544, 1.0
    %v1546 = vmul.f32 %v1543, %v1239
    %1548 = vrot.lane.b32.xlu0 %v1545, 32
    %v1549 = vpop.permute.xlu0 %1548
    %v1551 = vmul.f32 %v1543, %v1549
    %1553 = vrot.lane.b32.xlu0 %v1551, 32
    %v1554 = vpop.permute.xlu0 %1553
    %v1556 = vadd.f32 %v1546, %v1554
    %v1557 = vtanh.pop %v1556
    %1559 = vrot.lane.b32.xlu0 %v1557, 32
    %v1560 = vpop.permute.xlu0 %1559
    %v1562 = vmul.f32 %v1543, %v1560
    %v1563 = vxor.u32 %v1408, 2147483648
    %v1564 = vmul.f32 %v1563, 1.442695
    %v1565 = vpow.pop %v1564
    %v1566 = vadd.f32 %v1565, 1.0
    %v1567 = vrcp.pop %v1566
    %v1568 = vmul.f32 %v1566, %v1567
    %v1569 = vsub.f32 1.0, %v1568
    %v1570 = vmul.f32 %v1567, %v1569
    %v1571 = vadd.f32 %v1567, %v1570
    %vm1572 = vweird.f32 %v1566
    %vm1573 = vweird.f32 %v1567
    %vm1574 = vmor %vm1572, %vm1573
    %v1575 = vsel %vm1574, %v1567, %v1571
    %v1576 = vand.u32 2147483647, %v1566
    %vm1577 = vcmp.eq.f32.partialorder %v1576, 8.507059e+37
    %v1578 = vand.u32 %v1566, 2147483648
    %v1579 = vor.u32 1.1754944e-38, %v1578
    %v1580 = vsel %vm1577, %v1579, %v1575
    %v1581 = vmul.f32 1.0, %v1580
    %v1582 = vmul.f32 %v1581, 2.0
    %v1583 = vsub.f32 %v1582, 1.0
    %v1584 = vmul.f32 %v1581, %v1281
    %1586 = vrot.lane.b32.xlu0 %v1583, 32
    %v1587 = vpop.permute.xlu0 %1586
    %v1589 = vmul.f32 %v1581, %v1587
    %1591 = vrot.lane.b32.xlu0 %v1589, 32
    %v1592 = vpop.permute.xlu0 %1591
    %v1594 = vadd.f32 %v1584, %v1592
    %v1595 = vtanh.pop %v1594
    %1597 = vrot.lane.b32.xlu0 %v1595, 32
    %v1598 = vpop.permute.xlu0 %1597
    %v1600 = vmul.f32 %v1581, %v1598
    %v1601 = vld [vmem:[#allocation2 + $0x30] sm:$0xff]
    %v1602 = vpack.c.bf16 %v1448, %v1448
    %1604 = vrot.lane.b32.xlu0 %v1602, 64
    %v1605 = vpop.permute.xlu0 %1604
    %v1607 = vsel %vm187, %v1605, 0
    %1609 = vmatpush.bf16.msra.mxu0 0
    %1610 = vmatpush.bf16.msra.mxu0 0
    %1611 = vmatpush.bf16.msra.mxu0 0
    %1612 = vmatpush.bf16.msra.mxu0 0
    %1613 = vmatpush.bf16.msra.mxu0 0
    %1614 = vmatpush.bf16.msra.mxu0 0
    %1615 = vmatpush.bf16.msra.mxu0 %v184
    %1616 = vmatpush.bf16.msra.mxu0 %v183
    %1617 = vmatmul.bf16.gmra.mxu0 %v1607
    %v1618 = vpop.f32.mrf.mxu0
    %v1619 = vadd.f32 0.0, %v1618
    %v1620 = vpop.f32.mrf.mxu0
    %1621 = vdwg.mxu0
    %v1622 = vadd.f32 %v1601, %v1619
    %1624 = vrot.lane.b32.xlu0 %v1448, 64
    %v1625 = vpop.permute.xlu0 %1624
    %1628 = vrot.lane.b32.xlu0 %v1486, 96
    %v1629 = vpop.permute.xlu0 %1628
    %v1631 = vsel %vm187, %v1625, %v1629
    %v1632 = vpack.c.bf16 %v1631, %v1631
    %v1634 = vsel %vm315, %v1632, 0
    %1636 = vmatpush.bf16.msra.mxu0 0
    %1637 = vmatpush.bf16.msra.mxu0 0
    %1638 = vmatpush.bf16.msra.mxu0 0
    %1639 = vmatpush.bf16.msra.mxu0 0
    %1640 = vmatpush.bf16.msra.mxu0 %v310
    %1641 = vmatpush.bf16.msra.mxu0 %v309
    %1642 = vmatpush.bf16.msra.mxu0 %v308
    %1643 = vmatpush.bf16.msra.mxu0 %v307
    %1644 = vmatmul.bf16.gmra.mxu0 %v1634
    %v1645 = vpop.f32.mrf.mxu0
    %v1646 = vadd.f32 %v289, %v1645
    %v1647 = vpop.f32.mrf.mxu0
    %1648 = vdwg.mxu0
    %1649 = vrot.lane.b32.xlu0 %v1486, 64
    %v1650 = vpop.permute.xlu0 %1649
    %1653 = vrot.lane.b32.xlu0 %v1524, 96
    %v1654 = vpop.permute.xlu0 %1653
    %v1656 = vsel %vm187, %v1650, %v1654
    %v1657 = vpack.c.bf16 %v1656, %v1656
    %v1659 = vsel %vm315, %v1657, 0
    %1661 = vmatpush.bf16.msra.mxu0 0
    %1662 = vmatpush.bf16.msra.mxu0 0
    %1663 = vmatpush.bf16.msra.mxu0 0
    %1664 = vmatpush.bf16.msra.mxu0 0
    %1665 = vmatpush.bf16.msra.mxu0 %v502
    %1666 = vmatpush.bf16.msra.mxu0 %v501
    %1667 = vmatpush.bf16.msra.mxu0 %v500
    %1668 = vmatpush.bf16.msra.mxu0 %v499
    %1669 = vmatmul.bf16.gmra.mxu0 %v1659
    %v1670 = vpop.f32.mrf.mxu0
    %v1671 = vadd.f32 %v481, %v1670
    %v1672 = vpop.f32.mrf.mxu0
    %1673 = vdwg.mxu0
    %1674 = vrot.lane.b32.xlu0 %v1524, 64
    %v1675 = vpop.permute.xlu0 %1674
    %1678 = vrot.lane.b32.xlu0 %v1562, 96
    %v1679 = vpop.permute.xlu0 %1678
    %v1681 = vsel %vm187, %v1675, %v1679
    %v1682 = vpack.c.bf16 %v1681, %v1681
    %v1684 = vsel %vm315, %v1682, 0
    %1686 = vmatpush.bf16.msra.mxu0 0
    %1687 = vmatpush.bf16.msra.mxu0 0
    %1688 = vmatpush.bf16.msra.mxu0 0
    %1689 = vmatpush.bf16.msra.mxu0 0
    %1690 = vmatpush.bf16.msra.mxu0 %v756
    %1691 = vmatpush.bf16.msra.mxu0 %v755
    %1692 = vmatpush.bf16.msra.mxu0 %v754
    %1693 = vmatpush.bf16.msra.mxu0 %v753
    %1694 = vmatmul.bf16.gmra.mxu0 %v1684
    %v1695 = vpop.f32.mrf.mxu0
    %v1696 = vadd.f32 %v735, %v1695
    %v1697 = vpop.f32.mrf.mxu0
    %1698 = vdwg.mxu0
    %1699 = vrot.lane.b32.xlu0 %v1562, 64
    %v1700 = vpop.permute.xlu0 %1699
    %1703 = vrot.lane.b32.xlu0 %v1600, 96
    %v1704 = vpop.permute.xlu0 %1703
    %v1706 = vsel %vm187, %v1700, %v1704
    %v1707 = vpack.c.bf16 %v1706, %v1706
    %v1709 = vsel %vm315, %v1707, 0
    %1711 = vmatpush.bf16.msra.mxu0 0
    %1712 = vmatpush.bf16.msra.mxu0 0
    %1713 = vmatpush.bf16.msra.mxu0 0
    %1714 = vmatpush.bf16.msra.mxu0 0
    %1715 = vmatpush.bf16.msra.mxu0 %v1073
    %1716 = vmatpush.bf16.msra.mxu0 %v1072
    %1717 = vmatpush.bf16.msra.mxu0 %v1071
    %1718 = vmatpush.bf16.msra.mxu0 %v1070
    %1719 = vmatmul.bf16.gmra.mxu0 %v1709
    %v1720 = vpop.f32.mrf.mxu0
    %v1721 = vadd.f32 %v1052, %v1720
    %v1722 = vpop.f32.mrf.mxu0
    %1723 = vdwg.mxu0
    %v1724 = vxor.u32 %v1622, 2147483648
    %v1725 = vmul.f32 %v1724, 1.442695
    %v1726 = vpow.pop %v1725
    %v1727 = vadd.f32 %v1726, 1.0
    %v1728 = vrcp.pop %v1727
    %v1729 = vmul.f32 %v1727, %v1728
    %v1730 = vsub.f32 1.0, %v1729
    %v1731 = vmul.f32 %v1728, %v1730
    %v1732 = vadd.f32 %v1728, %v1731
    %vm1733 = vweird.f32 %v1727
    %vm1734 = vweird.f32 %v1728
    %vm1735 = vmor %vm1733, %vm1734
    %v1736 = vsel %vm1735, %v1728, %v1732
    %v1737 = vand.u32 2147483647, %v1727
    %vm1738 = vcmp.eq.f32.partialorder %v1737, 8.507059e+37
    %v1739 = vand.u32 %v1727, 2147483648
    %v1740 = vor.u32 1.1754944e-38, %v1739
    %v1741 = vsel %vm1738, %v1740, %v1736
    %v1742 = vmul.f32 1.0, %v1741
    %v1743 = vmul.f32 %v1742, 2.0
    %v1744 = vsub.f32 %v1743, 1.0
    %v1745 = vmul.f32 %v1742, %v1442
    %1747 = vrot.lane.b32.xlu0 %v1744, 32
    %v1748 = vpop.permute.xlu0 %1747
    %v1750 = vmul.f32 %v1742, %v1748
    %1752 = vrot.lane.b32.xlu0 %v1750, 32
    %v1753 = vpop.permute.xlu0 %1752
    %v1755 = vadd.f32 %v1745, %v1753
    %v1756 = vtanh.pop %v1755
    %1758 = vrot.lane.b32.xlu0 %v1756, 32
    %v1759 = vpop.permute.xlu0 %1758
    %v1761 = vmul.f32 %v1742, %v1759
    %v1762 = vxor.u32 %v1646, 2147483648
    %v1763 = vmul.f32 %v1762, 1.442695
    %v1764 = vpow.pop %v1763
    %v1765 = vadd.f32 %v1764, 1.0
    %v1766 = vrcp.pop %v1765
    %v1767 = vmul.f32 %v1765, %v1766
    %v1768 = vsub.f32 1.0, %v1767
    %v1769 = vmul.f32 %v1766, %v1768
    %v1770 = vadd.f32 %v1766, %v1769
    %vm1771 = vweird.f32 %v1765
    %vm1772 = vweird.f32 %v1766
    %vm1773 = vmor %vm1771, %vm1772
    %v1774 = vsel %vm1773, %v1766, %v1770
    %v1775 = vand.u32 2147483647, %v1765
    %vm1776 = vcmp.eq.f32.partialorder %v1775, 8.507059e+37
    %v1777 = vand.u32 %v1765, 2147483648
    %v1778 = vor.u32 1.1754944e-38, %v1777
    %v1779 = vsel %vm1776, %v1778, %v1774
    %v1780 = vmul.f32 1.0, %v1779
    %v1781 = vmul.f32 %v1780, 2.0
    %v1782 = vsub.f32 %v1781, 1.0
    %v1783 = vmul.f32 %v1780, %v1480
    %1785 = vrot.lane.b32.xlu0 %v1782, 32
    %v1786 = vpop.permute.xlu0 %1785
    %v1788 = vmul.f32 %v1780, %v1786
    %1790 = vrot.lane.b32.xlu0 %v1788, 32
    %v1791 = vpop.permute.xlu0 %1790
    %v1793 = vadd.f32 %v1783, %v1791
    %v1794 = vtanh.pop %v1793
    %1796 = vrot.lane.b32.xlu0 %v1794, 32
    %v1797 = vpop.permute.xlu0 %1796
    %v1799 = vmul.f32 %v1780, %v1797
    %v1800 = vxor.u32 %v1671, 2147483648
    %v1801 = vmul.f32 %v1800, 1.442695
    %v1802 = vpow.pop %v1801
    %v1803 = vadd.f32 %v1802, 1.0
    %v1804 = vrcp.pop %v1803
    %v1805 = vmul.f32 %v1803, %v1804
    %v1806 = vsub.f32 1.0, %v1805
    %v1807 = vmul.f32 %v1804, %v1806
    %v1808 = vadd.f32 %v1804, %v1807
    %vm1809 = vweird.f32 %v1803
    %vm1810 = vweird.f32 %v1804
    %vm1811 = vmor %vm1809, %vm1810
    %v1812 = vsel %vm1811, %v1804, %v1808
    %v1813 = vand.u32 2147483647, %v1803
    %vm1814 = vcmp.eq.f32.partialorder %v1813, 8.507059e+37
    %v1815 = vand.u32 %v1803, 2147483648
    %v1816 = vor.u32 1.1754944e-38, %v1815
    %v1817 = vsel %vm1814, %v1816, %v1812
    %v1818 = vmul.f32 1.0, %v1817
    %v1819 = vmul.f32 %v1818, 2.0
    %v1820 = vsub.f32 %v1819, 1.0
    %v1821 = vmul.f32 %v1818, %v1518
    %1823 = vrot.lane.b32.xlu0 %v1820, 32
    %v1824 = vpop.permute.xlu0 %1823
    %v1826 = vmul.f32 %v1818, %v1824
    %1828 = vrot.lane.b32.xlu0 %v1826, 32
    %v1829 = vpop.permute.xlu0 %1828
    %v1831 = vadd.f32 %v1821, %v1829
    %v1832 = vtanh.pop %v1831
    %1834 = vrot.lane.b32.xlu0 %v1832, 32
    %v1835 = vpop.permute.xlu0 %1834
    %v1837 = vmul.f32 %v1818, %v1835
    %v1838 = vxor.u32 %v1696, 2147483648
    %v1839 = vmul.f32 %v1838, 1.442695
    %v1840 = vpow.pop %v1839
    %v1841 = vadd.f32 %v1840, 1.0
    %v1842 = vrcp.pop %v1841
    %v1843 = vmul.f32 %v1841, %v1842
    %v1844 = vsub.f32 1.0, %v1843
    %v1845 = vmul.f32 %v1842, %v1844
    %v1846 = vadd.f32 %v1842, %v1845
    %vm1847 = vweird.f32 %v1841
    %vm1848 = vweird.f32 %v1842
    %vm1849 = vmor %vm1847, %vm1848
    %v1850 = vsel %vm1849, %v1842, %v1846
    %v1851 = vand.u32 2147483647, %v1841
    %vm1852 = vcmp.eq.f32.partialorder %v1851, 8.507059e+37
    %v1853 = vand.u32 %v1841, 2147483648
    %v1854 = vor.u32 1.1754944e-38, %v1853
    %v1855 = vsel %vm1852, %v1854, %v1850
    %v1856 = vmul.f32 1.0, %v1855
    %v1857 = vmul.f32 %v1856, 2.0
    %v1858 = vsub.f32 %v1857, 1.0
    %v1859 = vmul.f32 %v1856, %v1556
    %1861 = vrot.lane.b32.xlu0 %v1858, 32
    %v1862 = vpop.permute.xlu0 %1861
    %v1864 = vmul.f32 %v1856, %v1862
    %1866 = vrot.lane.b32.xlu0 %v1864, 32
    %v1867 = vpop.permute.xlu0 %1866
    %v1869 = vadd.f32 %v1859, %v1867
    %v1870 = vtanh.pop %v1869
    %1872 = vrot.lane.b32.xlu0 %v1870, 32
    %v1873 = vpop.permute.xlu0 %1872
    %v1875 = vmul.f32 %v1856, %v1873
    %v1876 = vxor.u32 %v1721, 2147483648
    %v1877 = vmul.f32 %v1876, 1.442695
    %v1878 = vpow.pop %v1877
    %v1879 = vadd.f32 %v1878, 1.0
    %v1880 = vrcp.pop %v1879
    %v1881 = vmul.f32 %v1879, %v1880
    %v1882 = vsub.f32 1.0, %v1881
    %v1883 = vmul.f32 %v1880, %v1882
    %v1884 = vadd.f32 %v1880, %v1883
    %vm1885 = vweird.f32 %v1879
    %vm1886 = vweird.f32 %v1880
    %vm1887 = vmor %vm1885, %vm1886
    %v1888 = vsel %vm1887, %v1880, %v1884
    %v1889 = vand.u32 2147483647, %v1879
    %vm1890 = vcmp.eq.f32.partialorder %v1889, 8.507059e+37
    %v1891 = vand.u32 %v1879, 2147483648
    %v1892 = vor.u32 1.1754944e-38, %v1891
    %v1893 = vsel %vm1890, %v1892, %v1888
    %v1894 = vmul.f32 1.0, %v1893
    %v1895 = vmul.f32 %v1894, 2.0
    %v1896 = vsub.f32 %v1895, 1.0
    %v1897 = vmul.f32 %v1894, %v1594
    %1899 = vrot.lane.b32.xlu0 %v1896, 32
    %v1900 = vpop.permute.xlu0 %1899
    %v1902 = vmul.f32 %v1894, %v1900
    %1904 = vrot.lane.b32.xlu0 %v1902, 32
    %v1905 = vpop.permute.xlu0 %1904
    %v1907 = vadd.f32 %v1897, %v1905
    %v1908 = vtanh.pop %v1907
    %1910 = vrot.lane.b32.xlu0 %v1908, 32
    %v1911 = vpop.permute.xlu0 %1910
    %v1913 = vmul.f32 %v1894, %v1911
    %v1914 = vld [vmem:[#allocation2 + $0x38] sm:$0xff]
    %v1915 = vpack.c.bf16 %v1761, %v1761
    %1917 = vrot.lane.b32.xlu0 %v1915, 64
    %v1918 = vpop.permute.xlu0 %1917
    %v1920 = vsel %vm187, %v1918, 0
    %1922 = vmatpush.bf16.msra.mxu0 0
    %1923 = vmatpush.bf16.msra.mxu0 0
    %1924 = vmatpush.bf16.msra.mxu0 0
    %1925 = vmatpush.bf16.msra.mxu0 0
    %1926 = vmatpush.bf16.msra.mxu0 0
    %1927 = vmatpush.bf16.msra.mxu0 0
    %1928 = vmatpush.bf16.msra.mxu0 %v184
    %1929 = vmatpush.bf16.msra.mxu0 %v183
    %1930 = vmatmul.bf16.gmra.mxu0 %v1920
    %v1931 = vpop.f32.mrf.mxu0
    %v1932 = vadd.f32 0.0, %v1931
    %v1933 = vpop.f32.mrf.mxu0
    %1934 = vdwg.mxu0
    %v1935 = vadd.f32 %v1914, %v1932
    %1937 = vrot.lane.b32.xlu0 %v1761, 64
    %v1938 = vpop.permute.xlu0 %1937
    %1941 = vrot.lane.b32.xlu0 %v1799, 96
    %v1942 = vpop.permute.xlu0 %1941
    %v1944 = vsel %vm187, %v1938, %v1942
    %v1945 = vpack.c.bf16 %v1944, %v1944
    %v1947 = vsel %vm315, %v1945, 0
    %1949 = vmatpush.bf16.msra.mxu0 0
    %1950 = vmatpush.bf16.msra.mxu0 0
    %1951 = vmatpush.bf16.msra.mxu0 0
    %1952 = vmatpush.bf16.msra.mxu0 0
    %1953 = vmatpush.bf16.msra.mxu0 %v310
    %1954 = vmatpush.bf16.msra.mxu0 %v309
    %1955 = vmatpush.bf16.msra.mxu0 %v308
    %1956 = vmatpush.bf16.msra.mxu0 %v307
    %1957 = vmatmul.bf16.gmra.mxu0 %v1947
    %v1958 = vpop.f32.mrf.mxu0
    %v1959 = vadd.f32 %v289, %v1958
    %v1960 = vpop.f32.mrf.mxu0
    %1961 = vdwg.mxu0
    %1962 = vrot.lane.b32.xlu0 %v1799, 64
    %v1963 = vpop.permute.xlu0 %1962
    %1966 = vrot.lane.b32.xlu0 %v1837, 96
    %v1967 = vpop.permute.xlu0 %1966
    %v1969 = vsel %vm187, %v1963, %v1967
    %v1970 = vpack.c.bf16 %v1969, %v1969
    %v1972 = vsel %vm315, %v1970, 0
    %1974 = vmatpush.bf16.msra.mxu0 0
    %1975 = vmatpush.bf16.msra.mxu0 0
    %1976 = vmatpush.bf16.msra.mxu0 0
    %1977 = vmatpush.bf16.msra.mxu0 0
    %1978 = vmatpush.bf16.msra.mxu0 %v502
    %1979 = vmatpush.bf16.msra.mxu0 %v501
    %1980 = vmatpush.bf16.msra.mxu0 %v500
    %1981 = vmatpush.bf16.msra.mxu0 %v499
    %1982 = vmatmul.bf16.gmra.mxu0 %v1972
    %v1983 = vpop.f32.mrf.mxu0
    %v1984 = vadd.f32 %v481, %v1983
    %v1985 = vpop.f32.mrf.mxu0
    %1986 = vdwg.mxu0
    %1987 = vrot.lane.b32.xlu0 %v1837, 64
    %v1988 = vpop.permute.xlu0 %1987
    %1991 = vrot.lane.b32.xlu0 %v1875, 96
    %v1992 = vpop.permute.xlu0 %1991
    %v1994 = vsel %vm187, %v1988, %v1992
    %v1995 = vpack.c.bf16 %v1994, %v1994
    %v1997 = vsel %vm315, %v1995, 0
    %1999 = vmatpush.bf16.msra.mxu0 0
    %2000 = vmatpush.bf16.msra.mxu0 0
    %2001 = vmatpush.bf16.msra.mxu0 0
    %2002 = vmatpush.bf16.msra.mxu0 0
    %2003 = vmatpush.bf16.msra.mxu0 %v756
    %2004 = vmatpush.bf16.msra.mxu0 %v755
    %2005 = vmatpush.bf16.msra.mxu0 %v754
    %2006 = vmatpush.bf16.msra.mxu0 %v753
    %2007 = vmatmul.bf16.gmra.mxu0 %v1997
    %v2008 = vpop.f32.mrf.mxu0
    %v2009 = vadd.f32 %v735, %v2008
    %v2010 = vpop.f32.mrf.mxu0
    %2011 = vdwg.mxu0
    %2012 = vrot.lane.b32.xlu0 %v1875, 64
    %v2013 = vpop.permute.xlu0 %2012
    %2016 = vrot.lane.b32.xlu0 %v1913, 96
    %v2017 = vpop.permute.xlu0 %2016
    %v2019 = vsel %vm187, %v2013, %v2017
    %v2020 = vpack.c.bf16 %v2019, %v2019
    %v2022 = vsel %vm315, %v2020, 0
    %2024 = vmatpush.bf16.msra.mxu0 0
    %2025 = vmatpush.bf16.msra.mxu0 0
    %2026 = vmatpush.bf16.msra.mxu0 0
    %2027 = vmatpush.bf16.msra.mxu0 0
    %2028 = vmatpush.bf16.msra.mxu0 %v1073
    %2029 = vmatpush.bf16.msra.mxu0 %v1072
    %2030 = vmatpush.bf16.msra.mxu0 %v1071
    %2031 = vmatpush.bf16.msra.mxu0 %v1070
    %2032 = vmatmul.bf16.gmra.mxu0 %v2022
    %v2033 = vpop.f32.mrf.mxu0
    %v2034 = vadd.f32 %v1052, %v2033
    %v2035 = vpop.f32.mrf.mxu0
    %2036 = vdwg.mxu0
    %v2037 = vxor.u32 %v1935, 2147483648
    %v2038 = vmul.f32 %v2037, 1.442695
    %v2039 = vpow.pop %v2038
    %v2040 = vadd.f32 %v2039, 1.0
    %v2041 = vrcp.pop %v2040
    %v2042 = vmul.f32 %v2040, %v2041
    %v2043 = vsub.f32 1.0, %v2042
    %v2044 = vmul.f32 %v2041, %v2043
    %v2045 = vadd.f32 %v2041, %v2044
    %vm2046 = vweird.f32 %v2040
    %vm2047 = vweird.f32 %v2041
    %vm2048 = vmor %vm2046, %vm2047
    %v2049 = vsel %vm2048, %v2041, %v2045
    %v2050 = vand.u32 2147483647, %v2040
    %vm2051 = vcmp.eq.f32.partialorder %v2050, 8.507059e+37
    %v2052 = vand.u32 %v2040, 2147483648
    %v2053 = vor.u32 1.1754944e-38, %v2052
    %v2054 = vsel %vm2051, %v2053, %v2049
    %v2055 = vmul.f32 1.0, %v2054
    %v2056 = vmul.f32 %v2055, 2.0
    %v2057 = vsub.f32 %v2056, 1.0
    %v2058 = vmul.f32 %v2055, %v1755
    %2060 = vrot.lane.b32.xlu0 %v2057, 32
    %v2061 = vpop.permute.xlu0 %2060
    %v2063 = vmul.f32 %v2055, %v2061
    %2065 = vrot.lane.b32.xlu0 %v2063, 32
    %v2066 = vpop.permute.xlu0 %2065
    %v2068 = vadd.f32 %v2058, %v2066
    %v2069 = vtanh.pop %v2068
    %2071 = vrot.lane.b32.xlu0 %v2069, 32
    %v2072 = vpop.permute.xlu0 %2071
    %v2074 = vmul.f32 %v2055, %v2072
    %v2075 = vxor.u32 %v1959, 2147483648
    %v2076 = vmul.f32 %v2075, 1.442695
    %v2077 = vpow.pop %v2076
    %v2078 = vadd.f32 %v2077, 1.0
    %v2079 = vrcp.pop %v2078
    %v2080 = vmul.f32 %v2078, %v2079
    %v2081 = vsub.f32 1.0, %v2080
    %v2082 = vmul.f32 %v2079, %v2081
    %v2083 = vadd.f32 %v2079, %v2082
    %vm2084 = vweird.f32 %v2078
    %vm2085 = vweird.f32 %v2079
    %vm2086 = vmor %vm2084, %vm2085
    %v2087 = vsel %vm2086, %v2079, %v2083
    %v2088 = vand.u32 2147483647, %v2078
    %vm2089 = vcmp.eq.f32.partialorder %v2088, 8.507059e+37
    %v2090 = vand.u32 %v2078, 2147483648
    %v2091 = vor.u32 1.1754944e-38, %v2090
    %v2092 = vsel %vm2089, %v2091, %v2087
    %v2093 = vmul.f32 1.0, %v2092
    %v2094 = vmul.f32 %v2093, 2.0
    %v2095 = vsub.f32 %v2094, 1.0
    %v2096 = vmul.f32 %v2093, %v1793
    %2098 = vrot.lane.b32.xlu0 %v2095, 32
    %v2099 = vpop.permute.xlu0 %2098
    %v2101 = vmul.f32 %v2093, %v2099
    %2103 = vrot.lane.b32.xlu0 %v2101, 32
    %v2104 = vpop.permute.xlu0 %2103
    %v2106 = vadd.f32 %v2096, %v2104
    %v2107 = vtanh.pop %v2106
    %2109 = vrot.lane.b32.xlu0 %v2107, 32
    %v2110 = vpop.permute.xlu0 %2109
    %v2112 = vmul.f32 %v2093, %v2110
    %v2113 = vxor.u32 %v1984, 2147483648
    %v2114 = vmul.f32 %v2113, 1.442695
    %v2115 = vpow.pop %v2114
    %v2116 = vadd.f32 %v2115, 1.0
    %v2117 = vrcp.pop %v2116
    %v2118 = vmul.f32 %v2116, %v2117
    %v2119 = vsub.f32 1.0, %v2118
    %v2120 = vmul.f32 %v2117, %v2119
    %v2121 = vadd.f32 %v2117, %v2120
    %vm2122 = vweird.f32 %v2116
    %vm2123 = vweird.f32 %v2117
    %vm2124 = vmor %vm2122, %vm2123
    %v2125 = vsel %vm2124, %v2117, %v2121
    %v2126 = vand.u32 2147483647, %v2116
    %vm2127 = vcmp.eq.f32.partialorder %v2126, 8.507059e+37
    %v2128 = vand.u32 %v2116, 2147483648
    %v2129 = vor.u32 1.1754944e-38, %v2128
    %v2130 = vsel %vm2127, %v2129, %v2125
    %v2131 = vmul.f32 1.0, %v2130
    %v2132 = vmul.f32 %v2131, 2.0
    %v2133 = vsub.f32 %v2132, 1.0
    %v2134 = vmul.f32 %v2131, %v1831
    %2136 = vrot.lane.b32.xlu0 %v2133, 32
    %v2137 = vpop.permute.xlu0 %2136
    %v2139 = vmul.f32 %v2131, %v2137
    %2141 = vrot.lane.b32.xlu0 %v2139, 32
    %v2142 = vpop.permute.xlu0 %2141
    %v2144 = vadd.f32 %v2134, %v2142
    %v2145 = vtanh.pop %v2144
    %2147 = vrot.lane.b32.xlu0 %v2145, 32
    %v2148 = vpop.permute.xlu0 %2147
    %v2150 = vmul.f32 %v2131, %v2148
    %v2151 = vxor.u32 %v2009, 2147483648
    %v2152 = vmul.f32 %v2151, 1.442695
    %v2153 = vpow.pop %v2152
    %v2154 = vadd.f32 %v2153, 1.0
    %v2155 = vrcp.pop %v2154
    %v2156 = vmul.f32 %v2154, %v2155
    %v2157 = vsub.f32 1.0, %v2156
    %v2158 = vmul.f32 %v2155, %v2157
    %v2159 = vadd.f32 %v2155, %v2158
    %vm2160 = vweird.f32 %v2154
    %vm2161 = vweird.f32 %v2155
    %vm2162 = vmor %vm2160, %vm2161
    %v2163 = vsel %vm2162, %v2155, %v2159
    %v2164 = vand.u32 2147483647, %v2154
    %vm2165 = vcmp.eq.f32.partialorder %v2164, 8.507059e+37
    %v2166 = vand.u32 %v2154, 2147483648
    %v2167 = vor.u32 1.1754944e-38, %v2166
    %v2168 = vsel %vm2165, %v2167, %v2163
    %v2169 = vmul.f32 1.0, %v2168
    %v2170 = vmul.f32 %v2169, 2.0
    %v2171 = vsub.f32 %v2170, 1.0
    %v2172 = vmul.f32 %v2169, %v1869
    %2174 = vrot.lane.b32.xlu0 %v2171, 32
    %v2175 = vpop.permute.xlu0 %2174
    %v2177 = vmul.f32 %v2169, %v2175
    %2179 = vrot.lane.b32.xlu0 %v2177, 32
    %v2180 = vpop.permute.xlu0 %2179
    %v2182 = vadd.f32 %v2172, %v2180
    %v2183 = vtanh.pop %v2182
    %2185 = vrot.lane.b32.xlu0 %v2183, 32
    %v2186 = vpop.permute.xlu0 %2185
    %v2188 = vmul.f32 %v2169, %v2186
    %v2189 = vxor.u32 %v2034, 2147483648
    %v2190 = vmul.f32 %v2189, 1.442695
    %v2191 = vpow.pop %v2190
    %v2192 = vadd.f32 %v2191, 1.0
    %v2193 = vrcp.pop %v2192
    %v2194 = vmul.f32 %v2192, %v2193
    %v2195 = vsub.f32 1.0, %v2194
    %v2196 = vmul.f32 %v2193, %v2195
    %v2197 = vadd.f32 %v2193, %v2196
    %vm2198 = vweird.f32 %v2192
    %vm2199 = vweird.f32 %v2193
    %vm2200 = vmor %vm2198, %vm2199
    %v2201 = vsel %vm2200, %v2193, %v2197
    %v2202 = vand.u32 2147483647, %v2192
    %vm2203 = vcmp.eq.f32.partialorder %v2202, 8.507059e+37
    %v2204 = vand.u32 %v2192, 2147483648
    %v2205 = vor.u32 1.1754944e-38, %v2204
    %v2206 = vsel %vm2203, %v2205, %v2201
    %v2207 = vmul.f32 1.0, %v2206
    %v2208 = vmul.f32 %v2207, 2.0
    %v2209 = vsub.f32 %v2208, 1.0
    %v2210 = vmul.f32 %v2207, %v1907
    %2212 = vrot.lane.b32.xlu0 %v2209, 32
    %v2213 = vpop.permute.xlu0 %2212
    %v2215 = vmul.f32 %v2207, %v2213
    %2217 = vrot.lane.b32.xlu0 %v2215, 32
    %v2218 = vpop.permute.xlu0 %2217
    %v2220 = vadd.f32 %v2210, %v2218
    %v2221 = vtanh.pop %v2220
    %2223 = vrot.lane.b32.xlu0 %v2221, 32
    %v2224 = vpop.permute.xlu0 %2223
    %v2226 = vmul.f32 %v2207, %v2224
    %2228 = vrot.lane.b32.xlu0 %v2074, 64
    %v2229 = vpop.permute.xlu0 %2228
    %2232 = vrot.lane.b32.xlu0 %v2112, 96
    %v2233 = vpop.permute.xlu0 %2232
    %v2235 = vsel %vm187, %v2229, %v2233
    %v2236 = vpack.c.bf16 %v2235, %v2235
    %v2238 = vsel %vm315, %v2236, 0
    %2240 = vmatpush.bf16.msra.mxu0 0
    %2241 = vmatpush.bf16.msra.mxu0 0
    %2242 = vmatpush.bf16.msra.mxu0 0
    %2243 = vmatpush.bf16.msra.mxu0 0
    %2244 = vmatpush.bf16.msra.mxu0 %v310
    %2245 = vmatpush.bf16.msra.mxu0 %v309
    %2246 = vmatpush.bf16.msra.mxu0 %v308
    %2247 = vmatpush.bf16.msra.mxu0 %v307
    %2248 = vmatmul.bf16.gmra.mxu0 %v2238
    %v2249 = vpop.f32.mrf.mxu0
    %v2250 = vadd.f32 %v289, %v2249
    %v2251 = vpop.f32.mrf.mxu0
    %2252 = vdwg.mxu0
    %2253 = vrot.lane.b32.xlu0 %v2112, 64
    %v2254 = vpop.permute.xlu0 %2253
    %2257 = vrot.lane.b32.xlu0 %v2150, 96
    %v2258 = vpop.permute.xlu0 %2257
    %v2260 = vsel %vm187, %v2254, %v2258
    %v2261 = vpack.c.bf16 %v2260, %v2260
    %v2263 = vsel %vm315, %v2261, 0
    %2265 = vmatpush.bf16.msra.mxu0 0
    %2266 = vmatpush.bf16.msra.mxu0 0
    %2267 = vmatpush.bf16.msra.mxu0 0
    %2268 = vmatpush.bf16.msra.mxu0 0
    %2269 = vmatpush.bf16.msra.mxu0 %v502
    %2270 = vmatpush.bf16.msra.mxu0 %v501
    %2271 = vmatpush.bf16.msra.mxu0 %v500
    %2272 = vmatpush.bf16.msra.mxu0 %v499
    %2273 = vmatmul.bf16.gmra.mxu0 %v2263
    %v2274 = vpop.f32.mrf.mxu0
    %v2275 = vadd.f32 %v481, %v2274
    %v2276 = vpop.f32.mrf.mxu0
    %2277 = vdwg.mxu0
    %2278 = vrot.lane.b32.xlu0 %v2150, 64
    %v2279 = vpop.permute.xlu0 %2278
    %2282 = vrot.lane.b32.xlu0 %v2188, 96
    %v2283 = vpop.permute.xlu0 %2282
    %v2285 = vsel %vm187, %v2279, %v2283
    %v2286 = vpack.c.bf16 %v2285, %v2285
    %v2288 = vsel %vm315, %v2286, 0
    %2290 = vmatpush.bf16.msra.mxu0 0
    %2291 = vmatpush.bf16.msra.mxu0 0
    %2292 = vmatpush.bf16.msra.mxu0 0
    %2293 = vmatpush.bf16.msra.mxu0 0
    %2294 = vmatpush.bf16.msra.mxu0 %v756
    %2295 = vmatpush.bf16.msra.mxu0 %v755
    %2296 = vmatpush.bf16.msra.mxu0 %v754
    %2297 = vmatpush.bf16.msra.mxu0 %v753
    %2298 = vmatmul.bf16.gmra.mxu0 %v2288
    %v2299 = vpop.f32.mrf.mxu0
    %v2300 = vadd.f32 %v735, %v2299
    %v2301 = vpop.f32.mrf.mxu0
    %2302 = vdwg.mxu0
    %2303 = vrot.lane.b32.xlu0 %v2188, 64
    %v2304 = vpop.permute.xlu0 %2303
    %2307 = vrot.lane.b32.xlu0 %v2226, 96
    %v2308 = vpop.permute.xlu0 %2307
    %v2310 = vsel %vm187, %v2304, %v2308
    %v2311 = vpack.c.bf16 %v2310, %v2310
    %v2313 = vsel %vm315, %v2311, 0
    %2315 = vmatpush.bf16.msra.mxu0 0
    %2316 = vmatpush.bf16.msra.mxu0 0
    %2317 = vmatpush.bf16.msra.mxu0 0
    %2318 = vmatpush.bf16.msra.mxu0 0
    %2319 = vmatpush.bf16.msra.mxu0 %v1073
    %2320 = vmatpush.bf16.msra.mxu0 %v1072
    %2321 = vmatpush.bf16.msra.mxu0 %v1071
    %2322 = vmatpush.bf16.msra.mxu0 %v1070
    %2323 = vmatmul.bf16.gmra.mxu0 %v2313
    %v2324 = vpop.f32.mrf.mxu0
    %v2325 = vadd.f32 %v1052, %v2324
    %v2326 = vpop.f32.mrf.mxu0
    %2327 = vdwg.mxu0
    %v2328 = vxor.u32 %v2250, 2147483648
    %v2329 = vmul.f32 %v2328, 1.442695
    %v2330 = vpow.pop %v2329
    %v2331 = vadd.f32 %v2330, 1.0
    %v2332 = vrcp.pop %v2331
    %v2333 = vmul.f32 %v2331, %v2332
    %v2334 = vsub.f32 1.0, %v2333
    %v2335 = vmul.f32 %v2332, %v2334
    %v2336 = vadd.f32 %v2332, %v2335
    %vm2337 = vweird.f32 %v2331
    %vm2338 = vweird.f32 %v2332
    %vm2339 = vmor %vm2337, %vm2338
    %v2340 = vsel %vm2339, %v2332, %v2336
    %v2341 = vand.u32 2147483647, %v2331
    %vm2342 = vcmp.eq.f32.partialorder %v2341, 8.507059e+37
    %v2343 = vand.u32 %v2331, 2147483648
    %v2344 = vor.u32 1.1754944e-38, %v2343
    %v2345 = vsel %vm2342, %v2344, %v2340
    %v2346 = vmul.f32 1.0, %v2345
    %v2347 = vmul.f32 %v2346, 2.0
    %v2348 = vsub.f32 %v2347, 1.0
    %v2349 = vmul.f32 %v2346, %v2106
    %2351 = vrot.lane.b32.xlu0 %v2348, 32
    %v2352 = vpop.permute.xlu0 %2351
    %v2354 = vmul.f32 %v2346, %v2352
    %2356 = vrot.lane.b32.xlu0 %v2354, 32
    %v2357 = vpop.permute.xlu0 %2356
    %v2359 = vadd.f32 %v2349, %v2357
    %v2360 = vtanh.pop %v2359
    %2362 = vrot.lane.b32.xlu0 %v2360, 32
    %v2363 = vpop.permute.xlu0 %2362
    %v2365 = vmul.f32 %v2346, %v2363
    %v2366 = vxor.u32 %v2275, 2147483648
    %v2367 = vmul.f32 %v2366, 1.442695
    %v2368 = vpow.pop %v2367
    %v2369 = vadd.f32 %v2368, 1.0
    %v2370 = vrcp.pop %v2369
    %v2371 = vmul.f32 %v2369, %v2370
    %v2372 = vsub.f32 1.0, %v2371
    %v2373 = vmul.f32 %v2370, %v2372
    %v2374 = vadd.f32 %v2370, %v2373
    %vm2375 = vweird.f32 %v2369
    %vm2376 = vweird.f32 %v2370
    %vm2377 = vmor %vm2375, %vm2376
    %v2378 = vsel %vm2377, %v2370, %v2374
    %v2379 = vand.u32 2147483647, %v2369
    %vm2380 = vcmp.eq.f32.partialorder %v2379, 8.507059e+37
    %v2381 = vand.u32 %v2369, 2147483648
    %v2382 = vor.u32 1.1754944e-38, %v2381
    %v2383 = vsel %vm2380, %v2382, %v2378
    %v2384 = vmul.f32 1.0, %v2383
    %v2385 = vmul.f32 %v2384, 2.0
    %v2386 = vsub.f32 %v2385, 1.0
    %v2387 = vmul.f32 %v2384, %v2144
    %2389 = vrot.lane.b32.xlu0 %v2386, 32
    %v2390 = vpop.permute.xlu0 %2389
    %v2392 = vmul.f32 %v2384, %v2390
    %2394 = vrot.lane.b32.xlu0 %v2392, 32
    %v2395 = vpop.permute.xlu0 %2394
    %v2397 = vadd.f32 %v2387, %v2395
    %v2398 = vtanh.pop %v2397
    %2400 = vrot.lane.b32.xlu0 %v2398, 32
    %v2401 = vpop.permute.xlu0 %2400
    %v2403 = vmul.f32 %v2384, %v2401
    %v2404 = vxor.u32 %v2300, 2147483648
    %v2405 = vmul.f32 %v2404, 1.442695
    %v2406 = vpow.pop %v2405
    %v2407 = vadd.f32 %v2406, 1.0
    %v2408 = vrcp.pop %v2407
    %v2409 = vmul.f32 %v2407, %v2408
    %v2410 = vsub.f32 1.0, %v2409
    %v2411 = vmul.f32 %v2408, %v2410
    %v2412 = vadd.f32 %v2408, %v2411
    %vm2413 = vweird.f32 %v2407
    %vm2414 = vweird.f32 %v2408
    %vm2415 = vmor %vm2413, %vm2414
    %v2416 = vsel %vm2415, %v2408, %v2412
    %v2417 = vand.u32 2147483647, %v2407
    %vm2418 = vcmp.eq.f32.partialorder %v2417, 8.507059e+37
    %v2419 = vand.u32 %v2407, 2147483648
    %v2420 = vor.u32 1.1754944e-38, %v2419
    %v2421 = vsel %vm2418, %v2420, %v2416
    %v2422 = vmul.f32 1.0, %v2421
    %v2423 = vmul.f32 %v2422, 2.0
    %v2424 = vsub.f32 %v2423, 1.0
    %v2425 = vmul.f32 %v2422, %v2182
    %2427 = vrot.lane.b32.xlu0 %v2424, 32
    %v2428 = vpop.permute.xlu0 %2427
    %v2430 = vmul.f32 %v2422, %v2428
    %2432 = vrot.lane.b32.xlu0 %v2430, 32
    %v2433 = vpop.permute.xlu0 %2432
    %v2435 = vadd.f32 %v2425, %v2433
    %v2436 = vtanh.pop %v2435
    %2438 = vrot.lane.b32.xlu0 %v2436, 32
    %v2439 = vpop.permute.xlu0 %2438
    %v2441 = vmul.f32 %v2422, %v2439
    %v2442 = vxor.u32 %v2325, 2147483648
    %v2443 = vmul.f32 %v2442, 1.442695
    %v2444 = vpow.pop %v2443
    %v2445 = vadd.f32 %v2444, 1.0
    %v2446 = vrcp.pop %v2445
    %v2447 = vmul.f32 %v2445, %v2446
    %v2448 = vsub.f32 1.0, %v2447
    %v2449 = vmul.f32 %v2446, %v2448
    %v2450 = vadd.f32 %v2446, %v2449
    %vm2451 = vweird.f32 %v2445
    %vm2452 = vweird.f32 %v2446
    %vm2453 = vmor %vm2451, %vm2452
    %v2454 = vsel %vm2453, %v2446, %v2450
    %v2455 = vand.u32 2147483647, %v2445
    %vm2456 = vcmp.eq.f32.partialorder %v2455, 8.507059e+37
    %v2457 = vand.u32 %v2445, 2147483648
    %v2458 = vor.u32 1.1754944e-38, %v2457
    %v2459 = vsel %vm2456, %v2458, %v2454
    %v2460 = vmul.f32 1.0, %v2459
    %v2461 = vmul.f32 %v2460, 2.0
    %v2462 = vsub.f32 %v2461, 1.0
    %v2463 = vmul.f32 %v2460, %v2220
    %2465 = vrot.lane.b32.xlu0 %v2462, 32
    %v2466 = vpop.permute.xlu0 %2465
    %v2468 = vmul.f32 %v2460, %v2466
    %2470 = vrot.lane.b32.xlu0 %v2468, 32
    %v2471 = vpop.permute.xlu0 %2470
    %v2473 = vadd.f32 %v2463, %v2471
    %v2474 = vtanh.pop %v2473
    %2476 = vrot.lane.b32.xlu0 %v2474, 32
    %v2477 = vpop.permute.xlu0 %2476
    %v2479 = vmul.f32 %v2460, %v2477
    %2481 = vrot.lane.b32.xlu0 %v2365, 64
    %v2482 = vpop.permute.xlu0 %2481
    %2485 = vrot.lane.b32.xlu0 %v2403, 96
    %v2486 = vpop.permute.xlu0 %2485
    %v2488 = vsel %vm187, %v2482, %v2486
    %v2489 = vpack.c.bf16 %v2488, %v2488
    %v2491 = vsel %vm315, %v2489, 0
    %2493 = vmatpush.bf16.msra.mxu0 0
    %2494 = vmatpush.bf16.msra.mxu0 0
    %2495 = vmatpush.bf16.msra.mxu0 0
    %2496 = vmatpush.bf16.msra.mxu0 0
    %2497 = vmatpush.bf16.msra.mxu0 %v502
    %2498 = vmatpush.bf16.msra.mxu0 %v501
    %2499 = vmatpush.bf16.msra.mxu0 %v500
    %2500 = vmatpush.bf16.msra.mxu0 %v499
    %2501 = vmatmul.bf16.gmra.mxu0 %v2491
    %v2502 = vpop.f32.mrf.mxu0
    %v2503 = vadd.f32 %v481, %v2502
    %v2504 = vpop.f32.mrf.mxu0
    %2505 = vdwg.mxu0
    %2506 = vrot.lane.b32.xlu0 %v2403, 64
    %v2507 = vpop.permute.xlu0 %2506
    %2510 = vrot.lane.b32.xlu0 %v2441, 96
    %v2511 = vpop.permute.xlu0 %2510
    %v2513 = vsel %vm187, %v2507, %v2511
    %v2514 = vpack.c.bf16 %v2513, %v2513
    %v2516 = vsel %vm315, %v2514, 0
    %2518 = vmatpush.bf16.msra.mxu0 0
    %2519 = vmatpush.bf16.msra.mxu0 0
    %2520 = vmatpush.bf16.msra.mxu0 0
    %2521 = vmatpush.bf16.msra.mxu0 0
    %2522 = vmatpush.bf16.msra.mxu0 %v756
    %2523 = vmatpush.bf16.msra.mxu0 %v755
    %2524 = vmatpush.bf16.msra.mxu0 %v754
    %2525 = vmatpush.bf16.msra.mxu0 %v753
    %2526 = vmatmul.bf16.gmra.mxu0 %v2516
    %v2527 = vpop.f32.mrf.mxu0
    %v2528 = vadd.f32 %v735, %v2527
    %v2529 = vpop.f32.mrf.mxu0
    %2530 = vdwg.mxu0
    %2531 = vrot.lane.b32.xlu0 %v2441, 64
    %v2532 = vpop.permute.xlu0 %2531
    %2535 = vrot.lane.b32.xlu0 %v2479, 96
    %v2536 = vpop.permute.xlu0 %2535
    %v2538 = vsel %vm187, %v2532, %v2536
    %v2539 = vpack.c.bf16 %v2538, %v2538
    %v2541 = vsel %vm315, %v2539, 0
    %2543 = vmatpush.bf16.msra.mxu0 0
    %2544 = vmatpush.bf16.msra.mxu0 0
    %2545 = vmatpush.bf16.msra.mxu0 0
    %2546 = vmatpush.bf16.msra.mxu0 0
    %2547 = vmatpush.bf16.msra.mxu0 %v1073
    %2548 = vmatpush.bf16.msra.mxu0 %v1072
    %2549 = vmatpush.bf16.msra.mxu0 %v1071
    %2550 = vmatpush.bf16.msra.mxu0 %v1070
    %2551 = vmatmul.bf16.gmra.mxu0 %v2541
    %v2552 = vpop.f32.mrf.mxu0
    %v2553 = vadd.f32 %v1052, %v2552
    %v2554 = vpop.f32.mrf.mxu0
    %2555 = vdwg.mxu0
    %v2556 = vxor.u32 %v2503, 2147483648
    %v2557 = vmul.f32 %v2556, 1.442695
    %v2558 = vpow.pop %v2557
    %v2559 = vadd.f32 %v2558, 1.0
    %v2560 = vrcp.pop %v2559
    %v2561 = vmul.f32 %v2559, %v2560
    %v2562 = vsub.f32 1.0, %v2561
    %v2563 = vmul.f32 %v2560, %v2562
    %v2564 = vadd.f32 %v2560, %v2563
    %vm2565 = vweird.f32 %v2559
    %vm2566 = vweird.f32 %v2560
    %vm2567 = vmor %vm2565, %vm2566
    %v2568 = vsel %vm2567, %v2560, %v2564
    %v2569 = vand.u32 2147483647, %v2559
    %vm2570 = vcmp.eq.f32.partialorder %v2569, 8.507059e+37
    %v2571 = vand.u32 %v2559, 2147483648
    %v2572 = vor.u32 1.1754944e-38, %v2571
    %v2573 = vsel %vm2570, %v2572, %v2568
    %v2574 = vmul.f32 1.0, %v2573
    %v2575 = vmul.f32 %v2574, 2.0
    %v2576 = vsub.f32 %v2575, 1.0
    %v2577 = vmul.f32 %v2574, %v2397
    %2579 = vrot.lane.b32.xlu0 %v2576, 32
    %v2580 = vpop.permute.xlu0 %2579
    %v2582 = vmul.f32 %v2574, %v2580
    %2584 = vrot.lane.b32.xlu0 %v2582, 32
    %v2585 = vpop.permute.xlu0 %2584
    %v2587 = vadd.f32 %v2577, %v2585
    %v2588 = vtanh.pop %v2587
    %2590 = vrot.lane.b32.xlu0 %v2588, 32
    %v2591 = vpop.permute.xlu0 %2590
    %v2593 = vmul.f32 %v2574, %v2591
    %v2594 = vxor.u32 %v2528, 2147483648
    %v2595 = vmul.f32 %v2594, 1.442695
    %v2596 = vpow.pop %v2595
    %v2597 = vadd.f32 %v2596, 1.0
    %v2598 = vrcp.pop %v2597
    %v2599 = vmul.f32 %v2597, %v2598
    %v2600 = vsub.f32 1.0, %v2599
    %v2601 = vmul.f32 %v2598, %v2600
    %v2602 = vadd.f32 %v2598, %v2601
    %vm2603 = vweird.f32 %v2597
    %vm2604 = vweird.f32 %v2598
    %vm2605 = vmor %vm2603, %vm2604
    %v2606 = vsel %vm2605, %v2598, %v2602
    %v2607 = vand.u32 2147483647, %v2597
    %vm2608 = vcmp.eq.f32.partialorder %v2607, 8.507059e+37
    %v2609 = vand.u32 %v2597, 2147483648
    %v2610 = vor.u32 1.1754944e-38, %v2609
    %v2611 = vsel %vm2608, %v2610, %v2606
    %v2612 = vmul.f32 1.0, %v2611
    %v2613 = vmul.f32 %v2612, 2.0
    %v2614 = vsub.f32 %v2613, 1.0
    %v2615 = vmul.f32 %v2612, %v2435
    %2617 = vrot.lane.b32.xlu0 %v2614, 32
    %v2618 = vpop.permute.xlu0 %2617
    %v2620 = vmul.f32 %v2612, %v2618
    %2622 = vrot.lane.b32.xlu0 %v2620, 32
    %v2623 = vpop.permute.xlu0 %2622
    %v2625 = vadd.f32 %v2615, %v2623
    %v2626 = vtanh.pop %v2625
    %2628 = vrot.lane.b32.xlu0 %v2626, 32
    %v2629 = vpop.permute.xlu0 %2628
    %v2631 = vmul.f32 %v2612, %v2629
    %v2632 = vxor.u32 %v2553, 2147483648
    %v2633 = vmul.f32 %v2632, 1.442695
    %v2634 = vpow.pop %v2633
    %v2635 = vadd.f32 %v2634, 1.0
    %v2636 = vrcp.pop %v2635
    %v2637 = vmul.f32 %v2635, %v2636
    %v2638 = vsub.f32 1.0, %v2637
    %v2639 = vmul.f32 %v2636, %v2638
    %v2640 = vadd.f32 %v2636, %v2639
    %vm2641 = vweird.f32 %v2635
    %vm2642 = vweird.f32 %v2636
    %vm2643 = vmor %vm2641, %vm2642
    %v2644 = vsel %vm2643, %v2636, %v2640
    %v2645 = vand.u32 2147483647, %v2635
    %vm2646 = vcmp.eq.f32.partialorder %v2645, 8.507059e+37
    %v2647 = vand.u32 %v2635, 2147483648
    %v2648 = vor.u32 1.1754944e-38, %v2647
    %v2649 = vsel %vm2646, %v2648, %v2644
    %v2650 = vmul.f32 1.0, %v2649
    %v2651 = vmul.f32 %v2650, 2.0
    %v2652 = vsub.f32 %v2651, 1.0
    %v2653 = vmul.f32 %v2650, %v2473
    %2655 = vrot.lane.b32.xlu0 %v2652, 32
    %v2656 = vpop.permute.xlu0 %2655
    %v2658 = vmul.f32 %v2650, %v2656
    %2660 = vrot.lane.b32.xlu0 %v2658, 32
    %v2661 = vpop.permute.xlu0 %2660
    %v2663 = vadd.f32 %v2653, %v2661
    %v2664 = vtanh.pop %v2663
    %2666 = vrot.lane.b32.xlu0 %v2664, 32
    %v2667 = vpop.permute.xlu0 %2666
    %v2669 = vmul.f32 %v2650, %v2667
    %2671 = vrot.lane.b32.xlu0 %v2593, 64
    %v2672 = vpop.permute.xlu0 %2671
    %2675 = vrot.lane.b32.xlu0 %v2631, 96
    %v2676 = vpop.permute.xlu0 %2675
    %v2678 = vsel %vm187, %v2672, %v2676
    %v2679 = vpack.c.bf16 %v2678, %v2678
    %v2681 = vsel %vm315, %v2679, 0
    %2683 = vmatpush.bf16.msra.mxu0 0
    %2684 = vmatpush.bf16.msra.mxu0 0
    %2685 = vmatpush.bf16.msra.mxu0 0
    %2686 = vmatpush.bf16.msra.mxu0 0
    %2687 = vmatpush.bf16.msra.mxu0 %v756
    %2688 = vmatpush.bf16.msra.mxu0 %v755
    %2689 = vmatpush.bf16.msra.mxu0 %v754
    %2690 = vmatpush.bf16.msra.mxu0 %v753
    %2691 = vmatmul.bf16.gmra.mxu0 %v2681
    %v2692 = vpop.f32.mrf.mxu0
    %v2693 = vadd.f32 %v735, %v2692
    %v2694 = vpop.f32.mrf.mxu0
    %2695 = vdwg.mxu0
    %2696 = vrot.lane.b32.xlu0 %v2631, 64
    %v2697 = vpop.permute.xlu0 %2696
    %2700 = vrot.lane.b32.xlu0 %v2669, 96
    %v2701 = vpop.permute.xlu0 %2700
    %v2703 = vsel %vm187, %v2697, %v2701
    %v2704 = vpack.c.bf16 %v2703, %v2703
    %v2706 = vsel %vm315, %v2704, 0
    %2708 = vmatpush.bf16.msra.mxu0 0
    %2709 = vmatpush.bf16.msra.mxu0 0
    %2710 = vmatpush.bf16.msra.mxu0 0
    %2711 = vmatpush.bf16.msra.mxu0 0
    %2712 = vmatpush.bf16.msra.mxu0 %v1073
    %2713 = vmatpush.bf16.msra.mxu0 %v1072
    %2714 = vmatpush.bf16.msra.mxu0 %v1071
    %2715 = vmatpush.bf16.msra.mxu0 %v1070
    %2716 = vmatmul.bf16.gmra.mxu0 %v2706
    %v2717 = vpop.f32.mrf.mxu0
    %v2718 = vadd.f32 %v1052, %v2717
    %v2719 = vpop.f32.mrf.mxu0
    %2720 = vdwg.mxu0
    %v2721 = vxor.u32 %v2693, 2147483648
    %v2722 = vmul.f32 %v2721, 1.442695
    %v2723 = vpow.pop %v2722
    %v2724 = vadd.f32 %v2723, 1.0
    %v2725 = vrcp.pop %v2724
    %v2726 = vmul.f32 %v2724, %v2725
    %v2727 = vsub.f32 1.0, %v2726
    %v2728 = vmul.f32 %v2725, %v2727
    %v2729 = vadd.f32 %v2725, %v2728
    %vm2730 = vweird.f32 %v2724
    %vm2731 = vweird.f32 %v2725
    %vm2732 = vmor %vm2730, %vm2731
    %v2733 = vsel %vm2732, %v2725, %v2729
    %v2734 = vand.u32 2147483647, %v2724
    %vm2735 = vcmp.eq.f32.partialorder %v2734, 8.507059e+37
    %v2736 = vand.u32 %v2724, 2147483648
    %v2737 = vor.u32 1.1754944e-38, %v2736
    %v2738 = vsel %vm2735, %v2737, %v2733
    %v2739 = vmul.f32 1.0, %v2738
    %v2740 = vmul.f32 %v2739, 2.0
    %v2741 = vsub.f32 %v2740, 1.0
    %v2742 = vmul.f32 %v2739, %v2625
    %2744 = vrot.lane.b32.xlu0 %v2741, 32
    %v2745 = vpop.permute.xlu0 %2744
    %v2747 = vmul.f32 %v2739, %v2745
    %2749 = vrot.lane.b32.xlu0 %v2747, 32
    %v2750 = vpop.permute.xlu0 %2749
    %v2752 = vadd.f32 %v2742, %v2750
    %v2753 = vtanh.pop %v2752
    %2755 = vrot.lane.b32.xlu0 %v2753, 32
    %v2756 = vpop.permute.xlu0 %2755
    %v2758 = vmul.f32 %v2739, %v2756
    %v2759 = vxor.u32 %v2718, 2147483648
    %v2760 = vmul.f32 %v2759, 1.442695
    %v2761 = vpow.pop %v2760
    %v2762 = vadd.f32 %v2761, 1.0
    %v2763 = vrcp.pop %v2762
    %v2764 = vmul.f32 %v2762, %v2763
    %v2765 = vsub.f32 1.0, %v2764
    %v2766 = vmul.f32 %v2763, %v2765
    %v2767 = vadd.f32 %v2763, %v2766
    %vm2768 = vweird.f32 %v2762
    %vm2769 = vweird.f32 %v2763
    %vm2770 = vmor %vm2768, %vm2769
    %v2771 = vsel %vm2770, %v2763, %v2767
    %v2772 = vand.u32 2147483647, %v2762
    %vm2773 = vcmp.eq.f32.partialorder %v2772, 8.507059e+37
    %v2774 = vand.u32 %v2762, 2147483648
    %v2775 = vor.u32 1.1754944e-38, %v2774
    %v2776 = vsel %vm2773, %v2775, %v2771
    %v2777 = vmul.f32 1.0, %v2776
    %v2778 = vmul.f32 %v2777, 2.0
    %v2779 = vsub.f32 %v2778, 1.0
    %v2780 = vmul.f32 %v2777, %v2663
    %2782 = vrot.lane.b32.xlu0 %v2779, 32
    %v2783 = vpop.permute.xlu0 %2782
    %v2785 = vmul.f32 %v2777, %v2783
    %2787 = vrot.lane.b32.xlu0 %v2785, 32
    %v2788 = vpop.permute.xlu0 %2787
    %v2790 = vadd.f32 %v2780, %v2788
    %v2791 = vtanh.pop %v2790
    %2793 = vrot.lane.b32.xlu0 %v2791, 32
    %v2794 = vpop.permute.xlu0 %2793
    %v2796 = vmul.f32 %v2777, %v2794
    %2798 = vrot.lane.b32.xlu0 %v2758, 64
    %v2799 = vpop.permute.xlu0 %2798
    %2802 = vrot.lane.b32.xlu0 %v2796, 96
    %v2803 = vpop.permute.xlu0 %2802
    %v2805 = vsel %vm187, %v2799, %v2803
    %v2806 = vpack.c.bf16 %v2805, %v2805
    %v2808 = vsel %vm315, %v2806, 0
    %2810 = vmatpush.bf16.msra.mxu0 0
    %2811 = vmatpush.bf16.msra.mxu0 0
    %2812 = vmatpush.bf16.msra.mxu0 0
    %2813 = vmatpush.bf16.msra.mxu0 0
    %2814 = vmatpush.bf16.msra.mxu0 %v1073
    %2815 = vmatpush.bf16.msra.mxu0 %v1072
    %2816 = vmatpush.bf16.msra.mxu0 %v1071
    %2817 = vmatpush.bf16.msra.mxu0 %v1070
    %2818 = vmatmul.bf16.gmra.mxu0 %v2808
    %v2819 = vpop.f32.mrf.mxu0
    %v2820 = vadd.f32 %v1052, %v2819
    %v2821 = vpop.f32.mrf.mxu0
    %2822 = vdwg.mxu0
    %v2823 = vxor.u32 %v2820, 2147483648
    %v2824 = vmul.f32 %v2823, 1.442695
    %v2825 = vpow.pop %v2824
    %v2826 = vadd.f32 %v2825, 1.0
    %v2827 = vrcp.pop %v2826
    %v2828 = vmul.f32 %v2826, %v2827
    %v2829 = vsub.f32 1.0, %v2828
    %v2830 = vmul.f32 %v2827, %v2829
    %v2831 = vadd.f32 %v2827, %v2830
    %vm2832 = vweird.f32 %v2826
    %vm2833 = vweird.f32 %v2827
    %vm2834 = vmor %vm2832, %vm2833
    %v2835 = vsel %vm2834, %v2827, %v2831
    %v2836 = vand.u32 2147483647, %v2826
    %vm2837 = vcmp.eq.f32.partialorder %v2836, 8.507059e+37
    %v2838 = vand.u32 %v2826, 2147483648
    %v2839 = vor.u32 1.1754944e-38, %v2838
    %v2840 = vsel %vm2837, %v2839, %v2835
    %v2841 = vmul.f32 1.0, %v2840
    %v2842 = vmul.f32 %v2841, 2.0
    %v2843 = vsub.f32 %v2842, 1.0
    %v2844 = vmul.f32 %v2841, %v2790
    %2846 = vrot.lane.b32.xlu0 %v2843, 32
    %v2847 = vpop.permute.xlu0 %2846
    %v2849 = vmul.f32 %v2841, %v2847
    %2851 = vrot.lane.b32.xlu0 %v2849, 32
    %v2852 = vpop.permute.xlu0 %2851
    %v2854 = vadd.f32 %v2844, %v2852
    %v2855 = vtanh.pop %v2854
    %2857 = vrot.lane.b32.xlu0 %v2855, 32
    %v2858 = vpop.permute.xlu0 %2857
    %v2860 = vmul.f32 %v2841, %v2858
    %2861 = vst.msk [vmem:[#allocation7] sm:$0xff] %vm187, %v2229
    %2863 = vrot.lane.b32.xlu0 %v2068, 96
    %v2864 = vpop.permute.xlu0 %2863
    %2866 = vst.msk [vmem:[#allocation8] sm:$0xff] %vm187, %v2864
    %s2867 = scalar_lea.vmem [#allocation7], 8
    %2868 = vst.msk [vmem:[%s2867] sm:$0xff] %vm187, %v2482
    %2870 = vrot.lane.b32.xlu0 %v2359, 96
    %v2871 = vpop.permute.xlu0 %2870
    %s2873 = scalar_lea.vmem [#allocation8], 8
    %2874 = vst.msk [vmem:[%s2873] sm:$0xff] %vm187, %v2871
    %s2875 = scalar_lea.vmem [#allocation7], 16
    %2876 = vst.msk [vmem:[%s2875] sm:$0xff] %vm187, %v2672
    %2878 = vrot.lane.b32.xlu0 %v2587, 96
    %v2879 = vpop.permute.xlu0 %2878
    %s2881 = scalar_lea.vmem [#allocation8], 16
    %2882 = vst.msk [vmem:[%s2881] sm:$0xff] %vm187, %v2879
    %s2883 = scalar_lea.vmem [#allocation7], 24
    %2884 = vst.msk [vmem:[%s2883] sm:$0xff] %vm187, %v2799
    %2886 = vrot.lane.b32.xlu0 %v2752, 96
    %v2887 = vpop.permute.xlu0 %2886
    %s2889 = scalar_lea.vmem [#allocation8], 24
    %2890 = vst.msk [vmem:[%s2889] sm:$0xff] %vm187, %v2887
    %2892 = vrot.lane.b32.xlu0 %v2860, 64
    %v2893 = vpop.permute.xlu0 %2892
    %s2895 = scalar_lea.vmem [#allocation7], 32
    %2896 = vst.msk [vmem:[%s2895] sm:$0xff] %vm187, %v2893
    %2898 = vrot.lane.b32.xlu0 %v2854, 96
    %v2899 = vpop.permute.xlu0 %2898
    %s2901 = scalar_lea.vmem [#allocation8], 32
    %2902 = vst.msk [vmem:[%s2901] sm:$0xff] %vm187, %v2899
    %v2903 = vpack.c.bf16 %v2860, %v2860
    %v2904 = vld [vmem:[%s8] sm:$0xf]
    %v2905 = vld [vmem:[%s8 + $0x4] sm:$0xf]
    %v2906 = vld [vmem:[%s8 + $0x8] sm:$0xf]
    %v2907 = vld [vmem:[%s8 + $0xc] sm:$0xf]
    %v2908 = vld [vmem:[%s9] sm:$0x1]
    %v2910 = vperm.slane %v2908, 0
    %2913 = vrot.lane.b32.xlu0 %v2903, 64
    %v2914 = vpop.permute.xlu0 %2913
    %v2919 = vunpack.c.l.b16 %v2904
    %v2920 = vunpack.c.l.b16 %v2905
    %v2921 = vunpack.c.l.b16 %v2906
    %v2922 = vunpack.c.l.b16 %v2907
    %v2923 = vpack.c.b16 %v2920, %v2919
    %v2924 = vpack.c.b16 %v2922, %v2921
    %v2928 = vsel %vm187, %v2914, 0
    %2930 = vmatpush.bf16.msra.mxu0 0
    %2931 = vmatpush.bf16.msra.mxu0 0
    %2932 = vmatpush.bf16.msra.mxu0 0
    %2933 = vmatpush.bf16.msra.mxu0 0
    %2934 = vmatpush.bf16.msra.mxu0 0
    %2935 = vmatpush.bf16.msra.mxu0 0
    %2936 = vmatpush.bf16.msra.mxu0 %v2924
    %2937 = vmatpush.bf16.msra.mxu0 %v2923
    %2938 = vmatmul.bf16.gmra.mxu0 %v2928
    %v2939 = vpop.f32.mrf.mxu0
    %v2940 = vadd.f32 %v2910, %v2939
    %v2941 = vpop.f32.mrf.mxu0
    %2942 = vdwg.mxu0
    %v2943 = vmax.f32 %v2940, 0.0
    %v2944 = vld [vmem:[%s10] sm:$0xff]
    %v2945 = vld [vmem:[%s10 + $0x8] sm:$0x3]
    %s2946 = sld [smem:[#allocation3]]
    %v2947 = vstv %s2946
    %vm2948 = vcmask 80896
    %v2950 = vsel %vm2948, %v2943, 0
    %v2953 = vsel %vm110, %v2945, 0
    %2955 = vmatpush.msra.mxu0 0.0
    %2956 = vmatpush.msra.mxu0 0.0
    %2957 = vmatpush.msra.mxu0 0.0
    %2958 = vmatpush.msra.mxu0 0.0
    %2959 = vmatpush.msra.mxu0 0.0
    %2960 = vmatpush.msra.mxu0 0.0
    %2961 = vmatpush.msra.mxu0 0.0
    %2962 = vmatpush.msra.mxu0 0.0
    %2963 = vmatpush.msra.mxu0 0.0
    %2964 = vmatpush.msra.mxu0 0.0
    %2965 = vmatpush.msra.mxu0 0.0
    %2966 = vmatpush.msra.mxu0 0.0
    %2967 = vmatpush.msra.mxu0 0.0
    %2968 = vmatpush.msra.mxu0 0.0
    %2969 = vmatpush.msra.mxu0 %v2953
    %2970 = vmatpush.msra.mxu0 %v2944
    %2971 = vmatmul.f32.gmra.mxu0 %v2950
    %v2972 = vpop.f32.mrf.mxu0
    %v2973 = vadd.f32 %v2947, %v2972
    %2974 = vdwg.mxu0
    %vm2975 = vcmask 7168
    %2976 = vst.msk [vmem:[%s12] sm:$0xff] %vm2975, %v2973
    // Predicated region
    $region54: #{mv_lstm_forward.1} parent=1 // pred_check
      _
    $region55: #{mv_lstm_forward.1} parent=1 // pred_check_branch
      %2978 = sbr.rel (0) target = $region57
    $region56: #{mv_lstm_forward.1} parent=1 // pred_region
      _
    $region57: #{mv_lstm_forward.1} parent=1 // pred_fallthru
      _
    // Predicated region
    $region58: #{mv_lstm_forward.1} parent=1 // pred_check
      _
    $region59: #{mv_lstm_forward.1} parent=1 // pred_check_branch
      %2980 = sbr.rel (0) target = $region61
    $region60: #{mv_lstm_forward.1} parent=1 // pred_region
      %2982 = vsyncadd [#allocation6], 0
      %s2983 = sshll.u32 [#allocation7], 4
      %s2984 = int_to_ptr.vmem [resolvable:$true] %s2983
      %s2985 = sshll.u32 %s13, 4
      %s2986 = int_to_ptr.hbm [resolvable:$true] %s2985
      %2991 = dma.vmem_to_hbm [thread:$0]  %s2984, 640, %s2986, [#allocation6], 128, 128, 8
    $region61: #{mv_lstm_forward.1} parent=1 // pred_fallthru
      _
    // Predicated region
    $region62: #{mv_lstm_forward.1} parent=1 // pred_check
      _
    $region63: #{mv_lstm_forward.1} parent=1 // pred_check_branch
      %2993 = sbr.rel (0) target = $region65
    $region64: #{mv_lstm_forward.1} parent=1 // pred_region
      %2995 = vsyncadd [#allocation9], 0
      %s2996 = sshll.u32 [#allocation8], 4
      %s2997 = int_to_ptr.vmem [resolvable:$true] %s2996
      %s2998 = sshll.u32 %s14, 4
      %s2999 = int_to_ptr.hbm [resolvable:$true] %s2998
      %3004 = dma.vmem_to_hbm [thread:$0]  %s2997, 640, %s2999, [#allocation9], 128, 128, 8
    $region65: #{mv_lstm_forward.1} parent=1 // pred_fallthru
      _
    // Predicated region
    $region66: #{mv_lstm_forward.1} parent=1 // pred_check
      _
    $region67: #{mv_lstm_forward.1} parent=1 // pred_check_branch
      %3006 = sbr.rel (0) target = $region69
    $region68: #{mv_lstm_forward.1} parent=1 // pred_region
      _
    $region69: #{mv_lstm_forward.1} parent=1 // pred_fallthru
      _
    // Predicated region
    $region70: #{mv_lstm_forward.1} parent=1 // pred_check
      _
    $region71: #{mv_lstm_forward.1} parent=1 // pred_check_branch
      %3008 = sbr.rel (0) target = $region73
    $region72: #{mv_lstm_forward.1} parent=1 // pred_region
      %3010 = dma.done [#allocation6], 640
    $region73: #{mv_lstm_forward.1} parent=1 // pred_fallthru
      _
    // Predicated region
    $region74: #{mv_lstm_forward.1} parent=1 // pred_check
      _
    $region75: #{mv_lstm_forward.1} parent=1 // pred_check_branch
      %3012 = sbr.rel (0) target = $region77
    $region76: #{mv_lstm_forward.1} parent=1 // pred_region
      %3014 = dma.done [#allocation9], 640
    $region77: #{mv_lstm_forward.1} parent=1 // pred_fallthru
      _
    %3015 = vsyncpa [#allocation5], 1
    %3016 = vsyncpa [#allocation6], 1
    %3017 = vsyncpa [#allocation9], 1

</llo_original>
